<compile_context>
chip_gen: v7x
topology: tpu7x:2x2x1
jax: 0.10.0
libtpu: 0.0.40
codegen_flags: <defaults>
</compile_context>

<pallas_src>
import functools

import jax
import jax.numpy as jnp
from jax.experimental import pallas as pl
from jax.experimental.pallas import tpu as pltpu


def qnet_kernel(x_ref, a_ref, w1x_ref, w1a_ref, b1_ref, w2_ref, b2_ref,
                w3_ref, b3_ref, o_ref):
    # fc1: torch.cat([x, a], 1) @ W1 computed as two small-K bf16 MXU passes
    # against the resident split weights (x||a never materialized in HBM).
    h1 = jnp.dot(x_ref[...].astype(jnp.bfloat16), w1x_ref[...],
                 preferred_element_type=jnp.float32)
    h1 = h1 + jnp.dot(a_ref[...].astype(jnp.bfloat16), w1a_ref[...],
                      preferred_element_type=jnp.float32)
    h1 = jnp.maximum(h1 + b1_ref[...], 0.0)

    # fc2: bf16 MXU matmul, f32 accumulate; bias + ReLU in f32 on the VPU.
    h2 = jnp.dot(h1.astype(jnp.bfloat16), w2_ref[...],
                 preferred_element_type=jnp.float32)
    h2 = jnp.maximum(h2 + b2_ref[...], 0.0)

    # fc3 (out_features == 1): VPU multiply + lane reduction instead of an
    # N=1 MXU pass; the BM q-values of this tile are stored lane-dense.
    q = jnp.sum(h2 * w3_ref[...], axis=-1)                  # (BM,)
    q = q.reshape(1, 1, -1) + b3_ref[...].reshape(1, 1, 1)  # (1, 1, BM)
    o_ref[...] = q.astype(o_ref.dtype)


def _round_up(v, m):
    return ((v + m - 1) // m) * m


def _choose_block_batch(batch, *, max_bm=2048, min_bm=256):
    """Largest batch tile (multiple of 256, capped so the f32 intermediates +
    double-buffered inputs fit scoped VMEM on all of v5e/v6e/v7x), while
    keeping >= 2 grid tiles when possible so v7x's two TensorCores both get
    work via dimension_semantics=("parallel",)."""
    bm = min(max_bm, _round_up(batch, min_bm))
    if batch > min_bm and pl.cdiv(batch, bm) < 2:
        bm = max(min_bm, _round_up(pl.cdiv(batch, 2), min_bm))
    return bm


@functools.partial(jax.jit, static_argnames=("block_batch",))
def qnetwork_forward(x, a, params, *, block_batch=None):
    """x: (B, obs_dim) f32, a: (B, act_dim) f32 -> (B, 1) f32."""
    w1, b1, w2, b2, w3, b3 = params
    B, obs_dim = x.shape
    act_dim = a.shape[1]
    hidden = w1.shape[1]

    bm = block_batch if block_batch is not None else _choose_block_batch(B)
    num_tiles = pl.cdiv(B, bm)

    # Split W1 so torch.cat([x, a], 1) is never materialized in HBM; the two
    # dots are summed in-kernel.  Weights are tiny (~140 KB) -> bf16, resident.
    w1x = w1[:obs_dim].astype(jnp.bfloat16)
    w1a = w1[obs_dim:].astype(jnp.bfloat16)
    w2b = w2.astype(jnp.bfloat16)
    w3f = w3.astype(jnp.float32)   # fc3 runs on the VPU -> keep f32

    flops = 2 * B * ((obs_dim + act_dim) * hidden + hidden * hidden + hidden)
    bytes_accessed = (x.size * 4 + a.size * 4 + B * 4
                      + (w1x.size + w1a.size + w2b.size) * 2
                      + (b1.size + b2.size + w3f.size + b3.size) * 4)
    cost = pl.CostEstimate(flops=flops, transcendentals=0,
                           bytes_accessed=bytes_accessed)

    def resident(arr):
        n = arr.ndim
        return pl.BlockSpec(arr.shape, lambda i, n=n: (0,) * n)

    out = pl.pallas_call(
        qnet_kernel,
        out_shape=jax.ShapeDtypeStruct((num_tiles, 1, bm), jnp.float32),
        grid=(num_tiles,),
        in_specs=[
            pl.BlockSpec((bm, obs_dim), lambda i: (i, 0)),   # batch-tiled x
            pl.BlockSpec((bm, act_dim), lambda i: (i, 0)),   # batch-tiled a
            resident(w1x), resident(w1a), resident(b1),      # VMEM-resident
            resident(w2b), resident(b2),
            resident(w3f), resident(b3),
        ],
        # Lane-dense q-value slab -> unmasked vector stores.
        out_specs=pl.BlockSpec((1, 1, bm), lambda i: (i, 0, 0)),
        compiler_params=pltpu.CompilerParams(
            dimension_semantics=("parallel",),
            vmem_limit_bytes=32 * 1024 * 1024),
        cost_estimate=cost,
    )(x, a, w1x, w1a, b1, w2b, b2, w3f, b3)

    # Ragged tail rows (last block past B) hold junk and are sliced off here;
    # rows are independent so they never affect valid outputs.
    return out.reshape(num_tiles * bm, 1)[:B]


def init_params(key, obs_dim, act_dim, hidden=256):
    """PyTorch nn.Linear-style init (uniform +/- 1/sqrt(fan_in)), stored as
    (in, out) matrices; fc3 weight kept as a (1, hidden) row for the VPU
    reduction."""
    in1 = obs_dim + act_dim
    ks = jax.random.split(key, 6)

    def lin(kw, kb, fan_in, fan_out):
        bound = 1.0 / jnp.sqrt(fan_in)
        w = jax.random.uniform(kw, (fan_in, fan_out), jnp.float32, -bound, bound)
        b = jax.random.uniform(kb, (1, fan_out), jnp.float32, -bound, bound)
        return w, b

    w1, b1 = lin(ks[0], ks[1], in1, hidden)
    w2, b2 = lin(ks[2], ks[3], hidden, hidden)
    w3, b3 = lin(ks[4], ks[5], hidden, 1)
    return (w1, b1, w2, b2, w3.T, b3)   # w3.T: (1, hidden), b3: (1, 1)


def reference_forward(x, a, params):
    """Pure-JAX reference with the same mixed precision as the kernel."""
    w1, b1, w2, b2, w3, b3 = params
    obs_dim = x.shape[1]
    xb = x.astype(jnp.bfloat16)
    ab = a.astype(jnp.bfloat16)
    h1 = (jnp.dot(xb, w1[:obs_dim].astype(jnp.bfloat16),
                  preferred_element_type=jnp.float32)
          + jnp.dot(ab, w1[obs_dim:].astype(jnp.bfloat16),
                    preferred_element_type=jnp.float32))
    h1 = jnp.maximum(h1 + b1, 0.0)
    h2 = jnp.dot(h1.astype(jnp.bfloat16), w2.astype(jnp.bfloat16),
                 preferred_element_type=jnp.float32)
    h2 = jnp.maximum(h2 + b2, 0.0)
    return h2 @ w3.T.astype(jnp.float32) + b3


if __name__ == "__main__":
    OBS, ACT, HID = 8, 4, 256
    B = 300   # exercises batch tiling (2 tiles of 256) + ragged tail handling
    key = jax.random.PRNGKey(0)
    kx, ka, kp = jax.random.split(key, 3)

    x = jax.random.normal(kx, (B, OBS), jnp.float32)
    a = jax.random.normal(ka, (B, ACT), jnp.float32)
    params = init_params(kp, OBS, ACT, hidden=HID)

    out = qnetwork_forward(x, a, params)
    out = jax.block_until_ready(out)

    ref = reference_forward(x, a, params)
    assert out.shape == (B, 1), out.shape
    err = float(jnp.max(jnp.abs(out - ref)))
    assert jnp.allclose(out, ref, atol=1e-3, rtol=1e-3), err

    print("KERNEL_OK")
</pallas_src>

<mosaic_0001>
module attributes {stable_mosaic.version = 11 : i64} {
  func.func @qnet_kernel(%arg0: i32, %arg1: memref<256x8xf32, #tpu.memory_space<vmem>>, %arg2: memref<256x4xf32, #tpu.memory_space<vmem>>, %arg3: memref<8x256xbf16, #tpu.memory_space<vmem>>, %arg4: memref<4x256xbf16, #tpu.memory_space<vmem>>, %arg5: memref<1x256xf32, #tpu.memory_space<vmem>>, %arg6: memref<256x256xbf16, #tpu.memory_space<vmem>>, %arg7: memref<1x256xf32, #tpu.memory_space<vmem>>, %arg8: memref<1x256xf32, #tpu.memory_space<vmem>>, %arg9: memref<1x1xf32, #tpu.memory_space<vmem>>, %arg10: memref<1x1x256xf32, #tpu.memory_space<vmem>>) attributes {dimension_semantics = [#tpu.dimension_semantics<parallel>], iteration_bounds = array<i64: 2>, scalar_prefetch = 0 : i64, scratch_operands = 0 : i64, tpu.core_type = #tpu.core_type<tc>, window_params = [{transform_indices = @transform_0, window_bounds = array<i64: 256, 8>}, {transform_indices = @transform_1, window_bounds = array<i64: 256, 4>}, {pipeline_mode = #tpu.pipeline_mode<synchronous>, transform_indices = @transform_2, window_bounds = array<i64: 8, 256>}, {pipeline_mode = #tpu.pipeline_mode<synchronous>, transform_indices = @transform_3, window_bounds = array<i64: 4, 256>}, {pipeline_mode = #tpu.pipeline_mode<synchronous>, transform_indices = @transform_4, window_bounds = array<i64: 1, 256>}, {pipeline_mode = #tpu.pipeline_mode<synchronous>, transform_indices = @transform_5, window_bounds = array<i64: 256, 256>}, {pipeline_mode = #tpu.pipeline_mode<synchronous>, transform_indices = @transform_6, window_bounds = array<i64: 1, 256>}, {pipeline_mode = #tpu.pipeline_mode<synchronous>, transform_indices = @transform_7, window_bounds = array<i64: 1, 256>}, {pipeline_mode = #tpu.pipeline_mode<synchronous>, transform_indices = @transform_8, window_bounds = array<i64: 1, 1>}, {transform_indices = @transform_9, window_bounds = array<i64: 1, 1, 256>}]} {
    %c0 = arith.constant 0 : index
    %c0_0 = arith.constant 0 : index
    %0 = vector.load %arg1[%c0, %c0_0] : memref<256x8xf32, #tpu.memory_space<vmem>>, vector<256x8xf32>
    %1 = arith.truncf %0 : vector<256x8xf32> to vector<256x8xbf16>
    %c0_1 = arith.constant 0 : index
    %c0_2 = arith.constant 0 : index
    %2 = vector.load %arg3[%c0_1, %c0_2] : memref<8x256xbf16, #tpu.memory_space<vmem>>, vector<8x256xbf16>
    %cst = arith.constant dense<0.000000e+00> : vector<256x256xf32>
    %3 = tpu.matmul %1, %2, %cst {dimension_numbers = #tpu.dot_dimension_numbers<[1], [0], [0], [1], [0, 0, 1, 1], [], []>} : vector<256x8xbf16>, vector<8x256xbf16>, vector<256x256xf32> -> vector<256x256xf32>
    %c0_3 = arith.constant 0 : index
    %c0_4 = arith.constant 0 : index
    %4 = vector.load %arg2[%c0_3, %c0_4] : memref<256x4xf32, #tpu.memory_space<vmem>>, vector<256x4xf32>
    %5 = arith.truncf %4 : vector<256x4xf32> to vector<256x4xbf16>
    %c0_5 = arith.constant 0 : index
    %c0_6 = arith.constant 0 : index
    %6 = vector.load %arg4[%c0_5, %c0_6] : memref<4x256xbf16, #tpu.memory_space<vmem>>, vector<4x256xbf16>
    %cst_7 = arith.constant dense<0.000000e+00> : vector<256x256xf32>
    %7 = tpu.matmul %5, %6, %cst_7 {dimension_numbers = #tpu.dot_dimension_numbers<[1], [0], [0], [1], [0, 0, 1, 1], [], []>} : vector<256x4xbf16>, vector<4x256xbf16>, vector<256x256xf32> -> vector<256x256xf32>
    %8 = arith.addf %3, %7 : vector<256x256xf32>
    %c0_8 = arith.constant 0 : index
    %c0_9 = arith.constant 0 : index
    %9 = vector.load %arg5[%c0_8, %c0_9] : memref<1x256xf32, #tpu.memory_space<vmem>>, vector<1x256xf32>
    %10 = vector.broadcast %9 : vector<1x256xf32> to vector<256x256xf32>
    %11 = arith.addf %8, %10 : vector<256x256xf32>
    %cst_10 = arith.constant 0.000000e+00 : f32
    %12 = vector.broadcast %cst_10 : f32 to vector<256x256xf32>
    %13 = arith.maximumf %11, %12 : vector<256x256xf32>
    %14 = arith.truncf %13 : vector<256x256xf32> to vector<256x256xbf16>
    %c0_11 = arith.constant 0 : index
    %c0_12 = arith.constant 0 : index
    %15 = vector.load %arg6[%c0_11, %c0_12] : memref<256x256xbf16, #tpu.memory_space<vmem>>, vector<256x256xbf16>
    %cst_13 = arith.constant dense<0.000000e+00> : vector<256x256xf32>
    %16 = tpu.matmul %14, %15, %cst_13 {dimension_numbers = #tpu.dot_dimension_numbers<[1], [0], [0], [1], [0, 0, 1, 1], [], []>} : vector<256x256xbf16>, vector<256x256xbf16>, vector<256x256xf32> -> vector<256x256xf32>
    %c0_14 = arith.constant 0 : index
    %c0_15 = arith.constant 0 : index
    %17 = vector.load %arg7[%c0_14, %c0_15] : memref<1x256xf32, #tpu.memory_space<vmem>>, vector<1x256xf32>
    %18 = vector.broadcast %17 : vector<1x256xf32> to vector<256x256xf32>
    %19 = arith.addf %16, %18 : vector<256x256xf32>
    %cst_16 = arith.constant 0.000000e+00 : f32
    %20 = vector.broadcast %cst_16 : f32 to vector<256x256xf32>
    %21 = arith.maximumf %19, %20 : vector<256x256xf32>
    %c0_17 = arith.constant 0 : index
    %c0_18 = arith.constant 0 : index
    %22 = vector.load %arg8[%c0_17, %c0_18] : memref<1x256xf32, #tpu.memory_space<vmem>>, vector<1x256xf32>
    %23 = vector.broadcast %22 : vector<1x256xf32> to vector<256x256xf32>
    %24 = arith.mulf %21, %23 : vector<256x256xf32>
    %cst_19 = arith.constant dense<0.000000e+00> : vector<256xf32>
    %25 = vector.multi_reduction <add>, %24, %cst_19 [1] : vector<256x256xf32> to vector<256xf32>
    %26 = vector.shape_cast %25 : vector<256xf32> to vector<1x1x256xf32>
    %c0_20 = arith.constant 0 : index
    %c0_21 = arith.constant 0 : index
    %27 = vector.load %arg9[%c0_20, %c0_21] : memref<1x1xf32, #tpu.memory_space<vmem>>, vector<1x1xf32>
    %28 = vector.shape_cast %27 : vector<1x1xf32> to vector<1x1x1xf32>
    %29 = vector.broadcast %28 : vector<1x1x1xf32> to vector<1x1x256xf32>
    %30 = arith.addf %26, %29 : vector<1x1x256xf32>
    %c0_22 = arith.constant 0 : index
    %c0_23 = arith.constant 0 : index
    %c0_24 = arith.constant 0 : index
    %31 = vector.load %arg10[%c0_22, %c0_23, %c0_24] : memref<1x1x256xf32, #tpu.memory_space<vmem>>, vector<1x1x256xf32>
    tpu.vector_store %arg10[%c0_22, %c0_23, %c0_24], %30 {strides = array<i32>} : memref<1x1x256xf32, #tpu.memory_space<vmem>>, vector<1x1x256xf32>,
    return
  }
  func.func @transform_0(%arg0: i32) -> (i32, i32) {
    %c0_i32 = arith.constant 0 : i32
    %c0_i32_0 = arith.constant 0 : i32
    return %arg0, %c0_i32 : i32, i32
  }
  func.func @transform_1(%arg0: i32) -> (i32, i32) {
    %c0_i32 = arith.constant 0 : i32
    %c0_i32_0 = arith.constant 0 : i32
    return %arg0, %c0_i32 : i32, i32
  }
  func.func @transform_2(%arg0: i32) -> (i32, i32) {
    %c0_i32 = arith.constant 0 : i32
    %c0_i32_0 = arith.constant 0 : i32
    %c0_i32_1 = arith.constant 0 : i32
    return %c0_i32, %c0_i32_0 : i32, i32
  }
  func.func @transform_3(%arg0: i32) -> (i32, i32) {
    %c0_i32 = arith.constant 0 : i32
    %c0_i32_0 = arith.constant 0 : i32
    %c0_i32_1 = arith.constant 0 : i32
    return %c0_i32, %c0_i32_0 : i32, i32
  }
  func.func @transform_4(%arg0: i32) -> (i32, i32) {
    %c0_i32 = arith.constant 0 : i32
    %c0_i32_0 = arith.constant 0 : i32
    %c0_i32_1 = arith.constant 0 : i32
    return %c0_i32, %c0_i32_0 : i32, i32
  }
  func.func @transform_5(%arg0: i32) -> (i32, i32) {
    %c0_i32 = arith.constant 0 : i32
    %c0_i32_0 = arith.constant 0 : i32
    %c0_i32_1 = arith.constant 0 : i32
    return %c0_i32, %c0_i32_0 : i32, i32
  }
  func.func @transform_6(%arg0: i32) -> (i32, i32) {
    %c0_i32 = arith.constant 0 : i32
    %c0_i32_0 = arith.constant 0 : i32
    %c0_i32_1 = arith.constant 0 : i32
    return %c0_i32, %c0_i32_0 : i32, i32
  }
  func.func @transform_7(%arg0: i32) -> (i32, i32) {
    %c0_i32 = arith.constant 0 : i32
    %c0_i32_0 = arith.constant 0 : i32
    %c0_i32_1 = arith.constant 0 : i32
    return %c0_i32, %c0_i32_0 : i32, i32
  }
  func.func @transform_8(%arg0: i32) -> (i32, i32) {
    %c0_i32 = arith.constant 0 : i32
    %c0_i32_0 = arith.constant 0 : i32
    %c0_i32_1 = arith.constant 0 : i32
    return %c0_i32, %c0_i32_0 : i32, i32
  }
  func.func @transform_9(%arg0: i32) -> (i32, i32, i32) {
    %c0_i32 = arith.constant 0 : i32
    %c0_i32_0 = arith.constant 0 : i32
    %c0_i32_1 = arith.constant 0 : i32
    return %arg0, %c0_i32, %c0_i32_0 : i32, i32, i32
  }
}

</mosaic_0001>

<llo_original>
// kernel: qnetwork_forward.1
$region0: #{qnetwork_forward.1}
  #allocation0 [shape = 'u32[]', space=smem, size = 0x4, offset = 0x4, fixed_abs, tag = 'smem constant byte address 0x4 - core index']
  #allocation1 [shape = 'u32[144,128]{1,0:T(1,128)}', space=vmem, size = 0x12000, scoped, tag = 'internal scratch']
  #allocation2 [shape = 'f32[1,1]{1,0:T(1,128)S(1)}', space=vmem, size = 0x200, scoped, tag = 'scoped memory for qnetwork_forward.1']
  %s0 = inlined_call_operand.vmem [shape: f32[300,8], index: 0, kind: input, shape index: {}]
  %s1 = inlined_call_operand.vmem [shape: f32[300,4], index: 1, kind: input, shape index: {}]
  %s2 = inlined_call_operand.vmem [shape: bf16[8,256], index: 2, kind: input, shape index: {}]
  %s3 = inlined_call_operand.vmem [shape: bf16[4,256], index: 3, kind: input, shape index: {}]
  %s4 = inlined_call_operand.vmem [shape: f32[1,256], index: 4, kind: input, shape index: {}]
  %s5 = inlined_call_operand.vmem [shape: bf16[256,256], index: 5, kind: input, shape index: {}]
  %s6 = inlined_call_operand.vmem [shape: f32[1,256], index: 6, kind: input, shape index: {}]
  %s7 = inlined_call_operand.vmem [shape: f32[1,256], index: 7, kind: input, shape index: {}]
  %s8 = inlined_call_operand.<no memory space> [shape: f32[1,1], index: 8, kind: input, shape index: {}]
  %s9 = inlined_call_operand.vmem [shape: f32[2,1,256], index: 9, kind: output, shape index: {}]
  %s10 = sld [smem:[#allocation0]]
  $region69: #{qnetwork_forward.1} parent=0
    _
  %s12 = ssub.s32 1, %s10
  %s13 = scalar_select 0, %s12, %s10
  %v14 = vstv %s8
  %15 = vst [vmem:[#allocation2] sm:$0x1] %v14
  loop: start=0, step=1, limit=4
  $region2: #{qnetwork_forward.1} parent=0 // loop_pre_header
    _
  $region3: #{qnetwork_forward.1} parent=0 // loop_header
    %s17 = sphi 0, %s21
    %p18 = scmp.ge.s32.totalorder %s17, 4
    %s27 = sphi 0, %s29
    %s30 = sphi 0, %s27
    %s31 = sphi 0, %s30
    %s47 = sphi 0, %s31
    %s53 = sphi 0, %s55
    %s56 = sphi 0, %s53
    %s57 = sphi 0, %s56
    %s73 = sphi 0, %s57
    %s77 = sphi 0, %s77
    %s79 = sphi 0, %s77
    %s80 = sphi 0, %s79
    %s94 = sphi 0, %s80
    %s98 = sphi 0, %s98
    %s100 = sphi 0, %s98
    %s101 = sphi 0, %s100
    %s115 = sphi 0, %s101
    %s119 = sphi 0, %s119
    %s121 = sphi 0, %s119
    %s122 = sphi 0, %s121
    %s136 = sphi 0, %s122
    %s140 = sphi 0, %s140
    %s142 = sphi 0, %s140
    %s143 = sphi 0, %s142
    %s157 = sphi 0, %s143
    %s161 = sphi 0, %s161
    %s163 = sphi 0, %s161
    %s164 = sphi 0, %s163
    %s178 = sphi 0, %s164
    %s182 = sphi 0, %s182
    %s184 = sphi 0, %s182
    %s185 = sphi 0, %s184
    %s199 = sphi 0, %s185
    %s203 = sphi 0, %s203
    %s205 = sphi 0, %s203
    %s206 = sphi 0, %s205
    %s220 = sphi 0, %s206
    %s226 = sphi 0, %s228
    %s229 = sphi 0, %s226
    %s230 = sphi 0, %s229
    %s246 = sphi 0, %s230
  $region4: #{qnetwork_forward.1} parent=0 // loop_header_branch
    %20 = sbr.rel (%p18) target = $region8
  $region5: #{qnetwork_forward.1} parent=0 // loop_body
    %s22 = ssub.s32 %s17, 1
    %s23 = ssub.s32 %s17, 2
    %s24 = sadd.s32 %s17, 1
    %s25 = ssub.s32 %s17, %s24
    %p26 = scmp.eq.s32.totalorder %s25, 0
    %s28 = sadd.s32 %s27, 1
    %s29 = scalar_select %p26, %s27, %s28
    %p32 = pneg %p26
    %p33 = scmp.eq.s32.totalorder %s17, 1
    %p34 = por %p32, %p33
    %p35 = scmp.ne.s32.totalorder %s27, %s30
    %p36 = scmp.eq.s32.totalorder %s17, 0
    %p37 = por %p35, %p36
    %p38 = scmp.ne.s32.totalorder %s27, %s30
    %p39 = scmp.eq.s32.totalorder %s22, 1
    %p40 = por %p38, %p39
    %p41 = scmp.ne.s32.totalorder %s30, %s31
    %p42 = scmp.eq.s32.totalorder %s22, 0
    %p43 = por %p41, %p42
    %p44 = scmp.ne.s32.totalorder %s30, %s31
    %p45 = scmp.eq.s32.totalorder %s23, 1
    %p46 = por %p44, %p45
    %p48 = scmp.ne.s32.totalorder %s31, %s47
    %p49 = scmp.eq.s32.totalorder %s23, 0
    %p50 = por %p48, %p49
    %s51 = ssub.s32 %s17, %s24
    %p52 = scmp.eq.s32.totalorder %s51, 0
    %s54 = sadd.s32 %s53, 1
    %s55 = scalar_select %p52, %s53, %s54
    %p58 = pneg %p52
    %p59 = scmp.eq.s32.totalorder %s17, 1
    %p60 = por %p58, %p59
    %p61 = scmp.ne.s32.totalorder %s53, %s56
    %p62 = scmp.eq.s32.totalorder %s17, 0
    %p63 = por %p61, %p62
    %p64 = scmp.ne.s32.totalorder %s53, %s56
    %p65 = scmp.eq.s32.totalorder %s22, 1
    %p66 = por %p64, %p65
    %p67 = scmp.ne.s32.totalorder %s56, %s57
    %p68 = scmp.eq.s32.totalorder %s22, 0
    %p69 = por %p67, %p68
    %p70 = scmp.ne.s32.totalorder %s56, %s57
    %p71 = scmp.eq.s32.totalorder %s23, 1
    %p72 = por %p70, %p71
    %p74 = scmp.ne.s32.totalorder %s57, %s73
    %p75 = scmp.eq.s32.totalorder %s23, 0
    %p76 = por %p74, %p75
    %s78 = sadd.s32 %s77, 1
    %p81 = scmp.eq.s32.totalorder %s17, 1
    %p82 = scmp.ne.s32.totalorder %s77, %s79
    %p83 = scmp.eq.s32.totalorder %s17, 0
    %p84 = por %p82, %p83
    %p85 = scmp.ne.s32.totalorder %s77, %s79
    %p86 = scmp.eq.s32.totalorder %s22, 1
    %p87 = por %p85, %p86
    %p88 = scmp.ne.s32.totalorder %s79, %s80
    %p89 = scmp.eq.s32.totalorder %s22, 0
    %p90 = por %p88, %p89
    %p91 = scmp.ne.s32.totalorder %s79, %s80
    %p92 = scmp.eq.s32.totalorder %s23, 1
    %p93 = por %p91, %p92
    %p95 = scmp.ne.s32.totalorder %s80, %s94
    %p96 = scmp.eq.s32.totalorder %s23, 0
    %p97 = por %p95, %p96
    %s99 = sadd.s32 %s98, 1
    %p102 = scmp.eq.s32.totalorder %s17, 1
    %p103 = scmp.ne.s32.totalorder %s98, %s100
    %p104 = scmp.eq.s32.totalorder %s17, 0
    %p105 = por %p103, %p104
    %p106 = scmp.ne.s32.totalorder %s98, %s100
    %p107 = scmp.eq.s32.totalorder %s22, 1
    %p108 = por %p106, %p107
    %p109 = scmp.ne.s32.totalorder %s100, %s101
    %p110 = scmp.eq.s32.totalorder %s22, 0
    %p111 = por %p109, %p110
    %p112 = scmp.ne.s32.totalorder %s100, %s101
    %p113 = scmp.eq.s32.totalorder %s23, 1
    %p114 = por %p112, %p113
    %p116 = scmp.ne.s32.totalorder %s101, %s115
    %p117 = scmp.eq.s32.totalorder %s23, 0
    %p118 = por %p116, %p117
    %s120 = sadd.s32 %s119, 1
    %p123 = scmp.eq.s32.totalorder %s17, 1
    %p124 = scmp.ne.s32.totalorder %s119, %s121
    %p125 = scmp.eq.s32.totalorder %s17, 0
    %p126 = por %p124, %p125
    %p127 = scmp.ne.s32.totalorder %s119, %s121
    %p128 = scmp.eq.s32.totalorder %s22, 1
    %p129 = por %p127, %p128
    %p130 = scmp.ne.s32.totalorder %s121, %s122
    %p131 = scmp.eq.s32.totalorder %s22, 0
    %p132 = por %p130, %p131
    %p133 = scmp.ne.s32.totalorder %s121, %s122
    %p134 = scmp.eq.s32.totalorder %s23, 1
    %p135 = por %p133, %p134
    %p137 = scmp.ne.s32.totalorder %s122, %s136
    %p138 = scmp.eq.s32.totalorder %s23, 0
    %p139 = por %p137, %p138
    %s141 = sadd.s32 %s140, 1
    %p144 = scmp.eq.s32.totalorder %s17, 1
    %p145 = scmp.ne.s32.totalorder %s140, %s142
    %p146 = scmp.eq.s32.totalorder %s17, 0
    %p147 = por %p145, %p146
    %p148 = scmp.ne.s32.totalorder %s140, %s142
    %p149 = scmp.eq.s32.totalorder %s22, 1
    %p150 = por %p148, %p149
    %p151 = scmp.ne.s32.totalorder %s142, %s143
    %p152 = scmp.eq.s32.totalorder %s22, 0
    %p153 = por %p151, %p152
    %p154 = scmp.ne.s32.totalorder %s142, %s143
    %p155 = scmp.eq.s32.totalorder %s23, 1
    %p156 = por %p154, %p155
    %p158 = scmp.ne.s32.totalorder %s143, %s157
    %p159 = scmp.eq.s32.totalorder %s23, 0
    %p160 = por %p158, %p159
    %s162 = sadd.s32 %s161, 1
    %p165 = scmp.eq.s32.totalorder %s17, 1
    %p166 = scmp.ne.s32.totalorder %s161, %s163
    %p167 = scmp.eq.s32.totalorder %s17, 0
    %p168 = por %p166, %p167
    %p169 = scmp.ne.s32.totalorder %s161, %s163
    %p170 = scmp.eq.s32.totalorder %s22, 1
    %p171 = por %p169, %p170
    %p172 = scmp.ne.s32.totalorder %s163, %s164
    %p173 = scmp.eq.s32.totalorder %s22, 0
    %p174 = por %p172, %p173
    %p175 = scmp.ne.s32.totalorder %s163, %s164
    %p176 = scmp.eq.s32.totalorder %s23, 1
    %p177 = por %p175, %p176
    %p179 = scmp.ne.s32.totalorder %s164, %s178
    %p180 = scmp.eq.s32.totalorder %s23, 0
    %p181 = por %p179, %p180
    %s183 = sadd.s32 %s182, 1
    %p186 = scmp.eq.s32.totalorder %s17, 1
    %p187 = scmp.ne.s32.totalorder %s182, %s184
    %p188 = scmp.eq.s32.totalorder %s17, 0
    %p189 = por %p187, %p188
    %p190 = scmp.ne.s32.totalorder %s182, %s184
    %p191 = scmp.eq.s32.totalorder %s22, 1
    %p192 = por %p190, %p191
    %p193 = scmp.ne.s32.totalorder %s184, %s185
    %p194 = scmp.eq.s32.totalorder %s22, 0
    %p195 = por %p193, %p194
    %p196 = scmp.ne.s32.totalorder %s184, %s185
    %p197 = scmp.eq.s32.totalorder %s23, 1
    %p198 = por %p196, %p197
    %p200 = scmp.ne.s32.totalorder %s185, %s199
    %p201 = scmp.eq.s32.totalorder %s23, 0
    %p202 = por %p200, %p201
    %s204 = sadd.s32 %s203, 1
    %p207 = scmp.eq.s32.totalorder %s17, 1
    %p208 = scmp.ne.s32.totalorder %s203, %s205
    %p209 = scmp.eq.s32.totalorder %s17, 0
    %p210 = por %p208, %p209
    %p211 = scmp.ne.s32.totalorder %s203, %s205
    %p212 = scmp.eq.s32.totalorder %s22, 1
    %p213 = por %p211, %p212
    %p214 = scmp.ne.s32.totalorder %s205, %s206
    %p215 = scmp.eq.s32.totalorder %s22, 0
    %p216 = por %p214, %p215
    %p217 = scmp.ne.s32.totalorder %s205, %s206
    %p218 = scmp.eq.s32.totalorder %s23, 1
    %p219 = por %p217, %p218
    %p221 = scmp.ne.s32.totalorder %s206, %s220
    %p222 = scmp.eq.s32.totalorder %s23, 0
    %p223 = por %p221, %p222
    %s224 = ssub.s32 %s17, %s24
    %p225 = scmp.eq.s32.totalorder %s224, 0
    %s227 = sadd.s32 %s226, 1
    %s228 = scalar_select %p225, %s226, %s227
    %p231 = pneg %p225
    %p232 = scmp.eq.s32.totalorder %s17, 1
    %p233 = por %p231, %p232
    %p234 = scmp.ne.s32.totalorder %s226, %s229
    %p235 = scmp.eq.s32.totalorder %s17, 0
    %p236 = por %p234, %p235
    %p237 = scmp.ne.s32.totalorder %s226, %s229
    %p238 = scmp.eq.s32.totalorder %s22, 1
    %p239 = por %p237, %p238
    %p240 = scmp.ne.s32.totalorder %s229, %s230
    %p241 = scmp.eq.s32.totalorder %s22, 0
    %p242 = por %p240, %p241
    %p243 = scmp.ne.s32.totalorder %s229, %s230
    %p244 = scmp.eq.s32.totalorder %s23, 1
    %p245 = por %p243, %p244
    %p247 = scmp.ne.s32.totalorder %s230, %s246
    %p248 = scmp.eq.s32.totalorder %s23, 0
    %p249 = por %p247, %p248
    %p250 = scmp.le.s32.totalorder 1, %s17
    %p251 = scmp.lt.s32.totalorder %s17, 3
    %p252 = pnand %p250, %p251
    %p253 = pneg %p252
    // Predicated region
    $region9: #{qnetwork_forward.1} parent=5 // pred_check
      _
    $region10: #{qnetwork_forward.1} parent=5 // pred_check_branch
      %255 = sbr.rel (%p252) target = $region12
    $region11: #{qnetwork_forward.1} parent=5 // pred_region
      %s256 = ssub.s32 %s17, 1
      // Predicated region
      $region13: #{qnetwork_forward.1} parent=11 // pred_check
        %p257 = pneg %p90
      $region14: #{qnetwork_forward.1} parent=11 // pred_check_branch
        %259 = sbr.rel (%p257) target = $region16
      $region15: #{qnetwork_forward.1} parent=11 // pred_region
        _
      $region16: #{qnetwork_forward.1} parent=11 // pred_fallthru
        _
      // Predicated region
      $region17: #{qnetwork_forward.1} parent=11 // pred_check
        %p260 = pneg %p111
      $region18: #{qnetwork_forward.1} parent=11 // pred_check_branch
        %262 = sbr.rel (%p260) target = $region20
      $region19: #{qnetwork_forward.1} parent=11 // pred_region
        _
      $region20: #{qnetwork_forward.1} parent=11 // pred_fallthru
        _
      // Predicated region
      $region21: #{qnetwork_forward.1} parent=11 // pred_check
        %p263 = pneg %p132
      $region22: #{qnetwork_forward.1} parent=11 // pred_check_branch
        %265 = sbr.rel (%p263) target = $region24
      $region23: #{qnetwork_forward.1} parent=11 // pred_region
        _
      $region24: #{qnetwork_forward.1} parent=11 // pred_fallthru
        _
      // Predicated region
      $region25: #{qnetwork_forward.1} parent=11 // pred_check
        %p266 = pneg %p153
      $region26: #{qnetwork_forward.1} parent=11 // pred_check_branch
        %268 = sbr.rel (%p266) target = $region28
      $region27: #{qnetwork_forward.1} parent=11 // pred_region
        _
      $region28: #{qnetwork_forward.1} parent=11 // pred_fallthru
        _
      // Predicated region
      $region29: #{qnetwork_forward.1} parent=11 // pred_check
        %p269 = pneg %p174
      $region30: #{qnetwork_forward.1} parent=11 // pred_check_branch
        %271 = sbr.rel (%p269) target = $region32
      $region31: #{qnetwork_forward.1} parent=11 // pred_region
        _
      $region32: #{qnetwork_forward.1} parent=11 // pred_fallthru
        _
      // Predicated region
      $region33: #{qnetwork_forward.1} parent=11 // pred_check
        %p272 = pneg %p195
      $region34: #{qnetwork_forward.1} parent=11 // pred_check_branch
        %274 = sbr.rel (%p272) target = $region36
      $region35: #{qnetwork_forward.1} parent=11 // pred_region
        _
      $region36: #{qnetwork_forward.1} parent=11 // pred_fallthru
        _
      // Predicated region
      $region37: #{qnetwork_forward.1} parent=11 // pred_check
        %p275 = pneg %p216
      $region38: #{qnetwork_forward.1} parent=11 // pred_check_branch
        %277 = sbr.rel (%p275) target = $region40
      $region39: #{qnetwork_forward.1} parent=11 // pred_region
        _
      $region40: #{qnetwork_forward.1} parent=11 // pred_fallthru
        _
    $region12: #{qnetwork_forward.1} parent=5 // pred_fallthru
      _
    %p278 = scmp.lt.s32.totalorder %s17, 2
    // Predicated region
    $region41: #{qnetwork_forward.1} parent=5 // pred_check
      %p279 = pneg %p278
    $region42: #{qnetwork_forward.1} parent=5 // pred_check_branch
      %281 = sbr.rel (%p279) target = $region44
    $region43: #{qnetwork_forward.1} parent=5 // pred_region
      // Predicated region
      $region45: #{qnetwork_forward.1} parent=43 // pred_check
        %p282 = pneg %p37
      $region46: #{qnetwork_forward.1} parent=43 // pred_check_branch
        %284 = sbr.rel (%p282) target = $region48
      $region47: #{qnetwork_forward.1} parent=43 // pred_region
        %s285 = smul.u32 32, %s17
        %s286 = ssub.s32 38, %s285
        %p287 = scmp.lt.s32.totalorder %s286, 32
        %s288 = scalar_select %p287, %s286, 32
        %s289 = smul.u32 128, %s288
        %p290 = scmp.lt.s32.totalorder %s285, 37
        %s291 = scalar_select %p290, %s285, 37
        %s292 = smul.addr %s291, 8
        %s293 = scalar_lea.vmem %s0, %s292
        %s294 = smul.u32 32, %s17
        %s295 = ssub.s32 38, %s294
        %p296 = scmp.lt.s32.totalorder %s295, 32
        %s297 = scalar_select %p296, %s295, 32
        %s298 = smul.u32 128, %s297
      $region48: #{qnetwork_forward.1} parent=43 // pred_fallthru
        _
      // Predicated region
      $region49: #{qnetwork_forward.1} parent=43 // pred_check
        %p299 = pneg %p63
      $region50: #{qnetwork_forward.1} parent=43 // pred_check_branch
        %301 = sbr.rel (%p299) target = $region52
      $region51: #{qnetwork_forward.1} parent=43 // pred_region
        %s302 = smul.u32 32, %s17
        %s303 = ssub.s32 38, %s302
        %p304 = scmp.lt.s32.totalorder %s303, 32
        %s305 = scalar_select %p304, %s303, 32
        %s306 = smul.u32 128, %s305
        %p307 = scmp.lt.s32.totalorder %s302, 37
        %s308 = scalar_select %p307, %s302, 37
        %s309 = smul.addr %s308, 8
        %s310 = scalar_lea.vmem %s1, %s309
        %s311 = smul.u32 32, %s17
        %s312 = ssub.s32 38, %s311
        %p313 = scmp.lt.s32.totalorder %s312, 32
        %s314 = scalar_select %p313, %s312, 32
        %s315 = smul.u32 128, %s314
      $region52: #{qnetwork_forward.1} parent=43 // pred_fallthru
        _
    $region44: #{qnetwork_forward.1} parent=5 // pred_fallthru
      _
    %p316 = scmp.le.s32.totalorder 1, %s17
    %p317 = scmp.lt.s32.totalorder %s17, 3
    %p318 = pnand %p316, %p317
    %p319 = pneg %p318
    // Predicated region
    $region53: #{qnetwork_forward.1} parent=5 // pred_check
      _
    $region54: #{qnetwork_forward.1} parent=5 // pred_check_branch
      %321 = sbr.rel (%p318) target = $region56
    $region55: #{qnetwork_forward.1} parent=5 // pred_region
      %s322 = ssub.s32 %s17, 1
      %s323 = smul.u32 32, %s22
      %s324 = ssub.s32 38, %s323
      %p325 = scmp.lt.s32.totalorder %s324, 32
      %s326 = scalar_select %p325, %s324, 32
      %s327 = smul.u32 128, %s326
      %p328 = scmp.lt.s32.totalorder %s323, 37
      %s329 = scalar_select %p328, %s323, 37
      %s330 = smul.addr %s329, 8
      %s331 = scalar_lea.vmem %s0, %s330
      %p332 = pneg %p43
      %p333 = pneg %p40
      %s334 = smul.u32 32, %s22
      %s335 = ssub.s32 38, %s334
      %p336 = scmp.lt.s32.totalorder %s335, 32
      %s337 = scalar_select %p336, %s335, 32
      %s338 = smul.u32 128, %s337
      %p339 = scmp.lt.s32.totalorder %s334, 37
      %s340 = scalar_select %p339, %s334, 37
      %s341 = smul.addr %s340, 8
      %s342 = scalar_lea.vmem %s1, %s341
      %p343 = pneg %p69
      %p344 = pneg %p66
      %p345 = pneg %p90
      %p346 = pneg %p87
      %p347 = pneg %p111
      %p348 = pneg %p108
      %p349 = pneg %p132
      %p350 = pneg %p129
      %p351 = pneg %p153
      %p352 = pneg %p150
      %p353 = pneg %p174
      %p354 = pneg %p171
      %p355 = pneg %p195
      %p356 = pneg %p192
      %p357 = pneg %p216
      %p358 = pneg %p213
      %p359 = pneg %p242
      %p360 = pneg %p239
      %p361 = scmp.lt.s32.totalorder %s22, 1
      %s362 = scalar_select %p361, %s22, 1
      %s363 = smul.addr %s362, 2
      %s364 = scalar_lea.vmem %s9, %s363
      %s365 = smul.u32 32, %s22
      %s366 = ssub.s32 38, %s365
      %p367 = scmp.lt.s32.totalorder %s366, 32
      %s368 = scalar_select %p367, %s366, 32
      %s369 = smul.u32 128, %s368
      %p370 = scmp.lt.s32.totalorder %s365, 37
      %s371 = scalar_select %p370, %s365, 37
      %s372 = smul.addr %s371, 8
      %s373 = scalar_lea.vmem %s0, %s372
      %s374 = smul.u32 32, %s22
      %s375 = ssub.s32 38, %s374
      %p376 = scmp.lt.s32.totalorder %s375, 32
      %s377 = scalar_select %p376, %s375, 32
      %s378 = smul.u32 128, %s377
      %s379 = smul.u32 32, %s22
      %s380 = ssub.s32 38, %s379
      %p381 = scmp.lt.s32.totalorder %s380, 32
      %s382 = scalar_select %p381, %s380, 32
      %s383 = smul.u32 128, %s382
      %p384 = scmp.lt.s32.totalorder %s379, 37
      %s385 = scalar_select %p384, %s379, 37
      %s386 = smul.addr %s385, 8
      %s387 = scalar_lea.vmem %s1, %s386
      %s388 = smul.u32 32, %s22
      %s389 = ssub.s32 38, %s388
      %p390 = scmp.lt.s32.totalorder %s389, 32
      %s391 = scalar_select %p390, %s389, 32
      %s392 = smul.u32 128, %s391
      %p393 = scmp.lt.s32.totalorder %s22, 1
      %s394 = scalar_select %p393, %s22, 1
      %s395 = smul.addr %s394, 2
      %s396 = scalar_lea.vmem %s9, %s395
      %v398 = vld [vmem:[%s373] sm:$0xff]
      %v399 = vld [vmem:[%s373 + $0x8] sm:$0xff]
      %v400 = vld [vmem:[%s373 + $0x10] sm:$0xff]
      %v401 = vld [vmem:[%s373 + $0x18] sm:$0xff]
      %v402 = vld [vmem:[%s373 + $0x20] sm:$0xff]
      %v403 = vld [vmem:[%s373 + $0x28] sm:$0xff]
      %v404 = vld [vmem:[%s373 + $0x30] sm:$0xff]
      %v405 = vld [vmem:[%s373 + $0x38] sm:$0xff]
      %v406 = vld [vmem:[%s373 + $0x40] sm:$0xff]
      %v407 = vld [vmem:[%s373 + $0x48] sm:$0xff]
      %v408 = vld [vmem:[%s373 + $0x50] sm:$0xff]
      %v409 = vld [vmem:[%s373 + $0x58] sm:$0xff]
      %v410 = vld [vmem:[%s373 + $0x60] sm:$0xff]
      %v411 = vld [vmem:[%s373 + $0x68] sm:$0xff]
      %v412 = vld [vmem:[%s373 + $0x70] sm:$0xff]
      %v413 = vld [vmem:[%s373 + $0x78] sm:$0xff]
      %v414 = vld [vmem:[%s373 + $0x80] sm:$0xff]
      %v415 = vld [vmem:[%s373 + $0x88] sm:$0xff]
      %v416 = vld [vmem:[%s373 + $0x90] sm:$0xff]
      %v417 = vld [vmem:[%s373 + $0x98] sm:$0xff]
      %v418 = vld [vmem:[%s373 + $0xa0] sm:$0xff]
      %v419 = vld [vmem:[%s373 + $0xa8] sm:$0xff]
      %v420 = vld [vmem:[%s373 + $0xb0] sm:$0xff]
      %v421 = vld [vmem:[%s373 + $0xb8] sm:$0xff]
      %v422 = vld [vmem:[%s373 + $0xc0] sm:$0xff]
      %v423 = vld [vmem:[%s373 + $0xc8] sm:$0xff]
      %v424 = vld [vmem:[%s373 + $0xd0] sm:$0xff]
      %v425 = vld [vmem:[%s373 + $0xd8] sm:$0xff]
      %v426 = vld [vmem:[%s373 + $0xe0] sm:$0xff]
      %v427 = vld [vmem:[%s373 + $0xe8] sm:$0xff]
      %v428 = vld [vmem:[%s373 + $0xf0] sm:$0xff]
      %v429 = vld [vmem:[%s373 + $0xf8] sm:$0xff]
      %v430 = vpack.c.bf16 %v399, %v398
      %v431 = vpack.c.bf16 %v401, %v400
      %v432 = vpack.c.bf16 %v403, %v402
      %v433 = vpack.c.bf16 %v405, %v404
      %v434 = vpack.c.bf16 %v407, %v406
      %v435 = vpack.c.bf16 %v409, %v408
      %v436 = vpack.c.bf16 %v411, %v410
      %v437 = vpack.c.bf16 %v413, %v412
      %v438 = vpack.c.bf16 %v415, %v414
      %v439 = vpack.c.bf16 %v417, %v416
      %v440 = vpack.c.bf16 %v419, %v418
      %v441 = vpack.c.bf16 %v421, %v420
      %v442 = vpack.c.bf16 %v423, %v422
      %v443 = vpack.c.bf16 %v425, %v424
      %v444 = vpack.c.bf16 %v427, %v426
      %v445 = vpack.c.bf16 %v429, %v428
      %v446 = vld [vmem:[%s2] sm:$0xff]
      %v447 = vld [vmem:[%s387] sm:$0xff]
      %v448 = vld [vmem:[%s387 + $0x8] sm:$0xff]
      %v449 = vld [vmem:[%s387 + $0x10] sm:$0xff]
      %v450 = vld [vmem:[%s387 + $0x18] sm:$0xff]
      %v451 = vld [vmem:[%s387 + $0x20] sm:$0xff]
      %v452 = vld [vmem:[%s387 + $0x28] sm:$0xff]
      %v453 = vld [vmem:[%s387 + $0x30] sm:$0xff]
      %v454 = vld [vmem:[%s387 + $0x38] sm:$0xff]
      %v455 = vld [vmem:[%s387 + $0x40] sm:$0xff]
      %v456 = vld [vmem:[%s387 + $0x48] sm:$0xff]
      %v457 = vld [vmem:[%s387 + $0x50] sm:$0xff]
      %v458 = vld [vmem:[%s387 + $0x58] sm:$0xff]
      %v459 = vld [vmem:[%s387 + $0x60] sm:$0xff]
      %v460 = vld [vmem:[%s387 + $0x68] sm:$0xff]
      %v461 = vld [vmem:[%s387 + $0x70] sm:$0xff]
      %v462 = vld [vmem:[%s387 + $0x78] sm:$0xff]
      %v463 = vld [vmem:[%s387 + $0x80] sm:$0xff]
      %v464 = vld [vmem:[%s387 + $0x88] sm:$0xff]
      %v465 = vld [vmem:[%s387 + $0x90] sm:$0xff]
      %v466 = vld [vmem:[%s387 + $0x98] sm:$0xff]
      %v467 = vld [vmem:[%s387 + $0xa0] sm:$0xff]
      %v468 = vld [vmem:[%s387 + $0xa8] sm:$0xff]
      %v469 = vld [vmem:[%s387 + $0xb0] sm:$0xff]
      %v470 = vld [vmem:[%s387 + $0xb8] sm:$0xff]
      %v471 = vld [vmem:[%s387 + $0xc0] sm:$0xff]
      %v472 = vld [vmem:[%s387 + $0xc8] sm:$0xff]
      %v473 = vld [vmem:[%s387 + $0xd0] sm:$0xff]
      %v474 = vld [vmem:[%s387 + $0xd8] sm:$0xff]
      %v475 = vld [vmem:[%s387 + $0xe0] sm:$0xff]
      %v476 = vld [vmem:[%s387 + $0xe8] sm:$0xff]
      %v477 = vld [vmem:[%s387 + $0xf0] sm:$0xff]
      %v478 = vld [vmem:[%s387 + $0xf8] sm:$0xff]
      %v479 = vpack.c.bf16 %v448, %v447
      %v480 = vpack.c.bf16 %v450, %v449
      %v481 = vpack.c.bf16 %v452, %v451
      %v482 = vpack.c.bf16 %v454, %v453
      %v483 = vpack.c.bf16 %v456, %v455
      %v484 = vpack.c.bf16 %v458, %v457
      %v485 = vpack.c.bf16 %v460, %v459
      %v486 = vpack.c.bf16 %v462, %v461
      %v487 = vpack.c.bf16 %v464, %v463
      %v488 = vpack.c.bf16 %v466, %v465
      %v489 = vpack.c.bf16 %v468, %v467
      %v490 = vpack.c.bf16 %v470, %v469
      %v491 = vpack.c.bf16 %v472, %v471
      %v492 = vpack.c.bf16 %v474, %v473
      %v493 = vpack.c.bf16 %v476, %v475
      %v494 = vpack.c.bf16 %v478, %v477
      %v495 = vld [vmem:[%s3] sm:$0xf]
      %v498 = vunpack.c.l.s4 1983009808
      %v499 = vunpack.c.0.s8 %v498
      %v500 = vlaneseq
      %v501 = vshrl.u32 %v500, 7
      %v502 = vsub.s32 %v499, %v501
      %v503 = vrot.slane %v495, %v502
      %v504 = vcombine.high %v503, %v503
      %vm505 = vcmask 31744
      %v507 = vsel %vm505, %v479, 0
      %v510 = vsel %vm505, %v480, 0
      %v513 = vsel %vm505, %v481, 0
      %v516 = vsel %vm505, %v482, 0
      %v519 = vsel %vm505, %v483, 0
      %v522 = vsel %vm505, %v484, 0
      %v525 = vsel %vm505, %v485, 0
      %v528 = vsel %vm505, %v486, 0
      %v531 = vsel %vm505, %v487, 0
      %v534 = vsel %vm505, %v488, 0
      %v537 = vsel %vm505, %v489, 0
      %v540 = vsel %vm505, %v490, 0
      %v543 = vsel %vm505, %v491, 0
      %v546 = vsel %vm505, %v492, 0
      %v549 = vsel %vm505, %v493, 0
      %v552 = vsel %vm505, %v494, 0
      %vm554 = vcmask 1041408
      %v556 = vsel %vm554, %v503, 0
      %v559 = vsel %vm554, %v504, 0
      %561 = vmatprep.subr.bf16.mxu0 %v559
      %562 = vmatpush1.bf16.msra.mxu0 %v556
      %563 = vmatprep.subr.bf16.mxu0 0
      %564 = vmatpush1.bf16.msra.mxu0 0
      %565 = vmatprep.subr.bf16.mxu0 0
      %566 = vmatpush1.bf16.msra.mxu0 0
      %567 = vmatprep.subr.bf16.mxu0 0
      %568 = vmatpush1.bf16.msra.mxu0 0
      %569 = vmatprep.subr.bf16.mxu0 0
      %570 = vmatpush1.bf16.msra.mxu0 0
      %571 = vmatprep.subr.bf16.mxu0 0
      %572 = vmatpush1.bf16.msra.mxu0 0
      %573 = vmatprep.subr.bf16.mxu0 0
      %574 = vmatpush1.bf16.msra.mxu0 0
      %575 = vmatprep.subr.bf16.mxu0 0
      %576 = vmatpush1.bf16.msra.mxu0 0
      %577 = vmatprep.subr.bf16.mxu0 0
      %578 = vmatpush1.bf16.msra.mxu0 0
      %579 = vmatprep.subr.bf16.mxu0 0
      %580 = vmatpush1.bf16.msra.mxu0 0
      %581 = vmatprep.subr.bf16.mxu0 0
      %582 = vmatpush1.bf16.msra.mxu0 0
      %583 = vmatprep.subr.bf16.mxu0 0
      %584 = vmatpush1.bf16.msra.mxu0 0
      %585 = vmatprep.subr.bf16.mxu0 0
      %586 = vmatpush1.bf16.msra.mxu0 0
      %587 = vmatprep.subr.bf16.mxu0 0
      %588 = vmatpush1.bf16.msra.mxu0 0
      %589 = vmatprep.subr.bf16.mxu0 0
      %590 = vmatpush1.bf16.msra.mxu0 0
      %591 = vmatprep.subr.bf16.mxu0 0
      %592 = vmatpush1.bf16.msra.mxu0 0
      %593 = vmatprep.mubr.bf16.mxu0 0
      %594 = vmatmul.mubr.bf16.gmra.mrb[0].mxu0 %v507
      %v595 = vpop.f32.mrb[0].mxu0
      %v596 = vadd.f32 0.0, %v595
      %v597 = vpop.f32.mrb[0].mxu0
      %v598 = vadd.f32 0.0, %v597
      %v599 = vpop.f32.mrb[0].mxu0
      %v600 = vadd.f32 0.0, %v599
      %v601 = vpop.f32.mrb[0].mxu0
      %v602 = vadd.f32 0.0, %v601
      %603 = vmatprep.mubr.bf16.mxu0 0
      %604 = vmatmul.mubr.bf16.gmra.mrb[0].mxu0 %v510
      %v605 = vpop.f32.mrb[0].mxu0
      %v606 = vadd.f32 0.0, %v605
      %v607 = vpop.f32.mrb[0].mxu0
      %v608 = vadd.f32 0.0, %v607
      %v609 = vpop.f32.mrb[0].mxu0
      %v610 = vadd.f32 0.0, %v609
      %v611 = vpop.f32.mrb[0].mxu0
      %v612 = vadd.f32 0.0, %v611
      %613 = vmatprep.mubr.bf16.mxu0 0
      %614 = vmatmul.mubr.bf16.gmra.mrb[0].mxu0 %v513
      %v615 = vpop.f32.mrb[0].mxu0
      %v616 = vadd.f32 0.0, %v615
      %v617 = vpop.f32.mrb[0].mxu0
      %v618 = vadd.f32 0.0, %v617
      %v619 = vpop.f32.mrb[0].mxu0
      %v620 = vadd.f32 0.0, %v619
      %v621 = vpop.f32.mrb[0].mxu0
      %v622 = vadd.f32 0.0, %v621
      %623 = vmatprep.mubr.bf16.mxu0 0
      %624 = vmatmul.mubr.bf16.gmra.mrb[0].mxu0 %v516
      %v625 = vpop.f32.mrb[0].mxu0
      %v626 = vadd.f32 0.0, %v625
      %v627 = vpop.f32.mrb[0].mxu0
      %v628 = vadd.f32 0.0, %v627
      %v629 = vpop.f32.mrb[0].mxu0
      %v630 = vadd.f32 0.0, %v629
      %v631 = vpop.f32.mrb[0].mxu0
      %v632 = vadd.f32 0.0, %v631
      %633 = vmatprep.mubr.bf16.mxu0 0
      %634 = vmatmul.mubr.bf16.gmra.mrb[0].mxu0 %v519
      %v635 = vpop.f32.mrb[0].mxu0
      %v636 = vadd.f32 0.0, %v635
      %v637 = vpop.f32.mrb[0].mxu0
      %v638 = vadd.f32 0.0, %v637
      %v639 = vpop.f32.mrb[0].mxu0
      %v640 = vadd.f32 0.0, %v639
      %v641 = vpop.f32.mrb[0].mxu0
      %v642 = vadd.f32 0.0, %v641
      %643 = vmatprep.mubr.bf16.mxu0 0
      %644 = vmatmul.mubr.bf16.gmra.mrb[0].mxu0 %v522
      %v645 = vpop.f32.mrb[0].mxu0
      %v646 = vadd.f32 0.0, %v645
      %v647 = vpop.f32.mrb[0].mxu0
      %v648 = vadd.f32 0.0, %v647
      %v649 = vpop.f32.mrb[0].mxu0
      %v650 = vadd.f32 0.0, %v649
      %v651 = vpop.f32.mrb[0].mxu0
      %v652 = vadd.f32 0.0, %v651
      %653 = vmatprep.mubr.bf16.mxu0 0
      %654 = vmatmul.mubr.bf16.gmra.mrb[0].mxu0 %v525
      %v655 = vpop.f32.mrb[0].mxu0
      %v656 = vadd.f32 0.0, %v655
      %v657 = vpop.f32.mrb[0].mxu0
      %v658 = vadd.f32 0.0, %v657
      %v659 = vpop.f32.mrb[0].mxu0
      %v660 = vadd.f32 0.0, %v659
      %v661 = vpop.f32.mrb[0].mxu0
      %v662 = vadd.f32 0.0, %v661
      %663 = vmatprep.mubr.bf16.mxu0 0
      %664 = vmatmul.mubr.bf16.gmra.mrb[0].mxu0 %v528
      %v665 = vpop.f32.mrb[0].mxu0
      %v666 = vadd.f32 0.0, %v665
      %v667 = vpop.f32.mrb[0].mxu0
      %v668 = vadd.f32 0.0, %v667
      %v669 = vpop.f32.mrb[0].mxu0
      %v670 = vadd.f32 0.0, %v669
      %v671 = vpop.f32.mrb[0].mxu0
      %v672 = vadd.f32 0.0, %v671
      %673 = vmatprep.mubr.bf16.mxu0 0
      %674 = vmatmul.mubr.bf16.gmra.mrb[0].mxu0 %v531
      %v675 = vpop.f32.mrb[0].mxu0
      %v676 = vadd.f32 0.0, %v675
      %v677 = vpop.f32.mrb[0].mxu0
      %v678 = vadd.f32 0.0, %v677
      %v679 = vpop.f32.mrb[0].mxu0
      %v680 = vadd.f32 0.0, %v679
      %v681 = vpop.f32.mrb[0].mxu0
      %v682 = vadd.f32 0.0, %v681
      %683 = vmatprep.mubr.bf16.mxu0 0
      %684 = vmatmul.mubr.bf16.gmra.mrb[0].mxu0 %v534
      %v685 = vpop.f32.mrb[0].mxu0
      %v686 = vadd.f32 0.0, %v685
      %v687 = vpop.f32.mrb[0].mxu0
      %v688 = vadd.f32 0.0, %v687
      %v689 = vpop.f32.mrb[0].mxu0
      %v690 = vadd.f32 0.0, %v689
      %v691 = vpop.f32.mrb[0].mxu0
      %v692 = vadd.f32 0.0, %v691
      %693 = vmatprep.mubr.bf16.mxu0 0
      %694 = vmatmul.mubr.bf16.gmra.mrb[0].mxu0 %v537
      %v695 = vpop.f32.mrb[0].mxu0
      %v696 = vadd.f32 0.0, %v695
      %v697 = vpop.f32.mrb[0].mxu0
      %v698 = vadd.f32 0.0, %v697
      %v699 = vpop.f32.mrb[0].mxu0
      %v700 = vadd.f32 0.0, %v699
      %v701 = vpop.f32.mrb[0].mxu0
      %v702 = vadd.f32 0.0, %v701
      %703 = vmatprep.mubr.bf16.mxu0 0
      %704 = vmatmul.mubr.bf16.gmra.mrb[0].mxu0 %v540
      %v705 = vpop.f32.mrb[0].mxu0
      %v706 = vadd.f32 0.0, %v705
      %v707 = vpop.f32.mrb[0].mxu0
      %v708 = vadd.f32 0.0, %v707
      %v709 = vpop.f32.mrb[0].mxu0
      %v710 = vadd.f32 0.0, %v709
      %v711 = vpop.f32.mrb[0].mxu0
      %v712 = vadd.f32 0.0, %v711
      %713 = vmatprep.mubr.bf16.mxu0 0
      %714 = vmatmul.mubr.bf16.gmra.mrb[0].mxu0 %v543
      %v715 = vpop.f32.mrb[0].mxu0
      %v716 = vadd.f32 0.0, %v715
      %v717 = vpop.f32.mrb[0].mxu0
      %v718 = vadd.f32 0.0, %v717
      %v719 = vpop.f32.mrb[0].mxu0
      %v720 = vadd.f32 0.0, %v719
      %v721 = vpop.f32.mrb[0].mxu0
      %v722 = vadd.f32 0.0, %v721
      %723 = vmatprep.mubr.bf16.mxu0 0
      %724 = vmatmul.mubr.bf16.gmra.mrb[0].mxu0 %v546
      %v725 = vpop.f32.mrb[0].mxu0
      %v726 = vadd.f32 0.0, %v725
      %v727 = vpop.f32.mrb[0].mxu0
      %v728 = vadd.f32 0.0, %v727
      %v729 = vpop.f32.mrb[0].mxu0
      %v730 = vadd.f32 0.0, %v729
      %v731 = vpop.f32.mrb[0].mxu0
      %v732 = vadd.f32 0.0, %v731
      %733 = vmatprep.mubr.bf16.mxu0 0
      %734 = vmatmul.mubr.bf16.gmra.mrb[0].mxu0 %v549
      %v735 = vpop.f32.mrb[0].mxu0
      %v736 = vadd.f32 0.0, %v735
      %v737 = vpop.f32.mrb[0].mxu0
      %v738 = vadd.f32 0.0, %v737
      %v739 = vpop.f32.mrb[0].mxu0
      %v740 = vadd.f32 0.0, %v739
      %v741 = vpop.f32.mrb[0].mxu0
      %v742 = vadd.f32 0.0, %v741
      %743 = vmatprep.mubr.bf16.mxu0 0
      %744 = vmatmul.mubr.bf16.gmra.mrb[0].mxu0 %v552
      %v745 = vpop.f32.mrb[0].mxu0
      %v746 = vadd.f32 0.0, %v745
      %v747 = vpop.f32.mrb[0].mxu0
      %v748 = vadd.f32 0.0, %v747
      %v749 = vpop.f32.mrb[0].mxu0
      %v750 = vadd.f32 0.0, %v749
      %v751 = vpop.f32.mrb[0].mxu0
      %v752 = vadd.f32 0.0, %v751
      %753 = vdwg.mxu0
      %v755 = vunpack.c.l.b16 %v446
      %v756 = vunpack.c.h.b16 %v446
      %v757 = vpack.c.b16 %v755, %v755
      %v758 = vpack.c.b16 %v756, %v756
      %vm759 = vcmask 64512
      %v761 = vsel %vm759, %v430, 0
      %v764 = vsel %vm759, %v431, 0
      %v767 = vsel %vm759, %v432, 0
      %v770 = vsel %vm759, %v433, 0
      %v773 = vsel %vm759, %v434, 0
      %v776 = vsel %vm759, %v435, 0
      %v779 = vsel %vm759, %v436, 0
      %v782 = vsel %vm759, %v437, 0
      %v785 = vsel %vm759, %v438, 0
      %v788 = vsel %vm759, %v439, 0
      %v791 = vsel %vm759, %v440, 0
      %v794 = vsel %vm759, %v441, 0
      %v797 = vsel %vm759, %v442, 0
      %v800 = vsel %vm759, %v443, 0
      %v803 = vsel %vm759, %v444, 0
      %v806 = vsel %vm759, %v445, 0
      %vm808 = vcmask 1043456
      %v810 = vsel %vm808, %v757, 0
      %v813 = vsel %vm808, %v758, 0
      %815 = vmatprep.subr.bf16.mxu0 %v813
      %816 = vmatpush1.bf16.msra.mxu0 %v810
      %817 = vmatprep.subr.bf16.mxu0 0
      %818 = vmatpush1.bf16.msra.mxu0 0
      %819 = vmatprep.subr.bf16.mxu0 0
      %820 = vmatpush1.bf16.msra.mxu0 0
      %821 = vmatprep.subr.bf16.mxu0 0
      %822 = vmatpush1.bf16.msra.mxu0 0
      %823 = vmatprep.subr.bf16.mxu0 0
      %824 = vmatpush1.bf16.msra.mxu0 0
      %825 = vmatprep.subr.bf16.mxu0 0
      %826 = vmatpush1.bf16.msra.mxu0 0
      %827 = vmatprep.subr.bf16.mxu0 0
      %828 = vmatpush1.bf16.msra.mxu0 0
      %829 = vmatprep.subr.bf16.mxu0 0
      %830 = vmatpush1.bf16.msra.mxu0 0
      %831 = vmatprep.subr.bf16.mxu0 0
      %832 = vmatpush1.bf16.msra.mxu0 0
      %833 = vmatprep.subr.bf16.mxu0 0
      %834 = vmatpush1.bf16.msra.mxu0 0
      %835 = vmatprep.subr.bf16.mxu0 0
      %836 = vmatpush1.bf16.msra.mxu0 0
      %837 = vmatprep.subr.bf16.mxu0 0
      %838 = vmatpush1.bf16.msra.mxu0 0
      %839 = vmatprep.subr.bf16.mxu0 0
      %840 = vmatpush1.bf16.msra.mxu0 0
      %841 = vmatprep.subr.bf16.mxu0 0
      %842 = vmatpush1.bf16.msra.mxu0 0
      %843 = vmatprep.subr.bf16.mxu0 0
      %844 = vmatpush1.bf16.msra.mxu0 0
      %845 = vmatprep.subr.bf16.mxu0 0
      %846 = vmatpush1.bf16.msra.mxu0 0
      %847 = vmatprep.mubr.bf16.mxu0 0
      %848 = vmatmul.mubr.bf16.gmra.mrb[0].mxu0 %v761
      %v849 = vpop.f32.mrb[0].mxu0
      %v850 = vadd.f32 %v596, %v849
      %v851 = vpop.f32.mrb[0].mxu0
      %v852 = vadd.f32 %v598, %v851
      %v853 = vpop.f32.mrb[0].mxu0
      %v854 = vadd.f32 %v600, %v853
      %v855 = vpop.f32.mrb[0].mxu0
      %v856 = vadd.f32 %v602, %v855
      %857 = vmatprep.mubr.bf16.mxu0 0
      %858 = vmatmul.mubr.bf16.gmra.mrb[0].mxu0 %v764
      %v859 = vpop.f32.mrb[0].mxu0
      %v860 = vadd.f32 %v606, %v859
      %v861 = vpop.f32.mrb[0].mxu0
      %v862 = vadd.f32 %v608, %v861
      %v863 = vpop.f32.mrb[0].mxu0
      %v864 = vadd.f32 %v610, %v863
      %v865 = vpop.f32.mrb[0].mxu0
      %v866 = vadd.f32 %v612, %v865
      %867 = vmatprep.mubr.bf16.mxu0 0
      %868 = vmatmul.mubr.bf16.gmra.mrb[0].mxu0 %v767
      %v869 = vpop.f32.mrb[0].mxu0
      %v870 = vadd.f32 %v616, %v869
      %v871 = vpop.f32.mrb[0].mxu0
      %v872 = vadd.f32 %v618, %v871
      %v873 = vpop.f32.mrb[0].mxu0
      %v874 = vadd.f32 %v620, %v873
      %v875 = vpop.f32.mrb[0].mxu0
      %v876 = vadd.f32 %v622, %v875
      %877 = vmatprep.mubr.bf16.mxu0 0
      %878 = vmatmul.mubr.bf16.gmra.mrb[0].mxu0 %v770
      %v879 = vpop.f32.mrb[0].mxu0
      %v880 = vadd.f32 %v626, %v879
      %v881 = vpop.f32.mrb[0].mxu0
      %v882 = vadd.f32 %v628, %v881
      %v883 = vpop.f32.mrb[0].mxu0
      %v884 = vadd.f32 %v630, %v883
      %v885 = vpop.f32.mrb[0].mxu0
      %v886 = vadd.f32 %v632, %v885
      %887 = vmatprep.mubr.bf16.mxu0 0
      %888 = vmatmul.mubr.bf16.gmra.mrb[0].mxu0 %v773
      %v889 = vpop.f32.mrb[0].mxu0
      %v890 = vadd.f32 %v636, %v889
      %v891 = vpop.f32.mrb[0].mxu0
      %v892 = vadd.f32 %v638, %v891
      %v893 = vpop.f32.mrb[0].mxu0
      %v894 = vadd.f32 %v640, %v893
      %v895 = vpop.f32.mrb[0].mxu0
      %v896 = vadd.f32 %v642, %v895
      %897 = vmatprep.mubr.bf16.mxu0 0
      %898 = vmatmul.mubr.bf16.gmra.mrb[0].mxu0 %v776
      %v899 = vpop.f32.mrb[0].mxu0
      %v900 = vadd.f32 %v646, %v899
      %v901 = vpop.f32.mrb[0].mxu0
      %v902 = vadd.f32 %v648, %v901
      %v903 = vpop.f32.mrb[0].mxu0
      %v904 = vadd.f32 %v650, %v903
      %v905 = vpop.f32.mrb[0].mxu0
      %v906 = vadd.f32 %v652, %v905
      %907 = vmatprep.mubr.bf16.mxu0 0
      %908 = vmatmul.mubr.bf16.gmra.mrb[0].mxu0 %v779
      %v909 = vpop.f32.mrb[0].mxu0
      %v910 = vadd.f32 %v656, %v909
      %v911 = vpop.f32.mrb[0].mxu0
      %v912 = vadd.f32 %v658, %v911
      %v913 = vpop.f32.mrb[0].mxu0
      %v914 = vadd.f32 %v660, %v913
      %v915 = vpop.f32.mrb[0].mxu0
      %v916 = vadd.f32 %v662, %v915
      %917 = vmatprep.mubr.bf16.mxu0 0
      %918 = vmatmul.mubr.bf16.gmra.mrb[0].mxu0 %v782
      %v919 = vpop.f32.mrb[0].mxu0
      %v920 = vadd.f32 %v666, %v919
      %v921 = vpop.f32.mrb[0].mxu0
      %v922 = vadd.f32 %v668, %v921
      %v923 = vpop.f32.mrb[0].mxu0
      %v924 = vadd.f32 %v670, %v923
      %v925 = vpop.f32.mrb[0].mxu0
      %v926 = vadd.f32 %v672, %v925
      %927 = vmatprep.mubr.bf16.mxu0 0
      %928 = vmatmul.mubr.bf16.gmra.mrb[0].mxu0 %v785
      %v929 = vpop.f32.mrb[0].mxu0
      %v930 = vadd.f32 %v676, %v929
      %v931 = vpop.f32.mrb[0].mxu0
      %v932 = vadd.f32 %v678, %v931
      %v933 = vpop.f32.mrb[0].mxu0
      %v934 = vadd.f32 %v680, %v933
      %v935 = vpop.f32.mrb[0].mxu0
      %v936 = vadd.f32 %v682, %v935
      %937 = vmatprep.mubr.bf16.mxu0 0
      %938 = vmatmul.mubr.bf16.gmra.mrb[0].mxu0 %v788
      %v939 = vpop.f32.mrb[0].mxu0
      %v940 = vadd.f32 %v686, %v939
      %v941 = vpop.f32.mrb[0].mxu0
      %v942 = vadd.f32 %v688, %v941
      %v943 = vpop.f32.mrb[0].mxu0
      %v944 = vadd.f32 %v690, %v943
      %v945 = vpop.f32.mrb[0].mxu0
      %v946 = vadd.f32 %v692, %v945
      %947 = vmatprep.mubr.bf16.mxu0 0
      %948 = vmatmul.mubr.bf16.gmra.mrb[0].mxu0 %v791
      %v949 = vpop.f32.mrb[0].mxu0
      %v950 = vadd.f32 %v696, %v949
      %v951 = vpop.f32.mrb[0].mxu0
      %v952 = vadd.f32 %v698, %v951
      %v953 = vpop.f32.mrb[0].mxu0
      %v954 = vadd.f32 %v700, %v953
      %v955 = vpop.f32.mrb[0].mxu0
      %v956 = vadd.f32 %v702, %v955
      %957 = vmatprep.mubr.bf16.mxu0 0
      %958 = vmatmul.mubr.bf16.gmra.mrb[0].mxu0 %v794
      %v959 = vpop.f32.mrb[0].mxu0
      %v960 = vadd.f32 %v706, %v959
      %v961 = vpop.f32.mrb[0].mxu0
      %v962 = vadd.f32 %v708, %v961
      %v963 = vpop.f32.mrb[0].mxu0
      %v964 = vadd.f32 %v710, %v963
      %v965 = vpop.f32.mrb[0].mxu0
      %v966 = vadd.f32 %v712, %v965
      %967 = vmatprep.mubr.bf16.mxu0 0
      %968 = vmatmul.mubr.bf16.gmra.mrb[0].mxu0 %v797
      %v969 = vpop.f32.mrb[0].mxu0
      %v970 = vadd.f32 %v716, %v969
      %v971 = vpop.f32.mrb[0].mxu0
      %v972 = vadd.f32 %v718, %v971
      %v973 = vpop.f32.mrb[0].mxu0
      %v974 = vadd.f32 %v720, %v973
      %v975 = vpop.f32.mrb[0].mxu0
      %v976 = vadd.f32 %v722, %v975
      %977 = vmatprep.mubr.bf16.mxu0 0
      %978 = vmatmul.mubr.bf16.gmra.mrb[0].mxu0 %v800
      %v979 = vpop.f32.mrb[0].mxu0
      %v980 = vadd.f32 %v726, %v979
      %v981 = vpop.f32.mrb[0].mxu0
      %v982 = vadd.f32 %v728, %v981
      %v983 = vpop.f32.mrb[0].mxu0
      %v984 = vadd.f32 %v730, %v983
      %v985 = vpop.f32.mrb[0].mxu0
      %v986 = vadd.f32 %v732, %v985
      %987 = vmatprep.mubr.bf16.mxu0 0
      %988 = vmatmul.mubr.bf16.gmra.mrb[0].mxu0 %v803
      %v989 = vpop.f32.mrb[0].mxu0
      %v990 = vadd.f32 %v736, %v989
      %v991 = vpop.f32.mrb[0].mxu0
      %v992 = vadd.f32 %v738, %v991
      %v993 = vpop.f32.mrb[0].mxu0
      %v994 = vadd.f32 %v740, %v993
      %v995 = vpop.f32.mrb[0].mxu0
      %v996 = vadd.f32 %v742, %v995
      %997 = vmatprep.mubr.bf16.mxu0 0
      %998 = vmatmul.mubr.bf16.gmra.mrb[0].mxu0 %v806
      %v999 = vpop.f32.mrb[0].mxu0
      %v1000 = vadd.f32 %v746, %v999
      %v1001 = vpop.f32.mrb[0].mxu0
      %v1002 = vadd.f32 %v748, %v1001
      %v1003 = vpop.f32.mrb[0].mxu0
      %v1004 = vadd.f32 %v750, %v1003
      %v1005 = vpop.f32.mrb[0].mxu0
      %v1006 = vadd.f32 %v752, %v1005
      %1007 = vdwg.mxu0
      %v1008 = vld [vmem:[%s4] sm:$0x3]
      %v1010 = vlaneseq
      %v1011 = vshrl.u32 %v1010, 7
      %v1012 = vsub.s32 0, %v1011
      %v1013 = vrot.slane %v1008, %v1012
      %v1014 = vlaneseq
      %v1015 = vshrl.u32 %v1014, 7
      %v1016 = vsub.s32 1, %v1015
      %v1017 = vrot.slane %v1008, %v1016
      %v1020 = vadd.f32 %v850, %v1013
      %v1021 = vadd.f32 %v852, %v1017
      %v1022 = vadd.f32 %v854, %v1013
      %v1023 = vadd.f32 %v856, %v1017
      %v1024 = vadd.f32 %v860, %v1013
      %v1025 = vadd.f32 %v862, %v1017
      %v1026 = vadd.f32 %v864, %v1013
      %v1027 = vadd.f32 %v866, %v1017
      %v1028 = vadd.f32 %v870, %v1013
      %v1029 = vadd.f32 %v872, %v1017
      %v1030 = vadd.f32 %v874, %v1013
      %v1031 = vadd.f32 %v876, %v1017
      %v1032 = vadd.f32 %v880, %v1013
      %v1033 = vadd.f32 %v882, %v1017
      %v1034 = vadd.f32 %v884, %v1013
      %v1035 = vadd.f32 %v886, %v1017
      %v1036 = vadd.f32 %v890, %v1013
      %v1037 = vadd.f32 %v892, %v1017
      %v1038 = vadd.f32 %v894, %v1013
      %v1039 = vadd.f32 %v896, %v1017
      %v1040 = vadd.f32 %v900, %v1013
      %v1041 = vadd.f32 %v902, %v1017
      %v1042 = vadd.f32 %v904, %v1013
      %v1043 = vadd.f32 %v906, %v1017
      %v1044 = vadd.f32 %v910, %v1013
      %v1045 = vadd.f32 %v912, %v1017
      %v1046 = vadd.f32 %v914, %v1013
      %v1047 = vadd.f32 %v916, %v1017
      %v1048 = vadd.f32 %v920, %v1013
      %v1049 = vadd.f32 %v922, %v1017
      %v1050 = vadd.f32 %v924, %v1013
      %v1051 = vadd.f32 %v926, %v1017
      %v1052 = vadd.f32 %v930, %v1013
      %v1053 = vadd.f32 %v932, %v1017
      %v1054 = vadd.f32 %v934, %v1013
      %v1055 = vadd.f32 %v936, %v1017
      %v1056 = vadd.f32 %v940, %v1013
      %v1057 = vadd.f32 %v942, %v1017
      %v1058 = vadd.f32 %v944, %v1013
      %v1059 = vadd.f32 %v946, %v1017
      %v1060 = vadd.f32 %v950, %v1013
      %v1061 = vadd.f32 %v952, %v1017
      %v1062 = vadd.f32 %v954, %v1013
      %v1063 = vadd.f32 %v956, %v1017
      %v1064 = vadd.f32 %v960, %v1013
      %v1065 = vadd.f32 %v962, %v1017
      %v1066 = vadd.f32 %v964, %v1013
      %v1067 = vadd.f32 %v966, %v1017
      %v1068 = vadd.f32 %v970, %v1013
      %v1069 = vadd.f32 %v972, %v1017
      %v1070 = vadd.f32 %v974, %v1013
      %v1071 = vadd.f32 %v976, %v1017
      %v1072 = vadd.f32 %v980, %v1013
      %v1073 = vadd.f32 %v982, %v1017
      %v1074 = vadd.f32 %v984, %v1013
      %v1075 = vadd.f32 %v986, %v1017
      %v1076 = vadd.f32 %v990, %v1013
      %v1077 = vadd.f32 %v992, %v1017
      %v1078 = vadd.f32 %v994, %v1013
      %v1079 = vadd.f32 %v996, %v1017
      %v1080 = vadd.f32 %v1000, %v1013
      %v1081 = vadd.f32 %v1002, %v1017
      %v1082 = vadd.f32 %v1004, %v1013
      %v1083 = vadd.f32 %v1006, %v1017
      %v1084 = vmax.f32 %v1020, 0.0
      %v1085 = vmax.f32 %v1021, 0.0
      %v1086 = vmax.f32 %v1022, 0.0
      %v1087 = vmax.f32 %v1023, 0.0
      %v1088 = vmax.f32 %v1024, 0.0
      %v1089 = vmax.f32 %v1025, 0.0
      %v1090 = vmax.f32 %v1026, 0.0
      %v1091 = vmax.f32 %v1027, 0.0
      %v1092 = vmax.f32 %v1028, 0.0
      %v1093 = vmax.f32 %v1029, 0.0
      %v1094 = vmax.f32 %v1030, 0.0
      %v1095 = vmax.f32 %v1031, 0.0
      %v1096 = vmax.f32 %v1032, 0.0
      %v1097 = vmax.f32 %v1033, 0.0
      %v1098 = vmax.f32 %v1034, 0.0
      %v1099 = vmax.f32 %v1035, 0.0
      %v1100 = vmax.f32 %v1036, 0.0
      %v1101 = vmax.f32 %v1037, 0.0
      %v1102 = vmax.f32 %v1038, 0.0
      %v1103 = vmax.f32 %v1039, 0.0
      %v1104 = vmax.f32 %v1040, 0.0
      %v1105 = vmax.f32 %v1041, 0.0
      %v1106 = vmax.f32 %v1042, 0.0
      %v1107 = vmax.f32 %v1043, 0.0
      %v1108 = vmax.f32 %v1044, 0.0
      %v1109 = vmax.f32 %v1045, 0.0
      %v1110 = vmax.f32 %v1046, 0.0
      %v1111 = vmax.f32 %v1047, 0.0
      %v1112 = vmax.f32 %v1048, 0.0
      %v1113 = vmax.f32 %v1049, 0.0
      %v1114 = vmax.f32 %v1050, 0.0
      %v1115 = vmax.f32 %v1051, 0.0
      %v1116 = vmax.f32 %v1052, 0.0
      %v1117 = vmax.f32 %v1053, 0.0
      %v1118 = vmax.f32 %v1054, 0.0
      %v1119 = vmax.f32 %v1055, 0.0
      %v1120 = vmax.f32 %v1056, 0.0
      %v1121 = vmax.f32 %v1057, 0.0
      %v1122 = vmax.f32 %v1058, 0.0
      %v1123 = vmax.f32 %v1059, 0.0
      %v1124 = vmax.f32 %v1060, 0.0
      %v1125 = vmax.f32 %v1061, 0.0
      %v1126 = vmax.f32 %v1062, 0.0
      %v1127 = vmax.f32 %v1063, 0.0
      %v1128 = vmax.f32 %v1064, 0.0
      %v1129 = vmax.f32 %v1065, 0.0
      %v1130 = vmax.f32 %v1066, 0.0
      %v1131 = vmax.f32 %v1067, 0.0
      %v1132 = vmax.f32 %v1068, 0.0
      %v1133 = vmax.f32 %v1069, 0.0
      %v1134 = vmax.f32 %v1070, 0.0
      %v1135 = vmax.f32 %v1071, 0.0
      %v1136 = vmax.f32 %v1072, 0.0
      %v1137 = vmax.f32 %v1073, 0.0
      %v1138 = vmax.f32 %v1074, 0.0
      %v1139 = vmax.f32 %v1075, 0.0
      %v1140 = vmax.f32 %v1076, 0.0
      %v1141 = vmax.f32 %v1077, 0.0
      %v1142 = vmax.f32 %v1078, 0.0
      %v1143 = vmax.f32 %v1079, 0.0
      %v1144 = vmax.f32 %v1080, 0.0
      %v1145 = vmax.f32 %v1081, 0.0
      %v1146 = vmax.f32 %v1082, 0.0
      %v1147 = vmax.f32 %v1083, 0.0
      %v1148 = vpack.c.bf16 %v1086, %v1084
      %v1149 = vpack.c.bf16 %v1087, %v1085
      %v1150 = vpack.c.bf16 %v1090, %v1088
      %v1151 = vpack.c.bf16 %v1091, %v1089
      %v1152 = vpack.c.bf16 %v1094, %v1092
      %v1153 = vpack.c.bf16 %v1095, %v1093
      %v1154 = vpack.c.bf16 %v1098, %v1096
      %v1155 = vpack.c.bf16 %v1099, %v1097
      %v1156 = vpack.c.bf16 %v1102, %v1100
      %v1157 = vpack.c.bf16 %v1103, %v1101
      %v1158 = vpack.c.bf16 %v1106, %v1104
      %v1159 = vpack.c.bf16 %v1107, %v1105
      %v1160 = vpack.c.bf16 %v1110, %v1108
      %v1161 = vpack.c.bf16 %v1111, %v1109
      %v1162 = vpack.c.bf16 %v1114, %v1112
      %v1163 = vpack.c.bf16 %v1115, %v1113
      %v1164 = vpack.c.bf16 %v1118, %v1116
      %v1165 = vpack.c.bf16 %v1119, %v1117
      %v1166 = vpack.c.bf16 %v1122, %v1120
      %v1167 = vpack.c.bf16 %v1123, %v1121
      %v1168 = vpack.c.bf16 %v1126, %v1124
      %v1169 = vpack.c.bf16 %v1127, %v1125
      %v1170 = vpack.c.bf16 %v1130, %v1128
      %v1171 = vpack.c.bf16 %v1131, %v1129
      %v1172 = vpack.c.bf16 %v1134, %v1132
      %v1173 = vpack.c.bf16 %v1135, %v1133
      %v1174 = vpack.c.bf16 %v1138, %v1136
      %v1175 = vpack.c.bf16 %v1139, %v1137
      %v1176 = vpack.c.bf16 %v1142, %v1140
      %v1177 = vpack.c.bf16 %v1143, %v1141
      %v1178 = vpack.c.bf16 %v1146, %v1144
      %v1179 = vpack.c.bf16 %v1147, %v1145
      %v1180 = vld [vmem:[%s5] sm:$0xff]
      %v1181 = vld [vmem:[%s5 + $0x8] sm:$0xff]
      %v1182 = vld [vmem:[%s5 + $0x10] sm:$0xff]
      %v1183 = vld [vmem:[%s5 + $0x18] sm:$0xff]
      %v1184 = vld [vmem:[%s5 + $0x20] sm:$0xff]
      %v1185 = vld [vmem:[%s5 + $0x28] sm:$0xff]
      %v1186 = vld [vmem:[%s5 + $0x30] sm:$0xff]
      %v1187 = vld [vmem:[%s5 + $0x38] sm:$0xff]
      %v1188 = vld [vmem:[%s5 + $0x40] sm:$0xff]
      %v1189 = vld [vmem:[%s5 + $0x48] sm:$0xff]
      %v1190 = vld [vmem:[%s5 + $0x50] sm:$0xff]
      %v1191 = vld [vmem:[%s5 + $0x58] sm:$0xff]
      %v1192 = vld [vmem:[%s5 + $0x60] sm:$0xff]
      %v1193 = vld [vmem:[%s5 + $0x68] sm:$0xff]
      %v1194 = vld [vmem:[%s5 + $0x70] sm:$0xff]
      %v1195 = vld [vmem:[%s5 + $0x78] sm:$0xff]
      %v1196 = vld [vmem:[%s5 + $0x80] sm:$0xff]
      %v1197 = vld [vmem:[%s5 + $0x88] sm:$0xff]
      %v1198 = vld [vmem:[%s5 + $0x90] sm:$0xff]
      %v1199 = vld [vmem:[%s5 + $0x98] sm:$0xff]
      %v1200 = vld [vmem:[%s5 + $0xa0] sm:$0xff]
      %v1201 = vld [vmem:[%s5 + $0xa8] sm:$0xff]
      %v1202 = vld [vmem:[%s5 + $0xb0] sm:$0xff]
      %v1203 = vld [vmem:[%s5 + $0xb8] sm:$0xff]
      %v1204 = vld [vmem:[%s5 + $0xc0] sm:$0xff]
      %v1205 = vld [vmem:[%s5 + $0xc8] sm:$0xff]
      %v1206 = vld [vmem:[%s5 + $0xd0] sm:$0xff]
      %v1207 = vld [vmem:[%s5 + $0xd8] sm:$0xff]
      %v1208 = vld [vmem:[%s5 + $0xe0] sm:$0xff]
      %v1209 = vld [vmem:[%s5 + $0xe8] sm:$0xff]
      %v1210 = vld [vmem:[%s5 + $0xf0] sm:$0xff]
      %v1211 = vld [vmem:[%s5 + $0xf8] sm:$0xff]
      %v1212 = vld [vmem:[%s6] sm:$0x3]
      %v1214 = vlaneseq
      %v1215 = vshrl.u32 %v1214, 7
      %v1216 = vsub.s32 0, %v1215
      %v1217 = vrot.slane %v1212, %v1216
      %v1218 = vlaneseq
      %v1219 = vshrl.u32 %v1218, 7
      %v1220 = vsub.s32 1, %v1219
      %v1221 = vrot.slane %v1212, %v1220
      %v1256 = vunpack.c.l.b16 %v1180
      %v1257 = vunpack.c.h.b16 %v1180
      %v1258 = vunpack.c.l.b16 %v1181
      %v1259 = vunpack.c.h.b16 %v1181
      %v1260 = vunpack.c.l.b16 %v1182
      %v1261 = vunpack.c.h.b16 %v1182
      %v1262 = vunpack.c.l.b16 %v1183
      %v1263 = vunpack.c.h.b16 %v1183
      %v1264 = vunpack.c.l.b16 %v1184
      %v1265 = vunpack.c.h.b16 %v1184
      %v1266 = vunpack.c.l.b16 %v1185
      %v1267 = vunpack.c.h.b16 %v1185
      %v1268 = vunpack.c.l.b16 %v1186
      %v1269 = vunpack.c.h.b16 %v1186
      %v1270 = vunpack.c.l.b16 %v1187
      %v1271 = vunpack.c.h.b16 %v1187
      %v1272 = vunpack.c.l.b16 %v1188
      %v1273 = vunpack.c.h.b16 %v1188
      %v1274 = vunpack.c.l.b16 %v1189
      %v1275 = vunpack.c.h.b16 %v1189
      %v1276 = vunpack.c.l.b16 %v1190
      %v1277 = vunpack.c.h.b16 %v1190
      %v1278 = vunpack.c.l.b16 %v1191
      %v1279 = vunpack.c.h.b16 %v1191
      %v1280 = vunpack.c.l.b16 %v1192
      %v1281 = vunpack.c.h.b16 %v1192
      %v1282 = vunpack.c.l.b16 %v1193
      %v1283 = vunpack.c.h.b16 %v1193
      %v1284 = vunpack.c.l.b16 %v1194
      %v1285 = vunpack.c.h.b16 %v1194
      %v1286 = vunpack.c.l.b16 %v1195
      %v1287 = vunpack.c.h.b16 %v1195
      %v1288 = vunpack.c.l.b16 %v1196
      %v1289 = vunpack.c.h.b16 %v1196
      %v1290 = vunpack.c.l.b16 %v1197
      %v1291 = vunpack.c.h.b16 %v1197
      %v1292 = vunpack.c.l.b16 %v1198
      %v1293 = vunpack.c.h.b16 %v1198
      %v1294 = vunpack.c.l.b16 %v1199
      %v1295 = vunpack.c.h.b16 %v1199
      %v1296 = vunpack.c.l.b16 %v1200
      %v1297 = vunpack.c.h.b16 %v1200
      %v1298 = vunpack.c.l.b16 %v1201
      %v1299 = vunpack.c.h.b16 %v1201
      %v1300 = vunpack.c.l.b16 %v1202
      %v1301 = vunpack.c.h.b16 %v1202
      %v1302 = vunpack.c.l.b16 %v1203
      %v1303 = vunpack.c.h.b16 %v1203
      %v1304 = vunpack.c.l.b16 %v1204
      %v1305 = vunpack.c.h.b16 %v1204
      %v1306 = vunpack.c.l.b16 %v1205
      %v1307 = vunpack.c.h.b16 %v1205
      %v1308 = vunpack.c.l.b16 %v1206
      %v1309 = vunpack.c.h.b16 %v1206
      %v1310 = vunpack.c.l.b16 %v1207
      %v1311 = vunpack.c.h.b16 %v1207
      %v1312 = vunpack.c.l.b16 %v1208
      %v1313 = vunpack.c.h.b16 %v1208
      %v1314 = vunpack.c.l.b16 %v1209
      %v1315 = vunpack.c.h.b16 %v1209
      %v1316 = vunpack.c.l.b16 %v1210
      %v1317 = vunpack.c.h.b16 %v1210
      %v1318 = vunpack.c.l.b16 %v1211
      %v1319 = vunpack.c.h.b16 %v1211
      %v1320 = vpack.c.b16 %v1258, %v1256
      %v1321 = vpack.c.b16 %v1259, %v1257
      %v1322 = vpack.c.b16 %v1262, %v1260
      %v1323 = vpack.c.b16 %v1263, %v1261
      %v1324 = vpack.c.b16 %v1266, %v1264
      %v1325 = vpack.c.b16 %v1267, %v1265
      %v1326 = vpack.c.b16 %v1270, %v1268
      %v1327 = vpack.c.b16 %v1271, %v1269
      %v1328 = vpack.c.b16 %v1274, %v1272
      %v1329 = vpack.c.b16 %v1275, %v1273
      %v1330 = vpack.c.b16 %v1278, %v1276
      %v1331 = vpack.c.b16 %v1279, %v1277
      %v1332 = vpack.c.b16 %v1282, %v1280
      %v1333 = vpack.c.b16 %v1283, %v1281
      %v1334 = vpack.c.b16 %v1286, %v1284
      %v1335 = vpack.c.b16 %v1287, %v1285
      %v1336 = vpack.c.b16 %v1290, %v1288
      %v1337 = vpack.c.b16 %v1291, %v1289
      %v1338 = vpack.c.b16 %v1294, %v1292
      %v1339 = vpack.c.b16 %v1295, %v1293
      %v1340 = vpack.c.b16 %v1298, %v1296
      %v1341 = vpack.c.b16 %v1299, %v1297
      %v1342 = vpack.c.b16 %v1302, %v1300
      %v1343 = vpack.c.b16 %v1303, %v1301
      %v1344 = vpack.c.b16 %v1306, %v1304
      %v1345 = vpack.c.b16 %v1307, %v1305
      %v1346 = vpack.c.b16 %v1310, %v1308
      %v1347 = vpack.c.b16 %v1311, %v1309
      %v1348 = vpack.c.b16 %v1314, %v1312
      %v1349 = vpack.c.b16 %v1315, %v1313
      %v1350 = vpack.c.b16 %v1318, %v1316
      %v1351 = vpack.c.b16 %v1319, %v1317
      %1384 = vmatprep.subr.bf16.mxu0 %v1321
      %1385 = vmatpush1.bf16.msra.mxu0 %v1320
      %1386 = vmatprep.subr.bf16.mxu0 %v1323
      %1387 = vmatpush1.bf16.msra.mxu0 %v1322
      %1388 = vmatprep.subr.bf16.mxu0 %v1325
      %1389 = vmatpush1.bf16.msra.mxu0 %v1324
      %1390 = vmatprep.subr.bf16.mxu0 %v1327
      %1391 = vmatpush1.bf16.msra.mxu0 %v1326
      %1392 = vmatprep.subr.bf16.mxu0 %v1329
      %1393 = vmatpush1.bf16.msra.mxu0 %v1328
      %1394 = vmatprep.subr.bf16.mxu0 %v1331
      %1395 = vmatpush1.bf16.msra.mxu0 %v1330
      %1396 = vmatprep.subr.bf16.mxu0 %v1333
      %1397 = vmatpush1.bf16.msra.mxu0 %v1332
      %1398 = vmatprep.subr.bf16.mxu0 %v1335
      %1399 = vmatpush1.bf16.msra.mxu0 %v1334
      %1400 = vmatprep.subr.bf16.mxu0 %v1337
      %1401 = vmatpush1.bf16.msra.mxu0 %v1336
      %1402 = vmatprep.subr.bf16.mxu0 %v1339
      %1403 = vmatpush1.bf16.msra.mxu0 %v1338
      %1404 = vmatprep.subr.bf16.mxu0 %v1341
      %1405 = vmatpush1.bf16.msra.mxu0 %v1340
      %1406 = vmatprep.subr.bf16.mxu0 %v1343
      %1407 = vmatpush1.bf16.msra.mxu0 %v1342
      %1408 = vmatprep.subr.bf16.mxu0 %v1345
      %1409 = vmatpush1.bf16.msra.mxu0 %v1344
      %1410 = vmatprep.subr.bf16.mxu0 %v1347
      %1411 = vmatpush1.bf16.msra.mxu0 %v1346
      %1412 = vmatprep.subr.bf16.mxu0 %v1349
      %1413 = vmatpush1.bf16.msra.mxu0 %v1348
      %1414 = vmatprep.subr.bf16.mxu0 %v1351
      %1415 = vmatpush1.bf16.msra.mxu0 %v1350
      %1416 = vmatprep.mubr.bf16.mxu0 %v1149
      %1417 = vmatmul.mubr.bf16.gmra.mrb[0].mxu0 %v1148
      %v1418 = vpop.f32.mrb[0].mxu0
      %v1419 = vadd.f32 %v1217, %v1418
      %v1420 = vpop.f32.mrb[0].mxu0
      %v1421 = vadd.f32 %v1221, %v1420
      %v1422 = vpop.f32.mrb[0].mxu0
      %v1423 = vadd.f32 %v1217, %v1422
      %v1424 = vpop.f32.mrb[0].mxu0
      %v1425 = vadd.f32 %v1221, %v1424
      %1426 = vmatprep.mubr.bf16.mxu0 %v1151
      %1427 = vmatmul.mubr.bf16.gmra.mrb[0].mxu0 %v1150
      %v1428 = vpop.f32.mrb[0].mxu0
      %v1429 = vadd.f32 %v1217, %v1428
      %v1430 = vpop.f32.mrb[0].mxu0
      %v1431 = vadd.f32 %v1221, %v1430
      %v1432 = vpop.f32.mrb[0].mxu0
      %v1433 = vadd.f32 %v1217, %v1432
      %v1434 = vpop.f32.mrb[0].mxu0
      %v1435 = vadd.f32 %v1221, %v1434
      %1436 = vmatprep.mubr.bf16.mxu0 %v1153
      %1437 = vmatmul.mubr.bf16.gmra.mrb[0].mxu0 %v1152
      %v1438 = vpop.f32.mrb[0].mxu0
      %v1439 = vadd.f32 %v1217, %v1438
      %v1440 = vpop.f32.mrb[0].mxu0
      %v1441 = vadd.f32 %v1221, %v1440
      %v1442 = vpop.f32.mrb[0].mxu0
      %v1443 = vadd.f32 %v1217, %v1442
      %v1444 = vpop.f32.mrb[0].mxu0
      %v1445 = vadd.f32 %v1221, %v1444
      %1446 = vmatprep.mubr.bf16.mxu0 %v1155
      %1447 = vmatmul.mubr.bf16.gmra.mrb[0].mxu0 %v1154
      %v1448 = vpop.f32.mrb[0].mxu0
      %v1449 = vadd.f32 %v1217, %v1448
      %v1450 = vpop.f32.mrb[0].mxu0
      %v1451 = vadd.f32 %v1221, %v1450
      %v1452 = vpop.f32.mrb[0].mxu0
      %v1453 = vadd.f32 %v1217, %v1452
      %v1454 = vpop.f32.mrb[0].mxu0
      %v1455 = vadd.f32 %v1221, %v1454
      %1456 = vmatprep.mubr.bf16.mxu0 %v1157
      %1457 = vmatmul.mubr.bf16.gmra.mrb[0].mxu0 %v1156
      %v1458 = vpop.f32.mrb[0].mxu0
      %v1459 = vadd.f32 %v1217, %v1458
      %v1460 = vpop.f32.mrb[0].mxu0
      %v1461 = vadd.f32 %v1221, %v1460
      %v1462 = vpop.f32.mrb[0].mxu0
      %v1463 = vadd.f32 %v1217, %v1462
      %v1464 = vpop.f32.mrb[0].mxu0
      %v1465 = vadd.f32 %v1221, %v1464
      %1466 = vmatprep.mubr.bf16.mxu0 %v1159
      %1467 = vmatmul.mubr.bf16.gmra.mrb[0].mxu0 %v1158
      %v1468 = vpop.f32.mrb[0].mxu0
      %v1469 = vadd.f32 %v1217, %v1468
      %v1470 = vpop.f32.mrb[0].mxu0
      %v1471 = vadd.f32 %v1221, %v1470
      %v1472 = vpop.f32.mrb[0].mxu0
      %v1473 = vadd.f32 %v1217, %v1472
      %v1474 = vpop.f32.mrb[0].mxu0
      %v1475 = vadd.f32 %v1221, %v1474
      %1476 = vmatprep.mubr.bf16.mxu0 %v1161
      %1477 = vmatmul.mubr.bf16.gmra.mrb[0].mxu0 %v1160
      %v1478 = vpop.f32.mrb[0].mxu0
      %v1479 = vadd.f32 %v1217, %v1478
      %v1480 = vpop.f32.mrb[0].mxu0
      %v1481 = vadd.f32 %v1221, %v1480
      %v1482 = vpop.f32.mrb[0].mxu0
      %v1483 = vadd.f32 %v1217, %v1482
      %v1484 = vpop.f32.mrb[0].mxu0
      %v1485 = vadd.f32 %v1221, %v1484
      %1486 = vmatprep.mubr.bf16.mxu0 %v1163
      %1487 = vmatmul.mubr.bf16.gmra.mrb[0].mxu0 %v1162
      %v1488 = vpop.f32.mrb[0].mxu0
      %v1489 = vadd.f32 %v1217, %v1488
      %v1490 = vpop.f32.mrb[0].mxu0
      %v1491 = vadd.f32 %v1221, %v1490
      %v1492 = vpop.f32.mrb[0].mxu0
      %v1493 = vadd.f32 %v1217, %v1492
      %v1494 = vpop.f32.mrb[0].mxu0
      %v1495 = vadd.f32 %v1221, %v1494
      %1496 = vmatprep.mubr.bf16.mxu0 %v1165
      %1497 = vmatmul.mubr.bf16.gmra.mrb[0].mxu0 %v1164
      %v1498 = vpop.f32.mrb[0].mxu0
      %v1499 = vadd.f32 %v1217, %v1498
      %v1500 = vpop.f32.mrb[0].mxu0
      %v1501 = vadd.f32 %v1221, %v1500
      %v1502 = vpop.f32.mrb[0].mxu0
      %v1503 = vadd.f32 %v1217, %v1502
      %v1504 = vpop.f32.mrb[0].mxu0
      %v1505 = vadd.f32 %v1221, %v1504
      %1506 = vmatprep.mubr.bf16.mxu0 %v1167
      %1507 = vmatmul.mubr.bf16.gmra.mrb[0].mxu0 %v1166
      %v1508 = vpop.f32.mrb[0].mxu0
      %v1509 = vadd.f32 %v1217, %v1508
      %v1510 = vpop.f32.mrb[0].mxu0
      %v1511 = vadd.f32 %v1221, %v1510
      %v1512 = vpop.f32.mrb[0].mxu0
      %v1513 = vadd.f32 %v1217, %v1512
      %v1514 = vpop.f32.mrb[0].mxu0
      %v1515 = vadd.f32 %v1221, %v1514
      %1516 = vmatprep.mubr.bf16.mxu0 %v1169
      %1517 = vmatmul.mubr.bf16.gmra.mrb[0].mxu0 %v1168
      %v1518 = vpop.f32.mrb[0].mxu0
      %v1519 = vadd.f32 %v1217, %v1518
      %v1520 = vpop.f32.mrb[0].mxu0
      %v1521 = vadd.f32 %v1221, %v1520
      %v1522 = vpop.f32.mrb[0].mxu0
      %v1523 = vadd.f32 %v1217, %v1522
      %v1524 = vpop.f32.mrb[0].mxu0
      %v1525 = vadd.f32 %v1221, %v1524
      %1526 = vmatprep.mubr.bf16.mxu0 %v1171
      %1527 = vmatmul.mubr.bf16.gmra.mrb[0].mxu0 %v1170
      %v1528 = vpop.f32.mrb[0].mxu0
      %v1529 = vadd.f32 %v1217, %v1528
      %v1530 = vpop.f32.mrb[0].mxu0
      %v1531 = vadd.f32 %v1221, %v1530
      %v1532 = vpop.f32.mrb[0].mxu0
      %v1533 = vadd.f32 %v1217, %v1532
      %v1534 = vpop.f32.mrb[0].mxu0
      %v1535 = vadd.f32 %v1221, %v1534
      %1536 = vmatprep.mubr.bf16.mxu0 %v1173
      %1537 = vmatmul.mubr.bf16.gmra.mrb[0].mxu0 %v1172
      %v1538 = vpop.f32.mrb[0].mxu0
      %v1539 = vadd.f32 %v1217, %v1538
      %v1540 = vpop.f32.mrb[0].mxu0
      %v1541 = vadd.f32 %v1221, %v1540
      %v1542 = vpop.f32.mrb[0].mxu0
      %v1543 = vadd.f32 %v1217, %v1542
      %v1544 = vpop.f32.mrb[0].mxu0
      %v1545 = vadd.f32 %v1221, %v1544
      %1546 = vmatprep.mubr.bf16.mxu0 %v1175
      %1547 = vmatmul.mubr.bf16.gmra.mrb[0].mxu0 %v1174
      %v1548 = vpop.f32.mrb[0].mxu0
      %v1549 = vadd.f32 %v1217, %v1548
      %v1550 = vpop.f32.mrb[0].mxu0
      %v1551 = vadd.f32 %v1221, %v1550
      %v1552 = vpop.f32.mrb[0].mxu0
      %v1553 = vadd.f32 %v1217, %v1552
      %v1554 = vpop.f32.mrb[0].mxu0
      %v1555 = vadd.f32 %v1221, %v1554
      %1556 = vmatprep.mubr.bf16.mxu0 %v1177
      %1557 = vmatmul.mubr.bf16.gmra.mrb[0].mxu0 %v1176
      %v1558 = vpop.f32.mrb[0].mxu0
      %v1559 = vadd.f32 %v1217, %v1558
      %v1560 = vpop.f32.mrb[0].mxu0
      %v1561 = vadd.f32 %v1221, %v1560
      %v1562 = vpop.f32.mrb[0].mxu0
      %v1563 = vadd.f32 %v1217, %v1562
      %v1564 = vpop.f32.mrb[0].mxu0
      %v1565 = vadd.f32 %v1221, %v1564
      %1566 = vmatprep.mubr.bf16.mxu0 %v1179
      %1567 = vmatmul.mubr.bf16.gmra.mrb[0].mxu0 %v1178
      %v1568 = vpop.f32.mrb[0].mxu0
      %v1569 = vadd.f32 %v1217, %v1568
      %v1570 = vpop.f32.mrb[0].mxu0
      %v1571 = vadd.f32 %v1221, %v1570
      %v1572 = vpop.f32.mrb[0].mxu0
      %v1573 = vadd.f32 %v1217, %v1572
      %v1574 = vpop.f32.mrb[0].mxu0
      %v1575 = vadd.f32 %v1221, %v1574
      %1576 = vdwg.mxu0
      %v1577 = vmax.f32 %v1419, 0.0
      %v1578 = vmax.f32 %v1421, 0.0
      %v1579 = vmax.f32 %v1423, 0.0
      %v1580 = vmax.f32 %v1425, 0.0
      %v1581 = vmax.f32 %v1429, 0.0
      %v1582 = vmax.f32 %v1431, 0.0
      %v1583 = vmax.f32 %v1433, 0.0
      %v1584 = vmax.f32 %v1435, 0.0
      %v1585 = vmax.f32 %v1439, 0.0
      %v1586 = vmax.f32 %v1441, 0.0
      %v1587 = vmax.f32 %v1443, 0.0
      %v1588 = vmax.f32 %v1445, 0.0
      %v1589 = vmax.f32 %v1449, 0.0
      %v1590 = vmax.f32 %v1451, 0.0
      %v1591 = vmax.f32 %v1453, 0.0
      %v1592 = vmax.f32 %v1455, 0.0
      %v1593 = vmax.f32 %v1459, 0.0
      %v1594 = vmax.f32 %v1461, 0.0
      %v1595 = vmax.f32 %v1463, 0.0
      %v1596 = vmax.f32 %v1465, 0.0
      %v1597 = vmax.f32 %v1469, 0.0
      %v1598 = vmax.f32 %v1471, 0.0
      %v1599 = vmax.f32 %v1473, 0.0
      %v1600 = vmax.f32 %v1475, 0.0
      %v1601 = vmax.f32 %v1479, 0.0
      %v1602 = vmax.f32 %v1481, 0.0
      %v1603 = vmax.f32 %v1483, 0.0
      %v1604 = vmax.f32 %v1485, 0.0
      %v1605 = vmax.f32 %v1489, 0.0
      %v1606 = vmax.f32 %v1491, 0.0
      %v1607 = vmax.f32 %v1493, 0.0
      %v1608 = vmax.f32 %v1495, 0.0
      %v1609 = vmax.f32 %v1499, 0.0
      %v1610 = vmax.f32 %v1501, 0.0
      %v1611 = vmax.f32 %v1503, 0.0
      %v1612 = vmax.f32 %v1505, 0.0
      %v1613 = vmax.f32 %v1509, 0.0
      %v1614 = vmax.f32 %v1511, 0.0
      %v1615 = vmax.f32 %v1513, 0.0
      %v1616 = vmax.f32 %v1515, 0.0
      %v1617 = vmax.f32 %v1519, 0.0
      %v1618 = vmax.f32 %v1521, 0.0
      %v1619 = vmax.f32 %v1523, 0.0
      %v1620 = vmax.f32 %v1525, 0.0
      %v1621 = vmax.f32 %v1529, 0.0
      %v1622 = vmax.f32 %v1531, 0.0
      %v1623 = vmax.f32 %v1533, 0.0
      %v1624 = vmax.f32 %v1535, 0.0
      %v1625 = vmax.f32 %v1539, 0.0
      %v1626 = vmax.f32 %v1541, 0.0
      %v1627 = vmax.f32 %v1543, 0.0
      %v1628 = vmax.f32 %v1545, 0.0
      %v1629 = vmax.f32 %v1549, 0.0
      %v1630 = vmax.f32 %v1551, 0.0
      %v1631 = vmax.f32 %v1553, 0.0
      %v1632 = vmax.f32 %v1555, 0.0
      %v1633 = vmax.f32 %v1559, 0.0
      %v1634 = vmax.f32 %v1561, 0.0
      %v1635 = vmax.f32 %v1563, 0.0
      %v1636 = vmax.f32 %v1565, 0.0
      %v1637 = vmax.f32 %v1569, 0.0
      %v1638 = vmax.f32 %v1571, 0.0
      %v1639 = vmax.f32 %v1573, 0.0
      %v1640 = vmax.f32 %v1575, 0.0
      %v1641 = vld [vmem:[%s7] sm:$0x3]
      %v1643 = vlaneseq
      %v1644 = vshrl.u32 %v1643, 7
      %v1645 = vsub.s32 0, %v1644
      %v1646 = vrot.slane %v1641, %v1645
      %v1647 = vlaneseq
      %v1648 = vshrl.u32 %v1647, 7
      %v1649 = vsub.s32 1, %v1648
      %v1650 = vrot.slane %v1641, %v1649
      %v1653 = vmul.f32 %v1577, %v1646
      %v1654 = vmul.f32 %v1578, %v1650
      %v1655 = vmul.f32 %v1579, %v1646
      %v1656 = vmul.f32 %v1580, %v1650
      %v1657 = vmul.f32 %v1581, %v1646
      %v1658 = vmul.f32 %v1582, %v1650
      %v1659 = vmul.f32 %v1583, %v1646
      %v1660 = vmul.f32 %v1584, %v1650
      %v1661 = vmul.f32 %v1585, %v1646
      %v1662 = vmul.f32 %v1586, %v1650
      %v1663 = vmul.f32 %v1587, %v1646
      %v1664 = vmul.f32 %v1588, %v1650
      %v1665 = vmul.f32 %v1589, %v1646
      %v1666 = vmul.f32 %v1590, %v1650
      %v1667 = vmul.f32 %v1591, %v1646
      %v1668 = vmul.f32 %v1592, %v1650
      %v1669 = vmul.f32 %v1593, %v1646
      %v1670 = vmul.f32 %v1594, %v1650
      %v1671 = vmul.f32 %v1595, %v1646
      %v1672 = vmul.f32 %v1596, %v1650
      %v1673 = vmul.f32 %v1597, %v1646
      %v1674 = vmul.f32 %v1598, %v1650
      %v1675 = vmul.f32 %v1599, %v1646
      %v1676 = vmul.f32 %v1600, %v1650
      %v1677 = vmul.f32 %v1601, %v1646
      %v1678 = vmul.f32 %v1602, %v1650
      %v1679 = vmul.f32 %v1603, %v1646
      %v1680 = vmul.f32 %v1604, %v1650
      %v1681 = vmul.f32 %v1605, %v1646
      %v1682 = vmul.f32 %v1606, %v1650
      %v1683 = vmul.f32 %v1607, %v1646
      %v1684 = vmul.f32 %v1608, %v1650
      %v1685 = vmul.f32 %v1609, %v1646
      %v1686 = vmul.f32 %v1610, %v1650
      %v1687 = vmul.f32 %v1611, %v1646
      %v1688 = vmul.f32 %v1612, %v1650
      %v1689 = vmul.f32 %v1613, %v1646
      %v1690 = vmul.f32 %v1614, %v1650
      %v1691 = vmul.f32 %v1615, %v1646
      %v1692 = vmul.f32 %v1616, %v1650
      %v1693 = vmul.f32 %v1617, %v1646
      %v1694 = vmul.f32 %v1618, %v1650
      %v1695 = vmul.f32 %v1619, %v1646
      %v1696 = vmul.f32 %v1620, %v1650
      %v1697 = vmul.f32 %v1621, %v1646
      %v1698 = vmul.f32 %v1622, %v1650
      %v1699 = vmul.f32 %v1623, %v1646
      %v1700 = vmul.f32 %v1624, %v1650
      %v1701 = vmul.f32 %v1625, %v1646
      %v1702 = vmul.f32 %v1626, %v1650
      %v1703 = vmul.f32 %v1627, %v1646
      %v1704 = vmul.f32 %v1628, %v1650
      %v1705 = vmul.f32 %v1629, %v1646
      %v1706 = vmul.f32 %v1630, %v1650
      %v1707 = vmul.f32 %v1631, %v1646
      %v1708 = vmul.f32 %v1632, %v1650
      %v1709 = vmul.f32 %v1633, %v1646
      %v1710 = vmul.f32 %v1634, %v1650
      %v1711 = vmul.f32 %v1635, %v1646
      %v1712 = vmul.f32 %v1636, %v1650
      %v1713 = vmul.f32 %v1637, %v1646
      %v1714 = vmul.f32 %v1638, %v1650
      %v1715 = vmul.f32 %v1639, %v1646
      %v1716 = vmul.f32 %v1640, %v1650
      %v1717 = vadd.f32 %v1653, %v1654
      %1718 = vadd.xlane.f32.xlu0 %v1717
      %v1719 = vpop.xlane.xlu0 %1718
      %v1720 = vadd.f32 %v1655, %v1656
      %1721 = vadd.xlane.f32.xlu0 %v1720
      %v1722 = vpop.xlane.xlu0 %1721
      %v1723 = vadd.f32 %v1657, %v1658
      %1724 = vadd.xlane.f32.xlu0 %v1723
      %v1725 = vpop.xlane.xlu0 %1724
      %v1726 = vadd.f32 %v1659, %v1660
      %1727 = vadd.xlane.f32.xlu0 %v1726
      %v1728 = vpop.xlane.xlu0 %1727
      %v1729 = vadd.f32 %v1661, %v1662
      %1730 = vadd.xlane.f32.xlu0 %v1729
      %v1731 = vpop.xlane.xlu0 %1730
      %v1732 = vadd.f32 %v1663, %v1664
      %1733 = vadd.xlane.f32.xlu0 %v1732
      %v1734 = vpop.xlane.xlu0 %1733
      %v1735 = vadd.f32 %v1665, %v1666
      %1736 = vadd.xlane.f32.xlu0 %v1735
      %v1737 = vpop.xlane.xlu0 %1736
      %v1738 = vadd.f32 %v1667, %v1668
      %1739 = vadd.xlane.f32.xlu0 %v1738
      %v1740 = vpop.xlane.xlu0 %1739
      %v1741 = vadd.f32 %v1669, %v1670
      %1742 = vadd.xlane.f32.xlu0 %v1741
      %v1743 = vpop.xlane.xlu0 %1742
      %v1744 = vadd.f32 %v1671, %v1672
      %1745 = vadd.xlane.f32.xlu0 %v1744
      %v1746 = vpop.xlane.xlu0 %1745
      %v1747 = vadd.f32 %v1673, %v1674
      %1748 = vadd.xlane.f32.xlu0 %v1747
      %v1749 = vpop.xlane.xlu0 %1748
      %v1750 = vadd.f32 %v1675, %v1676
      %1751 = vadd.xlane.f32.xlu0 %v1750
      %v1752 = vpop.xlane.xlu0 %1751
      %v1753 = vadd.f32 %v1677, %v1678
      %1754 = vadd.xlane.f32.xlu0 %v1753
      %v1755 = vpop.xlane.xlu0 %1754
      %v1756 = vadd.f32 %v1679, %v1680
      %1757 = vadd.xlane.f32.xlu0 %v1756
      %v1758 = vpop.xlane.xlu0 %1757
      %v1759 = vadd.f32 %v1681, %v1682
      %1760 = vadd.xlane.f32.xlu0 %v1759
      %v1761 = vpop.xlane.xlu0 %1760
      %v1762 = vadd.f32 %v1683, %v1684
      %1763 = vadd.xlane.f32.xlu0 %v1762
      %v1764 = vpop.xlane.xlu0 %1763
      %v1765 = vadd.f32 %v1685, %v1686
      %1766 = vadd.xlane.f32.xlu0 %v1765
      %v1767 = vpop.xlane.xlu0 %1766
      %v1768 = vadd.f32 %v1687, %v1688
      %1769 = vadd.xlane.f32.xlu0 %v1768
      %v1770 = vpop.xlane.xlu0 %1769
      %v1771 = vadd.f32 %v1689, %v1690
      %1772 = vadd.xlane.f32.xlu0 %v1771
      %v1773 = vpop.xlane.xlu0 %1772
      %v1774 = vadd.f32 %v1691, %v1692
      %1775 = vadd.xlane.f32.xlu0 %v1774
      %v1776 = vpop.xlane.xlu0 %1775
      %v1777 = vadd.f32 %v1693, %v1694
      %1778 = vadd.xlane.f32.xlu0 %v1777
      %v1779 = vpop.xlane.xlu0 %1778
      %v1780 = vadd.f32 %v1695, %v1696
      %1781 = vadd.xlane.f32.xlu0 %v1780
      %v1782 = vpop.xlane.xlu0 %1781
      %v1783 = vadd.f32 %v1697, %v1698
      %1784 = vadd.xlane.f32.xlu0 %v1783
      %v1785 = vpop.xlane.xlu0 %1784
      %v1786 = vadd.f32 %v1699, %v1700
      %1787 = vadd.xlane.f32.xlu0 %v1786
      %v1788 = vpop.xlane.xlu0 %1787
      %v1789 = vadd.f32 %v1701, %v1702
      %1790 = vadd.xlane.f32.xlu0 %v1789
      %v1791 = vpop.xlane.xlu0 %1790
      %v1792 = vadd.f32 %v1703, %v1704
      %1793 = vadd.xlane.f32.xlu0 %v1792
      %v1794 = vpop.xlane.xlu0 %1793
      %v1795 = vadd.f32 %v1705, %v1706
      %1796 = vadd.xlane.f32.xlu0 %v1795
      %v1797 = vpop.xlane.xlu0 %1796
      %v1798 = vadd.f32 %v1707, %v1708
      %1799 = vadd.xlane.f32.xlu0 %v1798
      %v1800 = vpop.xlane.xlu0 %1799
      %v1801 = vadd.f32 %v1709, %v1710
      %1802 = vadd.xlane.f32.xlu0 %v1801
      %v1803 = vpop.xlane.xlu0 %1802
      %v1804 = vadd.f32 %v1711, %v1712
      %1805 = vadd.xlane.f32.xlu0 %v1804
      %v1806 = vpop.xlane.xlu0 %1805
      %v1807 = vadd.f32 %v1713, %v1714
      %1808 = vadd.xlane.f32.xlu0 %v1807
      %v1809 = vpop.xlane.xlu0 %1808
      %v1810 = vadd.f32 %v1715, %v1716
      %1811 = vadd.xlane.f32.xlu0 %v1810
      %v1812 = vpop.xlane.xlu0 %1811
      %v1813 = vld [vmem:[#allocation2] sm:$0x1]
      %1815 = vset.pattern.permute.xlu0 0
      %1816 = vperm.xlu0 %1815, %v1813
      %v1817 = vpop.permute.xlu0 %1816
      %v1819 = vlaneseq
      %v1820 = vshrl.u32 %v1819, 7
      %v1821 = vsub.s32 0, %v1820
      %v1822 = vrot.slane %v1817, %v1821
      %v1823 = vadd.f32 %v1719, %v1822
      %v1824 = vadd.f32 %v1722, %v1822
      %v1825 = vadd.f32 %v1725, %v1822
      %v1826 = vadd.f32 %v1728, %v1822
      %v1827 = vadd.f32 %v1731, %v1822
      %v1828 = vadd.f32 %v1734, %v1822
      %v1829 = vadd.f32 %v1737, %v1822
      %v1830 = vadd.f32 %v1740, %v1822
      %v1831 = vadd.f32 %v1743, %v1822
      %v1832 = vadd.f32 %v1746, %v1822
      %v1833 = vadd.f32 %v1749, %v1822
      %v1834 = vadd.f32 %v1752, %v1822
      %v1835 = vadd.f32 %v1755, %v1822
      %v1836 = vadd.f32 %v1758, %v1822
      %v1837 = vadd.f32 %v1761, %v1822
      %v1838 = vadd.f32 %v1764, %v1822
      %v1839 = vadd.f32 %v1767, %v1822
      %v1840 = vadd.f32 %v1770, %v1822
      %v1841 = vadd.f32 %v1773, %v1822
      %v1842 = vadd.f32 %v1776, %v1822
      %v1843 = vadd.f32 %v1779, %v1822
      %v1844 = vadd.f32 %v1782, %v1822
      %v1845 = vadd.f32 %v1785, %v1822
      %v1846 = vadd.f32 %v1788, %v1822
      %v1847 = vadd.f32 %v1791, %v1822
      %v1848 = vadd.f32 %v1794, %v1822
      %v1849 = vadd.f32 %v1797, %v1822
      %v1850 = vadd.f32 %v1800, %v1822
      %v1851 = vadd.f32 %v1803, %v1822
      %v1852 = vadd.f32 %v1806, %v1822
      %v1853 = vadd.f32 %v1809, %v1822
      %v1854 = vadd.f32 %v1812, %v1822
      %v1887 = vlaneseq
      %v1888 = vshrl.u32 %v1887, 7
      %v1889 = vsub.s32 0, %v1888
      %v1890 = vrot.slane %v1823, %v1889
      %v1891 = vlaneseq
      %v1892 = vshrl.u32 %v1891, 7
      %v1893 = vsub.s32 1, %v1892
      %v1894 = vrot.slane %v1823, %v1893
      %v1895 = vlaneseq
      %v1896 = vshrl.u32 %v1895, 7
      %v1897 = vsub.s32 2, %v1896
      %v1898 = vrot.slane %v1823, %v1897
      %v1899 = vlaneseq
      %v1900 = vshrl.u32 %v1899, 7
      %v1901 = vsub.s32 3, %v1900
      %v1902 = vrot.slane %v1823, %v1901
      %v1903 = vlaneseq
      %v1904 = vshrl.u32 %v1903, 7
      %v1905 = vsub.s32 4, %v1904
      %v1906 = vrot.slane %v1823, %v1905
      %v1907 = vlaneseq
      %v1908 = vshrl.u32 %v1907, 7
      %v1909 = vsub.s32 5, %v1908
      %v1910 = vrot.slane %v1823, %v1909
      %v1911 = vlaneseq
      %v1912 = vshrl.u32 %v1911, 7
      %v1913 = vsub.s32 6, %v1912
      %v1914 = vrot.slane %v1823, %v1913
      %v1915 = vlaneseq
      %v1916 = vshrl.u32 %v1915, 7
      %v1917 = vsub.s32 7, %v1916
      %v1918 = vrot.slane %v1823, %v1917
      %v1919 = vlaneseq
      %v1920 = vshrl.u32 %v1919, 7
      %v1921 = vsub.s32 0, %v1920
      %v1922 = vrot.slane %v1824, %v1921
      %v1923 = vlaneseq
      %v1924 = vshrl.u32 %v1923, 7
      %v1925 = vsub.s32 1, %v1924
      %v1926 = vrot.slane %v1824, %v1925
      %v1927 = vlaneseq
      %v1928 = vshrl.u32 %v1927, 7
      %v1929 = vsub.s32 2, %v1928
      %v1930 = vrot.slane %v1824, %v1929
      %v1931 = vlaneseq
      %v1932 = vshrl.u32 %v1931, 7
      %v1933 = vsub.s32 3, %v1932
      %v1934 = vrot.slane %v1824, %v1933
      %v1935 = vlaneseq
      %v1936 = vshrl.u32 %v1935, 7
      %v1937 = vsub.s32 4, %v1936
      %v1938 = vrot.slane %v1824, %v1937
      %v1939 = vlaneseq
      %v1940 = vshrl.u32 %v1939, 7
      %v1941 = vsub.s32 5, %v1940
      %v1942 = vrot.slane %v1824, %v1941
      %v1943 = vlaneseq
      %v1944 = vshrl.u32 %v1943, 7
      %v1945 = vsub.s32 6, %v1944
      %v1946 = vrot.slane %v1824, %v1945
      %v1947 = vlaneseq
      %v1948 = vshrl.u32 %v1947, 7
      %v1949 = vsub.s32 7, %v1948
      %v1950 = vrot.slane %v1824, %v1949
      %v1951 = vlaneseq
      %v1952 = vshrl.u32 %v1951, 7
      %v1953 = vsub.s32 0, %v1952
      %v1954 = vrot.slane %v1825, %v1953
      %v1955 = vlaneseq
      %v1956 = vshrl.u32 %v1955, 7
      %v1957 = vsub.s32 1, %v1956
      %v1958 = vrot.slane %v1825, %v1957
      %v1959 = vlaneseq
      %v1960 = vshrl.u32 %v1959, 7
      %v1961 = vsub.s32 2, %v1960
      %v1962 = vrot.slane %v1825, %v1961
      %v1963 = vlaneseq
      %v1964 = vshrl.u32 %v1963, 7
      %v1965 = vsub.s32 3, %v1964
      %v1966 = vrot.slane %v1825, %v1965
      %v1967 = vlaneseq
      %v1968 = vshrl.u32 %v1967, 7
      %v1969 = vsub.s32 4, %v1968
      %v1970 = vrot.slane %v1825, %v1969
      %v1971 = vlaneseq
      %v1972 = vshrl.u32 %v1971, 7
      %v1973 = vsub.s32 5, %v1972
      %v1974 = vrot.slane %v1825, %v1973
      %v1975 = vlaneseq
      %v1976 = vshrl.u32 %v1975, 7
      %v1977 = vsub.s32 6, %v1976
      %v1978 = vrot.slane %v1825, %v1977
      %v1979 = vlaneseq
      %v1980 = vshrl.u32 %v1979, 7
      %v1981 = vsub.s32 7, %v1980
      %v1982 = vrot.slane %v1825, %v1981
      %v1983 = vlaneseq
      %v1984 = vshrl.u32 %v1983, 7
      %v1985 = vsub.s32 0, %v1984
      %v1986 = vrot.slane %v1826, %v1985
      %v1987 = vlaneseq
      %v1988 = vshrl.u32 %v1987, 7
      %v1989 = vsub.s32 1, %v1988
      %v1990 = vrot.slane %v1826, %v1989
      %v1991 = vlaneseq
      %v1992 = vshrl.u32 %v1991, 7
      %v1993 = vsub.s32 2, %v1992
      %v1994 = vrot.slane %v1826, %v1993
      %v1995 = vlaneseq
      %v1996 = vshrl.u32 %v1995, 7
      %v1997 = vsub.s32 3, %v1996
      %v1998 = vrot.slane %v1826, %v1997
      %v1999 = vlaneseq
      %v2000 = vshrl.u32 %v1999, 7
      %v2001 = vsub.s32 4, %v2000
      %v2002 = vrot.slane %v1826, %v2001
      %v2003 = vlaneseq
      %v2004 = vshrl.u32 %v2003, 7
      %v2005 = vsub.s32 5, %v2004
      %v2006 = vrot.slane %v1826, %v2005
      %v2007 = vlaneseq
      %v2008 = vshrl.u32 %v2007, 7
      %v2009 = vsub.s32 6, %v2008
      %v2010 = vrot.slane %v1826, %v2009
      %v2011 = vlaneseq
      %v2012 = vshrl.u32 %v2011, 7
      %v2013 = vsub.s32 7, %v2012
      %v2014 = vrot.slane %v1826, %v2013
      %v2015 = vlaneseq
      %v2016 = vshrl.u32 %v2015, 7
      %v2017 = vsub.s32 0, %v2016
      %v2018 = vrot.slane %v1827, %v2017
      %v2019 = vlaneseq
      %v2020 = vshrl.u32 %v2019, 7
      %v2021 = vsub.s32 1, %v2020
      %v2022 = vrot.slane %v1827, %v2021
      %v2023 = vlaneseq
      %v2024 = vshrl.u32 %v2023, 7
      %v2025 = vsub.s32 2, %v2024
      %v2026 = vrot.slane %v1827, %v2025
      %v2027 = vlaneseq
      %v2028 = vshrl.u32 %v2027, 7
      %v2029 = vsub.s32 3, %v2028
      %v2030 = vrot.slane %v1827, %v2029
      %v2031 = vlaneseq
      %v2032 = vshrl.u32 %v2031, 7
      %v2033 = vsub.s32 4, %v2032
      %v2034 = vrot.slane %v1827, %v2033
      %v2035 = vlaneseq
      %v2036 = vshrl.u32 %v2035, 7
      %v2037 = vsub.s32 5, %v2036
      %v2038 = vrot.slane %v1827, %v2037
      %v2039 = vlaneseq
      %v2040 = vshrl.u32 %v2039, 7
      %v2041 = vsub.s32 6, %v2040
      %v2042 = vrot.slane %v1827, %v2041
      %v2043 = vlaneseq
      %v2044 = vshrl.u32 %v2043, 7
      %v2045 = vsub.s32 7, %v2044
      %v2046 = vrot.slane %v1827, %v2045
      %v2047 = vlaneseq
      %v2048 = vshrl.u32 %v2047, 7
      %v2049 = vsub.s32 0, %v2048
      %v2050 = vrot.slane %v1828, %v2049
      %v2051 = vlaneseq
      %v2052 = vshrl.u32 %v2051, 7
      %v2053 = vsub.s32 1, %v2052
      %v2054 = vrot.slane %v1828, %v2053
      %v2055 = vlaneseq
      %v2056 = vshrl.u32 %v2055, 7
      %v2057 = vsub.s32 2, %v2056
      %v2058 = vrot.slane %v1828, %v2057
      %v2059 = vlaneseq
      %v2060 = vshrl.u32 %v2059, 7
      %v2061 = vsub.s32 3, %v2060
      %v2062 = vrot.slane %v1828, %v2061
      %v2063 = vlaneseq
      %v2064 = vshrl.u32 %v2063, 7
      %v2065 = vsub.s32 4, %v2064
      %v2066 = vrot.slane %v1828, %v2065
      %v2067 = vlaneseq
      %v2068 = vshrl.u32 %v2067, 7
      %v2069 = vsub.s32 5, %v2068
      %v2070 = vrot.slane %v1828, %v2069
      %v2071 = vlaneseq
      %v2072 = vshrl.u32 %v2071, 7
      %v2073 = vsub.s32 6, %v2072
      %v2074 = vrot.slane %v1828, %v2073
      %v2075 = vlaneseq
      %v2076 = vshrl.u32 %v2075, 7
      %v2077 = vsub.s32 7, %v2076
      %v2078 = vrot.slane %v1828, %v2077
      %v2079 = vlaneseq
      %v2080 = vshrl.u32 %v2079, 7
      %v2081 = vsub.s32 0, %v2080
      %v2082 = vrot.slane %v1829, %v2081
      %v2083 = vlaneseq
      %v2084 = vshrl.u32 %v2083, 7
      %v2085 = vsub.s32 1, %v2084
      %v2086 = vrot.slane %v1829, %v2085
      %v2087 = vlaneseq
      %v2088 = vshrl.u32 %v2087, 7
      %v2089 = vsub.s32 2, %v2088
      %v2090 = vrot.slane %v1829, %v2089
      %v2091 = vlaneseq
      %v2092 = vshrl.u32 %v2091, 7
      %v2093 = vsub.s32 3, %v2092
      %v2094 = vrot.slane %v1829, %v2093
      %v2095 = vlaneseq
      %v2096 = vshrl.u32 %v2095, 7
      %v2097 = vsub.s32 4, %v2096
      %v2098 = vrot.slane %v1829, %v2097
      %v2099 = vlaneseq
      %v2100 = vshrl.u32 %v2099, 7
      %v2101 = vsub.s32 5, %v2100
      %v2102 = vrot.slane %v1829, %v2101
      %v2103 = vlaneseq
      %v2104 = vshrl.u32 %v2103, 7
      %v2105 = vsub.s32 6, %v2104
      %v2106 = vrot.slane %v1829, %v2105
      %v2107 = vlaneseq
      %v2108 = vshrl.u32 %v2107, 7
      %v2109 = vsub.s32 7, %v2108
      %v2110 = vrot.slane %v1829, %v2109
      %v2111 = vlaneseq
      %v2112 = vshrl.u32 %v2111, 7
      %v2113 = vsub.s32 0, %v2112
      %v2114 = vrot.slane %v1830, %v2113
      %v2115 = vlaneseq
      %v2116 = vshrl.u32 %v2115, 7
      %v2117 = vsub.s32 1, %v2116
      %v2118 = vrot.slane %v1830, %v2117
      %v2119 = vlaneseq
      %v2120 = vshrl.u32 %v2119, 7
      %v2121 = vsub.s32 2, %v2120
      %v2122 = vrot.slane %v1830, %v2121
      %v2123 = vlaneseq
      %v2124 = vshrl.u32 %v2123, 7
      %v2125 = vsub.s32 3, %v2124
      %v2126 = vrot.slane %v1830, %v2125
      %v2127 = vlaneseq
      %v2128 = vshrl.u32 %v2127, 7
      %v2129 = vsub.s32 4, %v2128
      %v2130 = vrot.slane %v1830, %v2129
      %v2131 = vlaneseq
      %v2132 = vshrl.u32 %v2131, 7
      %v2133 = vsub.s32 5, %v2132
      %v2134 = vrot.slane %v1830, %v2133
      %v2135 = vlaneseq
      %v2136 = vshrl.u32 %v2135, 7
      %v2137 = vsub.s32 6, %v2136
      %v2138 = vrot.slane %v1830, %v2137
      %v2139 = vlaneseq
      %v2140 = vshrl.u32 %v2139, 7
      %v2141 = vsub.s32 7, %v2140
      %v2142 = vrot.slane %v1830, %v2141
      %v2143 = vlaneseq
      %v2144 = vshrl.u32 %v2143, 7
      %v2145 = vsub.s32 0, %v2144
      %v2146 = vrot.slane %v1831, %v2145
      %v2147 = vlaneseq
      %v2148 = vshrl.u32 %v2147, 7
      %v2149 = vsub.s32 1, %v2148
      %v2150 = vrot.slane %v1831, %v2149
      %v2151 = vlaneseq
      %v2152 = vshrl.u32 %v2151, 7
      %v2153 = vsub.s32 2, %v2152
      %v2154 = vrot.slane %v1831, %v2153
      %v2155 = vlaneseq
      %v2156 = vshrl.u32 %v2155, 7
      %v2157 = vsub.s32 3, %v2156
      %v2158 = vrot.slane %v1831, %v2157
      %v2159 = vlaneseq
      %v2160 = vshrl.u32 %v2159, 7
      %v2161 = vsub.s32 4, %v2160
      %v2162 = vrot.slane %v1831, %v2161
      %v2163 = vlaneseq
      %v2164 = vshrl.u32 %v2163, 7
      %v2165 = vsub.s32 5, %v2164
      %v2166 = vrot.slane %v1831, %v2165
      %v2167 = vlaneseq
      %v2168 = vshrl.u32 %v2167, 7
      %v2169 = vsub.s32 6, %v2168
      %v2170 = vrot.slane %v1831, %v2169
      %v2171 = vlaneseq
      %v2172 = vshrl.u32 %v2171, 7
      %v2173 = vsub.s32 7, %v2172
      %v2174 = vrot.slane %v1831, %v2173
      %v2175 = vlaneseq
      %v2176 = vshrl.u32 %v2175, 7
      %v2177 = vsub.s32 0, %v2176
      %v2178 = vrot.slane %v1832, %v2177
      %v2179 = vlaneseq
      %v2180 = vshrl.u32 %v2179, 7
      %v2181 = vsub.s32 1, %v2180
      %v2182 = vrot.slane %v1832, %v2181
      %v2183 = vlaneseq
      %v2184 = vshrl.u32 %v2183, 7
      %v2185 = vsub.s32 2, %v2184
      %v2186 = vrot.slane %v1832, %v2185
      %v2187 = vlaneseq
      %v2188 = vshrl.u32 %v2187, 7
      %v2189 = vsub.s32 3, %v2188
      %v2190 = vrot.slane %v1832, %v2189
      %v2191 = vlaneseq
      %v2192 = vshrl.u32 %v2191, 7
      %v2193 = vsub.s32 4, %v2192
      %v2194 = vrot.slane %v1832, %v2193
      %v2195 = vlaneseq
      %v2196 = vshrl.u32 %v2195, 7
      %v2197 = vsub.s32 5, %v2196
      %v2198 = vrot.slane %v1832, %v2197
      %v2199 = vlaneseq
      %v2200 = vshrl.u32 %v2199, 7
      %v2201 = vsub.s32 6, %v2200
      %v2202 = vrot.slane %v1832, %v2201
      %v2203 = vlaneseq
      %v2204 = vshrl.u32 %v2203, 7
      %v2205 = vsub.s32 7, %v2204
      %v2206 = vrot.slane %v1832, %v2205
      %v2207 = vlaneseq
      %v2208 = vshrl.u32 %v2207, 7
      %v2209 = vsub.s32 0, %v2208
      %v2210 = vrot.slane %v1833, %v2209
      %v2211 = vlaneseq
      %v2212 = vshrl.u32 %v2211, 7
      %v2213 = vsub.s32 1, %v2212
      %v2214 = vrot.slane %v1833, %v2213
      %v2215 = vlaneseq
      %v2216 = vshrl.u32 %v2215, 7
      %v2217 = vsub.s32 2, %v2216
      %v2218 = vrot.slane %v1833, %v2217
      %v2219 = vlaneseq
      %v2220 = vshrl.u32 %v2219, 7
      %v2221 = vsub.s32 3, %v2220
      %v2222 = vrot.slane %v1833, %v2221
      %v2223 = vlaneseq
      %v2224 = vshrl.u32 %v2223, 7
      %v2225 = vsub.s32 4, %v2224
      %v2226 = vrot.slane %v1833, %v2225
      %v2227 = vlaneseq
      %v2228 = vshrl.u32 %v2227, 7
      %v2229 = vsub.s32 5, %v2228
      %v2230 = vrot.slane %v1833, %v2229
      %v2231 = vlaneseq
      %v2232 = vshrl.u32 %v2231, 7
      %v2233 = vsub.s32 6, %v2232
      %v2234 = vrot.slane %v1833, %v2233
      %v2235 = vlaneseq
      %v2236 = vshrl.u32 %v2235, 7
      %v2237 = vsub.s32 7, %v2236
      %v2238 = vrot.slane %v1833, %v2237
      %v2239 = vlaneseq
      %v2240 = vshrl.u32 %v2239, 7
      %v2241 = vsub.s32 0, %v2240
      %v2242 = vrot.slane %v1834, %v2241
      %v2243 = vlaneseq
      %v2244 = vshrl.u32 %v2243, 7
      %v2245 = vsub.s32 1, %v2244
      %v2246 = vrot.slane %v1834, %v2245
      %v2247 = vlaneseq
      %v2248 = vshrl.u32 %v2247, 7
      %v2249 = vsub.s32 2, %v2248
      %v2250 = vrot.slane %v1834, %v2249
      %v2251 = vlaneseq
      %v2252 = vshrl.u32 %v2251, 7
      %v2253 = vsub.s32 3, %v2252
      %v2254 = vrot.slane %v1834, %v2253
      %v2255 = vlaneseq
      %v2256 = vshrl.u32 %v2255, 7
      %v2257 = vsub.s32 4, %v2256
      %v2258 = vrot.slane %v1834, %v2257
      %v2259 = vlaneseq
      %v2260 = vshrl.u32 %v2259, 7
      %v2261 = vsub.s32 5, %v2260
      %v2262 = vrot.slane %v1834, %v2261
      %v2263 = vlaneseq
      %v2264 = vshrl.u32 %v2263, 7
      %v2265 = vsub.s32 6, %v2264
      %v2266 = vrot.slane %v1834, %v2265
      %v2267 = vlaneseq
      %v2268 = vshrl.u32 %v2267, 7
      %v2269 = vsub.s32 7, %v2268
      %v2270 = vrot.slane %v1834, %v2269
      %v2271 = vlaneseq
      %v2272 = vshrl.u32 %v2271, 7
      %v2273 = vsub.s32 0, %v2272
      %v2274 = vrot.slane %v1835, %v2273
      %v2275 = vlaneseq
      %v2276 = vshrl.u32 %v2275, 7
      %v2277 = vsub.s32 1, %v2276
      %v2278 = vrot.slane %v1835, %v2277
      %v2279 = vlaneseq
      %v2280 = vshrl.u32 %v2279, 7
      %v2281 = vsub.s32 2, %v2280
      %v2282 = vrot.slane %v1835, %v2281
      %v2283 = vlaneseq
      %v2284 = vshrl.u32 %v2283, 7
      %v2285 = vsub.s32 3, %v2284
      %v2286 = vrot.slane %v1835, %v2285
      %v2287 = vlaneseq
      %v2288 = vshrl.u32 %v2287, 7
      %v2289 = vsub.s32 4, %v2288
      %v2290 = vrot.slane %v1835, %v2289
      %v2291 = vlaneseq
      %v2292 = vshrl.u32 %v2291, 7
      %v2293 = vsub.s32 5, %v2292
      %v2294 = vrot.slane %v1835, %v2293
      %v2295 = vlaneseq
      %v2296 = vshrl.u32 %v2295, 7
      %v2297 = vsub.s32 6, %v2296
      %v2298 = vrot.slane %v1835, %v2297
      %v2299 = vlaneseq
      %v2300 = vshrl.u32 %v2299, 7
      %v2301 = vsub.s32 7, %v2300
      %v2302 = vrot.slane %v1835, %v2301
      %v2303 = vlaneseq
      %v2304 = vshrl.u32 %v2303, 7
      %v2305 = vsub.s32 0, %v2304
      %v2306 = vrot.slane %v1836, %v2305
      %v2307 = vlaneseq
      %v2308 = vshrl.u32 %v2307, 7
      %v2309 = vsub.s32 1, %v2308
      %v2310 = vrot.slane %v1836, %v2309
      %v2311 = vlaneseq
      %v2312 = vshrl.u32 %v2311, 7
      %v2313 = vsub.s32 2, %v2312
      %v2314 = vrot.slane %v1836, %v2313
      %v2315 = vlaneseq
      %v2316 = vshrl.u32 %v2315, 7
      %v2317 = vsub.s32 3, %v2316
      %v2318 = vrot.slane %v1836, %v2317
      %v2319 = vlaneseq
      %v2320 = vshrl.u32 %v2319, 7
      %v2321 = vsub.s32 4, %v2320
      %v2322 = vrot.slane %v1836, %v2321
      %v2323 = vlaneseq
      %v2324 = vshrl.u32 %v2323, 7
      %v2325 = vsub.s32 5, %v2324
      %v2326 = vrot.slane %v1836, %v2325
      %v2327 = vlaneseq
      %v2328 = vshrl.u32 %v2327, 7
      %v2329 = vsub.s32 6, %v2328
      %v2330 = vrot.slane %v1836, %v2329
      %v2331 = vlaneseq
      %v2332 = vshrl.u32 %v2331, 7
      %v2333 = vsub.s32 7, %v2332
      %v2334 = vrot.slane %v1836, %v2333
      %v2335 = vlaneseq
      %v2336 = vshrl.u32 %v2335, 7
      %v2337 = vsub.s32 0, %v2336
      %v2338 = vrot.slane %v1837, %v2337
      %v2339 = vlaneseq
      %v2340 = vshrl.u32 %v2339, 7
      %v2341 = vsub.s32 1, %v2340
      %v2342 = vrot.slane %v1837, %v2341
      %v2343 = vlaneseq
      %v2344 = vshrl.u32 %v2343, 7
      %v2345 = vsub.s32 2, %v2344
      %v2346 = vrot.slane %v1837, %v2345
      %v2347 = vlaneseq
      %v2348 = vshrl.u32 %v2347, 7
      %v2349 = vsub.s32 3, %v2348
      %v2350 = vrot.slane %v1837, %v2349
      %v2351 = vlaneseq
      %v2352 = vshrl.u32 %v2351, 7
      %v2353 = vsub.s32 4, %v2352
      %v2354 = vrot.slane %v1837, %v2353
      %v2355 = vlaneseq
      %v2356 = vshrl.u32 %v2355, 7
      %v2357 = vsub.s32 5, %v2356
      %v2358 = vrot.slane %v1837, %v2357
      %v2359 = vlaneseq
      %v2360 = vshrl.u32 %v2359, 7
      %v2361 = vsub.s32 6, %v2360
      %v2362 = vrot.slane %v1837, %v2361
      %v2363 = vlaneseq
      %v2364 = vshrl.u32 %v2363, 7
      %v2365 = vsub.s32 7, %v2364
      %v2366 = vrot.slane %v1837, %v2365
      %v2367 = vlaneseq
      %v2368 = vshrl.u32 %v2367, 7
      %v2369 = vsub.s32 0, %v2368
      %v2370 = vrot.slane %v1838, %v2369
      %v2371 = vlaneseq
      %v2372 = vshrl.u32 %v2371, 7
      %v2373 = vsub.s32 1, %v2372
      %v2374 = vrot.slane %v1838, %v2373
      %v2375 = vlaneseq
      %v2376 = vshrl.u32 %v2375, 7
      %v2377 = vsub.s32 2, %v2376
      %v2378 = vrot.slane %v1838, %v2377
      %v2379 = vlaneseq
      %v2380 = vshrl.u32 %v2379, 7
      %v2381 = vsub.s32 3, %v2380
      %v2382 = vrot.slane %v1838, %v2381
      %v2383 = vlaneseq
      %v2384 = vshrl.u32 %v2383, 7
      %v2385 = vsub.s32 4, %v2384
      %v2386 = vrot.slane %v1838, %v2385
      %v2387 = vlaneseq
      %v2388 = vshrl.u32 %v2387, 7
      %v2389 = vsub.s32 5, %v2388
      %v2390 = vrot.slane %v1838, %v2389
      %v2391 = vlaneseq
      %v2392 = vshrl.u32 %v2391, 7
      %v2393 = vsub.s32 6, %v2392
      %v2394 = vrot.slane %v1838, %v2393
      %v2395 = vlaneseq
      %v2396 = vshrl.u32 %v2395, 7
      %v2397 = vsub.s32 7, %v2396
      %v2398 = vrot.slane %v1838, %v2397
      %v2399 = vlaneseq
      %v2400 = vshrl.u32 %v2399, 7
      %v2401 = vsub.s32 0, %v2400
      %v2402 = vrot.slane %v1839, %v2401
      %v2403 = vlaneseq
      %v2404 = vshrl.u32 %v2403, 7
      %v2405 = vsub.s32 1, %v2404
      %v2406 = vrot.slane %v1839, %v2405
      %v2407 = vlaneseq
      %v2408 = vshrl.u32 %v2407, 7
      %v2409 = vsub.s32 2, %v2408
      %v2410 = vrot.slane %v1839, %v2409
      %v2411 = vlaneseq
      %v2412 = vshrl.u32 %v2411, 7
      %v2413 = vsub.s32 3, %v2412
      %v2414 = vrot.slane %v1839, %v2413
      %v2415 = vlaneseq
      %v2416 = vshrl.u32 %v2415, 7
      %v2417 = vsub.s32 4, %v2416
      %v2418 = vrot.slane %v1839, %v2417
      %v2419 = vlaneseq
      %v2420 = vshrl.u32 %v2419, 7
      %v2421 = vsub.s32 5, %v2420
      %v2422 = vrot.slane %v1839, %v2421
      %v2423 = vlaneseq
      %v2424 = vshrl.u32 %v2423, 7
      %v2425 = vsub.s32 6, %v2424
      %v2426 = vrot.slane %v1839, %v2425
      %v2427 = vlaneseq
      %v2428 = vshrl.u32 %v2427, 7
      %v2429 = vsub.s32 7, %v2428
      %v2430 = vrot.slane %v1839, %v2429
      %v2431 = vlaneseq
      %v2432 = vshrl.u32 %v2431, 7
      %v2433 = vsub.s32 0, %v2432
      %v2434 = vrot.slane %v1840, %v2433
      %v2435 = vlaneseq
      %v2436 = vshrl.u32 %v2435, 7
      %v2437 = vsub.s32 1, %v2436
      %v2438 = vrot.slane %v1840, %v2437
      %v2439 = vlaneseq
      %v2440 = vshrl.u32 %v2439, 7
      %v2441 = vsub.s32 2, %v2440
      %v2442 = vrot.slane %v1840, %v2441
      %v2443 = vlaneseq
      %v2444 = vshrl.u32 %v2443, 7
      %v2445 = vsub.s32 3, %v2444
      %v2446 = vrot.slane %v1840, %v2445
      %v2447 = vlaneseq
      %v2448 = vshrl.u32 %v2447, 7
      %v2449 = vsub.s32 4, %v2448
      %v2450 = vrot.slane %v1840, %v2449
      %v2451 = vlaneseq
      %v2452 = vshrl.u32 %v2451, 7
      %v2453 = vsub.s32 5, %v2452
      %v2454 = vrot.slane %v1840, %v2453
      %v2455 = vlaneseq
      %v2456 = vshrl.u32 %v2455, 7
      %v2457 = vsub.s32 6, %v2456
      %v2458 = vrot.slane %v1840, %v2457
      %v2459 = vlaneseq
      %v2460 = vshrl.u32 %v2459, 7
      %v2461 = vsub.s32 7, %v2460
      %v2462 = vrot.slane %v1840, %v2461
      %v2463 = vlaneseq
      %v2464 = vshrl.u32 %v2463, 7
      %v2465 = vsub.s32 0, %v2464
      %v2466 = vrot.slane %v1841, %v2465
      %v2467 = vlaneseq
      %v2468 = vshrl.u32 %v2467, 7
      %v2469 = vsub.s32 1, %v2468
      %v2470 = vrot.slane %v1841, %v2469
      %v2471 = vlaneseq
      %v2472 = vshrl.u32 %v2471, 7
      %v2473 = vsub.s32 2, %v2472
      %v2474 = vrot.slane %v1841, %v2473
      %v2475 = vlaneseq
      %v2476 = vshrl.u32 %v2475, 7
      %v2477 = vsub.s32 3, %v2476
      %v2478 = vrot.slane %v1841, %v2477
      %v2479 = vlaneseq
      %v2480 = vshrl.u32 %v2479, 7
      %v2481 = vsub.s32 4, %v2480
      %v2482 = vrot.slane %v1841, %v2481
      %v2483 = vlaneseq
      %v2484 = vshrl.u32 %v2483, 7
      %v2485 = vsub.s32 5, %v2484
      %v2486 = vrot.slane %v1841, %v2485
      %v2487 = vlaneseq
      %v2488 = vshrl.u32 %v2487, 7
      %v2489 = vsub.s32 6, %v2488
      %v2490 = vrot.slane %v1841, %v2489
      %v2491 = vlaneseq
      %v2492 = vshrl.u32 %v2491, 7
      %v2493 = vsub.s32 7, %v2492
      %v2494 = vrot.slane %v1841, %v2493
      %v2495 = vlaneseq
      %v2496 = vshrl.u32 %v2495, 7
      %v2497 = vsub.s32 0, %v2496
      %v2498 = vrot.slane %v1842, %v2497
      %v2499 = vlaneseq
      %v2500 = vshrl.u32 %v2499, 7
      %v2501 = vsub.s32 1, %v2500
      %v2502 = vrot.slane %v1842, %v2501
      %v2503 = vlaneseq
      %v2504 = vshrl.u32 %v2503, 7
      %v2505 = vsub.s32 2, %v2504
      %v2506 = vrot.slane %v1842, %v2505
      %v2507 = vlaneseq
      %v2508 = vshrl.u32 %v2507, 7
      %v2509 = vsub.s32 3, %v2508
      %v2510 = vrot.slane %v1842, %v2509
      %v2511 = vlaneseq
      %v2512 = vshrl.u32 %v2511, 7
      %v2513 = vsub.s32 4, %v2512
      %v2514 = vrot.slane %v1842, %v2513
      %v2515 = vlaneseq
      %v2516 = vshrl.u32 %v2515, 7
      %v2517 = vsub.s32 5, %v2516
      %v2518 = vrot.slane %v1842, %v2517
      %v2519 = vlaneseq
      %v2520 = vshrl.u32 %v2519, 7
      %v2521 = vsub.s32 6, %v2520
      %v2522 = vrot.slane %v1842, %v2521
      %v2523 = vlaneseq
      %v2524 = vshrl.u32 %v2523, 7
      %v2525 = vsub.s32 7, %v2524
      %v2526 = vrot.slane %v1842, %v2525
      %v2527 = vlaneseq
      %v2528 = vshrl.u32 %v2527, 7
      %v2529 = vsub.s32 0, %v2528
      %v2530 = vrot.slane %v1843, %v2529
      %v2531 = vlaneseq
      %v2532 = vshrl.u32 %v2531, 7
      %v2533 = vsub.s32 1, %v2532
      %v2534 = vrot.slane %v1843, %v2533
      %v2535 = vlaneseq
      %v2536 = vshrl.u32 %v2535, 7
      %v2537 = vsub.s32 2, %v2536
      %v2538 = vrot.slane %v1843, %v2537
      %v2539 = vlaneseq
      %v2540 = vshrl.u32 %v2539, 7
      %v2541 = vsub.s32 3, %v2540
      %v2542 = vrot.slane %v1843, %v2541
      %v2543 = vlaneseq
      %v2544 = vshrl.u32 %v2543, 7
      %v2545 = vsub.s32 4, %v2544
      %v2546 = vrot.slane %v1843, %v2545
      %v2547 = vlaneseq
      %v2548 = vshrl.u32 %v2547, 7
      %v2549 = vsub.s32 5, %v2548
      %v2550 = vrot.slane %v1843, %v2549
      %v2551 = vlaneseq
      %v2552 = vshrl.u32 %v2551, 7
      %v2553 = vsub.s32 6, %v2552
      %v2554 = vrot.slane %v1843, %v2553
      %v2555 = vlaneseq
      %v2556 = vshrl.u32 %v2555, 7
      %v2557 = vsub.s32 7, %v2556
      %v2558 = vrot.slane %v1843, %v2557
      %v2559 = vlaneseq
      %v2560 = vshrl.u32 %v2559, 7
      %v2561 = vsub.s32 0, %v2560
      %v2562 = vrot.slane %v1844, %v2561
      %v2563 = vlaneseq
      %v2564 = vshrl.u32 %v2563, 7
      %v2565 = vsub.s32 1, %v2564
      %v2566 = vrot.slane %v1844, %v2565
      %v2567 = vlaneseq
      %v2568 = vshrl.u32 %v2567, 7
      %v2569 = vsub.s32 2, %v2568
      %v2570 = vrot.slane %v1844, %v2569
      %v2571 = vlaneseq
      %v2572 = vshrl.u32 %v2571, 7
      %v2573 = vsub.s32 3, %v2572
      %v2574 = vrot.slane %v1844, %v2573
      %v2575 = vlaneseq
      %v2576 = vshrl.u32 %v2575, 7
      %v2577 = vsub.s32 4, %v2576
      %v2578 = vrot.slane %v1844, %v2577
      %v2579 = vlaneseq
      %v2580 = vshrl.u32 %v2579, 7
      %v2581 = vsub.s32 5, %v2580
      %v2582 = vrot.slane %v1844, %v2581
      %v2583 = vlaneseq
      %v2584 = vshrl.u32 %v2583, 7
      %v2585 = vsub.s32 6, %v2584
      %v2586 = vrot.slane %v1844, %v2585
      %v2587 = vlaneseq
      %v2588 = vshrl.u32 %v2587, 7
      %v2589 = vsub.s32 7, %v2588
      %v2590 = vrot.slane %v1844, %v2589
      %v2591 = vlaneseq
      %v2592 = vshrl.u32 %v2591, 7
      %v2593 = vsub.s32 0, %v2592
      %v2594 = vrot.slane %v1845, %v2593
      %v2595 = vlaneseq
      %v2596 = vshrl.u32 %v2595, 7
      %v2597 = vsub.s32 1, %v2596
      %v2598 = vrot.slane %v1845, %v2597
      %v2599 = vlaneseq
      %v2600 = vshrl.u32 %v2599, 7
      %v2601 = vsub.s32 2, %v2600
      %v2602 = vrot.slane %v1845, %v2601
      %v2603 = vlaneseq
      %v2604 = vshrl.u32 %v2603, 7
      %v2605 = vsub.s32 3, %v2604
      %v2606 = vrot.slane %v1845, %v2605
      %v2607 = vlaneseq
      %v2608 = vshrl.u32 %v2607, 7
      %v2609 = vsub.s32 4, %v2608
      %v2610 = vrot.slane %v1845, %v2609
      %v2611 = vlaneseq
      %v2612 = vshrl.u32 %v2611, 7
      %v2613 = vsub.s32 5, %v2612
      %v2614 = vrot.slane %v1845, %v2613
      %v2615 = vlaneseq
      %v2616 = vshrl.u32 %v2615, 7
      %v2617 = vsub.s32 6, %v2616
      %v2618 = vrot.slane %v1845, %v2617
      %v2619 = vlaneseq
      %v2620 = vshrl.u32 %v2619, 7
      %v2621 = vsub.s32 7, %v2620
      %v2622 = vrot.slane %v1845, %v2621
      %v2623 = vlaneseq
      %v2624 = vshrl.u32 %v2623, 7
      %v2625 = vsub.s32 0, %v2624
      %v2626 = vrot.slane %v1846, %v2625
      %v2627 = vlaneseq
      %v2628 = vshrl.u32 %v2627, 7
      %v2629 = vsub.s32 1, %v2628
      %v2630 = vrot.slane %v1846, %v2629
      %v2631 = vlaneseq
      %v2632 = vshrl.u32 %v2631, 7
      %v2633 = vsub.s32 2, %v2632
      %v2634 = vrot.slane %v1846, %v2633
      %v2635 = vlaneseq
      %v2636 = vshrl.u32 %v2635, 7
      %v2637 = vsub.s32 3, %v2636
      %v2638 = vrot.slane %v1846, %v2637
      %v2639 = vlaneseq
      %v2640 = vshrl.u32 %v2639, 7
      %v2641 = vsub.s32 4, %v2640
      %v2642 = vrot.slane %v1846, %v2641
      %v2643 = vlaneseq
      %v2644 = vshrl.u32 %v2643, 7
      %v2645 = vsub.s32 5, %v2644
      %v2646 = vrot.slane %v1846, %v2645
      %v2647 = vlaneseq
      %v2648 = vshrl.u32 %v2647, 7
      %v2649 = vsub.s32 6, %v2648
      %v2650 = vrot.slane %v1846, %v2649
      %v2651 = vlaneseq
      %v2652 = vshrl.u32 %v2651, 7
      %v2653 = vsub.s32 7, %v2652
      %v2654 = vrot.slane %v1846, %v2653
      %v2655 = vlaneseq
      %v2656 = vshrl.u32 %v2655, 7
      %v2657 = vsub.s32 0, %v2656
      %v2658 = vrot.slane %v1847, %v2657
      %v2659 = vlaneseq
      %v2660 = vshrl.u32 %v2659, 7
      %v2661 = vsub.s32 1, %v2660
      %v2662 = vrot.slane %v1847, %v2661
      %v2663 = vlaneseq
      %v2664 = vshrl.u32 %v2663, 7
      %v2665 = vsub.s32 2, %v2664
      %v2666 = vrot.slane %v1847, %v2665
      %v2667 = vlaneseq
      %v2668 = vshrl.u32 %v2667, 7
      %v2669 = vsub.s32 3, %v2668
      %v2670 = vrot.slane %v1847, %v2669
      %v2671 = vlaneseq
      %v2672 = vshrl.u32 %v2671, 7
      %v2673 = vsub.s32 4, %v2672
      %v2674 = vrot.slane %v1847, %v2673
      %v2675 = vlaneseq
      %v2676 = vshrl.u32 %v2675, 7
      %v2677 = vsub.s32 5, %v2676
      %v2678 = vrot.slane %v1847, %v2677
      %v2679 = vlaneseq
      %v2680 = vshrl.u32 %v2679, 7
      %v2681 = vsub.s32 6, %v2680
      %v2682 = vrot.slane %v1847, %v2681
      %v2683 = vlaneseq
      %v2684 = vshrl.u32 %v2683, 7
      %v2685 = vsub.s32 7, %v2684
      %v2686 = vrot.slane %v1847, %v2685
      %v2687 = vlaneseq
      %v2688 = vshrl.u32 %v2687, 7
      %v2689 = vsub.s32 0, %v2688
      %v2690 = vrot.slane %v1848, %v2689
      %v2691 = vlaneseq
      %v2692 = vshrl.u32 %v2691, 7
      %v2693 = vsub.s32 1, %v2692
      %v2694 = vrot.slane %v1848, %v2693
      %v2695 = vlaneseq
      %v2696 = vshrl.u32 %v2695, 7
      %v2697 = vsub.s32 2, %v2696
      %v2698 = vrot.slane %v1848, %v2697
      %v2699 = vlaneseq
      %v2700 = vshrl.u32 %v2699, 7
      %v2701 = vsub.s32 3, %v2700
      %v2702 = vrot.slane %v1848, %v2701
      %v2703 = vlaneseq
      %v2704 = vshrl.u32 %v2703, 7
      %v2705 = vsub.s32 4, %v2704
      %v2706 = vrot.slane %v1848, %v2705
      %v2707 = vlaneseq
      %v2708 = vshrl.u32 %v2707, 7
      %v2709 = vsub.s32 5, %v2708
      %v2710 = vrot.slane %v1848, %v2709
      %v2711 = vlaneseq
      %v2712 = vshrl.u32 %v2711, 7
      %v2713 = vsub.s32 6, %v2712
      %v2714 = vrot.slane %v1848, %v2713
      %v2715 = vlaneseq
      %v2716 = vshrl.u32 %v2715, 7
      %v2717 = vsub.s32 7, %v2716
      %v2718 = vrot.slane %v1848, %v2717
      %v2719 = vlaneseq
      %v2720 = vshrl.u32 %v2719, 7
      %v2721 = vsub.s32 0, %v2720
      %v2722 = vrot.slane %v1849, %v2721
      %v2723 = vlaneseq
      %v2724 = vshrl.u32 %v2723, 7
      %v2725 = vsub.s32 1, %v2724
      %v2726 = vrot.slane %v1849, %v2725
      %v2727 = vlaneseq
      %v2728 = vshrl.u32 %v2727, 7
      %v2729 = vsub.s32 2, %v2728
      %v2730 = vrot.slane %v1849, %v2729
      %v2731 = vlaneseq
      %v2732 = vshrl.u32 %v2731, 7
      %v2733 = vsub.s32 3, %v2732
      %v2734 = vrot.slane %v1849, %v2733
      %v2735 = vlaneseq
      %v2736 = vshrl.u32 %v2735, 7
      %v2737 = vsub.s32 4, %v2736
      %v2738 = vrot.slane %v1849, %v2737
      %v2739 = vlaneseq
      %v2740 = vshrl.u32 %v2739, 7
      %v2741 = vsub.s32 5, %v2740
      %v2742 = vrot.slane %v1849, %v2741
      %v2743 = vlaneseq
      %v2744 = vshrl.u32 %v2743, 7
      %v2745 = vsub.s32 6, %v2744
      %v2746 = vrot.slane %v1849, %v2745
      %v2747 = vlaneseq
      %v2748 = vshrl.u32 %v2747, 7
      %v2749 = vsub.s32 7, %v2748
      %v2750 = vrot.slane %v1849, %v2749
      %v2751 = vlaneseq
      %v2752 = vshrl.u32 %v2751, 7
      %v2753 = vsub.s32 0, %v2752
      %v2754 = vrot.slane %v1850, %v2753
      %v2755 = vlaneseq
      %v2756 = vshrl.u32 %v2755, 7
      %v2757 = vsub.s32 1, %v2756
      %v2758 = vrot.slane %v1850, %v2757
      %v2759 = vlaneseq
      %v2760 = vshrl.u32 %v2759, 7
      %v2761 = vsub.s32 2, %v2760
      %v2762 = vrot.slane %v1850, %v2761
      %v2763 = vlaneseq
      %v2764 = vshrl.u32 %v2763, 7
      %v2765 = vsub.s32 3, %v2764
      %v2766 = vrot.slane %v1850, %v2765
      %v2767 = vlaneseq
      %v2768 = vshrl.u32 %v2767, 7
      %v2769 = vsub.s32 4, %v2768
      %v2770 = vrot.slane %v1850, %v2769
      %v2771 = vlaneseq
      %v2772 = vshrl.u32 %v2771, 7
      %v2773 = vsub.s32 5, %v2772
      %v2774 = vrot.slane %v1850, %v2773
      %v2775 = vlaneseq
      %v2776 = vshrl.u32 %v2775, 7
      %v2777 = vsub.s32 6, %v2776
      %v2778 = vrot.slane %v1850, %v2777
      %v2779 = vlaneseq
      %v2780 = vshrl.u32 %v2779, 7
      %v2781 = vsub.s32 7, %v2780
      %v2782 = vrot.slane %v1850, %v2781
      %v2783 = vlaneseq
      %v2784 = vshrl.u32 %v2783, 7
      %v2785 = vsub.s32 0, %v2784
      %v2786 = vrot.slane %v1851, %v2785
      %v2787 = vlaneseq
      %v2788 = vshrl.u32 %v2787, 7
      %v2789 = vsub.s32 1, %v2788
      %v2790 = vrot.slane %v1851, %v2789
      %v2791 = vlaneseq
      %v2792 = vshrl.u32 %v2791, 7
      %v2793 = vsub.s32 2, %v2792
      %v2794 = vrot.slane %v1851, %v2793
      %v2795 = vlaneseq
      %v2796 = vshrl.u32 %v2795, 7
      %v2797 = vsub.s32 3, %v2796
      %v2798 = vrot.slane %v1851, %v2797
      %v2799 = vlaneseq
      %v2800 = vshrl.u32 %v2799, 7
      %v2801 = vsub.s32 4, %v2800
      %v2802 = vrot.slane %v1851, %v2801
      %v2803 = vlaneseq
      %v2804 = vshrl.u32 %v2803, 7
      %v2805 = vsub.s32 5, %v2804
      %v2806 = vrot.slane %v1851, %v2805
      %v2807 = vlaneseq
      %v2808 = vshrl.u32 %v2807, 7
      %v2809 = vsub.s32 6, %v2808
      %v2810 = vrot.slane %v1851, %v2809
      %v2811 = vlaneseq
      %v2812 = vshrl.u32 %v2811, 7
      %v2813 = vsub.s32 7, %v2812
      %v2814 = vrot.slane %v1851, %v2813
      %v2815 = vlaneseq
      %v2816 = vshrl.u32 %v2815, 7
      %v2817 = vsub.s32 0, %v2816
      %v2818 = vrot.slane %v1852, %v2817
      %v2819 = vlaneseq
      %v2820 = vshrl.u32 %v2819, 7
      %v2821 = vsub.s32 1, %v2820
      %v2822 = vrot.slane %v1852, %v2821
      %v2823 = vlaneseq
      %v2824 = vshrl.u32 %v2823, 7
      %v2825 = vsub.s32 2, %v2824
      %v2826 = vrot.slane %v1852, %v2825
      %v2827 = vlaneseq
      %v2828 = vshrl.u32 %v2827, 7
      %v2829 = vsub.s32 3, %v2828
      %v2830 = vrot.slane %v1852, %v2829
      %v2831 = vlaneseq
      %v2832 = vshrl.u32 %v2831, 7
      %v2833 = vsub.s32 4, %v2832
      %v2834 = vrot.slane %v1852, %v2833
      %v2835 = vlaneseq
      %v2836 = vshrl.u32 %v2835, 7
      %v2837 = vsub.s32 5, %v2836
      %v2838 = vrot.slane %v1852, %v2837
      %v2839 = vlaneseq
      %v2840 = vshrl.u32 %v2839, 7
      %v2841 = vsub.s32 6, %v2840
      %v2842 = vrot.slane %v1852, %v2841
      %v2843 = vlaneseq
      %v2844 = vshrl.u32 %v2843, 7
      %v2845 = vsub.s32 7, %v2844
      %v2846 = vrot.slane %v1852, %v2845
      %v2847 = vlaneseq
      %v2848 = vshrl.u32 %v2847, 7
      %v2849 = vsub.s32 0, %v2848
      %v2850 = vrot.slane %v1853, %v2849
      %v2851 = vlaneseq
      %v2852 = vshrl.u32 %v2851, 7
      %v2853 = vsub.s32 1, %v2852
      %v2854 = vrot.slane %v1853, %v2853
      %v2855 = vlaneseq
      %v2856 = vshrl.u32 %v2855, 7
      %v2857 = vsub.s32 2, %v2856
      %v2858 = vrot.slane %v1853, %v2857
      %v2859 = vlaneseq
      %v2860 = vshrl.u32 %v2859, 7
      %v2861 = vsub.s32 3, %v2860
      %v2862 = vrot.slane %v1853, %v2861
      %v2863 = vlaneseq
      %v2864 = vshrl.u32 %v2863, 7
      %v2865 = vsub.s32 4, %v2864
      %v2866 = vrot.slane %v1853, %v2865
      %v2867 = vlaneseq
      %v2868 = vshrl.u32 %v2867, 7
      %v2869 = vsub.s32 5, %v2868
      %v2870 = vrot.slane %v1853, %v2869
      %v2871 = vlaneseq
      %v2872 = vshrl.u32 %v2871, 7
      %v2873 = vsub.s32 6, %v2872
      %v2874 = vrot.slane %v1853, %v2873
      %v2875 = vlaneseq
      %v2876 = vshrl.u32 %v2875, 7
      %v2877 = vsub.s32 7, %v2876
      %v2878 = vrot.slane %v1853, %v2877
      %v2879 = vlaneseq
      %v2880 = vshrl.u32 %v2879, 7
      %v2881 = vsub.s32 0, %v2880
      %v2882 = vrot.slane %v1854, %v2881
      %v2883 = vlaneseq
      %v2884 = vshrl.u32 %v2883, 7
      %v2885 = vsub.s32 1, %v2884
      %v2886 = vrot.slane %v1854, %v2885
      %v2887 = vlaneseq
      %v2888 = vshrl.u32 %v2887, 7
      %v2889 = vsub.s32 2, %v2888
      %v2890 = vrot.slane %v1854, %v2889
      %v2891 = vlaneseq
      %v2892 = vshrl.u32 %v2891, 7
      %v2893 = vsub.s32 3, %v2892
      %v2894 = vrot.slane %v1854, %v2893
      %v2895 = vlaneseq
      %v2896 = vshrl.u32 %v2895, 7
      %v2897 = vsub.s32 4, %v2896
      %v2898 = vrot.slane %v1854, %v2897
      %v2899 = vlaneseq
      %v2900 = vshrl.u32 %v2899, 7
      %v2901 = vsub.s32 5, %v2900
      %v2902 = vrot.slane %v1854, %v2901
      %v2903 = vlaneseq
      %v2904 = vshrl.u32 %v2903, 7
      %v2905 = vsub.s32 6, %v2904
      %v2906 = vrot.slane %v1854, %v2905
      %v2907 = vlaneseq
      %v2908 = vshrl.u32 %v2907, 7
      %v2909 = vsub.s32 7, %v2908
      %v2910 = vrot.slane %v1854, %v2909
      %v2911 = vcombine.low %v1890, %v1894
      %v2912 = vcombine.low %v1898, %v1902
      %v2913 = vcombine.low %v1906, %v1910
      %v2914 = vcombine.low %v1914, %v1918
      %v2916 = vunpack.c.l.s4 1966171168
      %v2917 = vunpack.c.0.s8 %v2916
      %v2918 = vlaneseq
      %v2919 = vshrl.u32 %v2918, 7
      %v2920 = vsub.s32 %v2917, %v2919
      %v2921 = vrot.slane %v2911, %v2920
      %v2923 = vunpack.c.l.s4 1966171168
      %v2924 = vunpack.c.0.s8 %v2923
      %v2925 = vlaneseq
      %v2926 = vshrl.u32 %v2925, 7
      %v2927 = vsub.s32 %v2924, %v2926
      %v2928 = vrot.slane %v2912, %v2927
      %v2930 = vunpack.c.l.s4 1966171168
      %v2931 = vunpack.c.0.s8 %v2930
      %v2932 = vlaneseq
      %v2933 = vshrl.u32 %v2932, 7
      %v2934 = vsub.s32 %v2931, %v2933
      %v2935 = vrot.slane %v2913, %v2934
      %v2937 = vunpack.c.l.s4 1966171168
      %v2938 = vunpack.c.0.s8 %v2937
      %v2939 = vlaneseq
      %v2940 = vshrl.u32 %v2939, 7
      %v2941 = vsub.s32 %v2938, %v2940
      %v2942 = vrot.slane %v2914, %v2941
      %v2943 = vcombine.low %v2921, %v2928
      %v2944 = vcombine.low %v2935, %v2942
      %v2946 = vunpack.c.l.s4 1966171168
      %v2947 = vunpack.c.0.s8 %v2946
      %v2948 = vlaneseq
      %v2949 = vshrl.u32 %v2948, 7
      %v2950 = vsub.s32 %v2947, %v2949
      %v2951 = vrot.slane %v2943, %v2950
      %v2953 = vunpack.c.l.s4 1966171168
      %v2954 = vunpack.c.0.s8 %v2953
      %v2955 = vlaneseq
      %v2956 = vshrl.u32 %v2955, 7
      %v2957 = vsub.s32 %v2954, %v2956
      %v2958 = vrot.slane %v2944, %v2957
      %v2959 = vcombine.low %v2951, %v2958
      %v2960 = vcombine.low %v1922, %v1926
      %v2961 = vcombine.low %v1930, %v1934
      %v2962 = vcombine.low %v1938, %v1942
      %v2963 = vcombine.low %v1946, %v1950
      %v2965 = vunpack.c.l.s4 1966171168
      %v2966 = vunpack.c.0.s8 %v2965
      %v2967 = vlaneseq
      %v2968 = vshrl.u32 %v2967, 7
      %v2969 = vsub.s32 %v2966, %v2968
      %v2970 = vrot.slane %v2960, %v2969
      %v2972 = vunpack.c.l.s4 1966171168
      %v2973 = vunpack.c.0.s8 %v2972
      %v2974 = vlaneseq
      %v2975 = vshrl.u32 %v2974, 7
      %v2976 = vsub.s32 %v2973, %v2975
      %v2977 = vrot.slane %v2961, %v2976
      %v2979 = vunpack.c.l.s4 1966171168
      %v2980 = vunpack.c.0.s8 %v2979
      %v2981 = vlaneseq
      %v2982 = vshrl.u32 %v2981, 7
      %v2983 = vsub.s32 %v2980, %v2982
      %v2984 = vrot.slane %v2962, %v2983
      %v2986 = vunpack.c.l.s4 1966171168
      %v2987 = vunpack.c.0.s8 %v2986
      %v2988 = vlaneseq
      %v2989 = vshrl.u32 %v2988, 7
      %v2990 = vsub.s32 %v2987, %v2989
      %v2991 = vrot.slane %v2963, %v2990
      %v2992 = vcombine.low %v2970, %v2977
      %v2993 = vcombine.low %v2984, %v2991
      %v2995 = vunpack.c.l.s4 1966171168
      %v2996 = vunpack.c.0.s8 %v2995
      %v2997 = vlaneseq
      %v2998 = vshrl.u32 %v2997, 7
      %v2999 = vsub.s32 %v2996, %v2998
      %v3000 = vrot.slane %v2992, %v2999
      %v3002 = vunpack.c.l.s4 1966171168
      %v3003 = vunpack.c.0.s8 %v3002
      %v3004 = vlaneseq
      %v3005 = vshrl.u32 %v3004, 7
      %v3006 = vsub.s32 %v3003, %v3005
      %v3007 = vrot.slane %v2993, %v3006
      %v3008 = vcombine.low %v3000, %v3007
      %v3009 = vcombine.low %v1954, %v1958
      %v3010 = vcombine.low %v1962, %v1966
      %v3011 = vcombine.low %v1970, %v1974
      %v3012 = vcombine.low %v1978, %v1982
      %v3014 = vunpack.c.l.s4 1966171168
      %v3015 = vunpack.c.0.s8 %v3014
      %v3016 = vlaneseq
      %v3017 = vshrl.u32 %v3016, 7
      %v3018 = vsub.s32 %v3015, %v3017
      %v3019 = vrot.slane %v3009, %v3018
      %v3021 = vunpack.c.l.s4 1966171168
      %v3022 = vunpack.c.0.s8 %v3021
      %v3023 = vlaneseq
      %v3024 = vshrl.u32 %v3023, 7
      %v3025 = vsub.s32 %v3022, %v3024
      %v3026 = vrot.slane %v3010, %v3025
      %v3028 = vunpack.c.l.s4 1966171168
      %v3029 = vunpack.c.0.s8 %v3028
      %v3030 = vlaneseq
      %v3031 = vshrl.u32 %v3030, 7
      %v3032 = vsub.s32 %v3029, %v3031
      %v3033 = vrot.slane %v3011, %v3032
      %v3035 = vunpack.c.l.s4 1966171168
      %v3036 = vunpack.c.0.s8 %v3035
      %v3037 = vlaneseq
      %v3038 = vshrl.u32 %v3037, 7
      %v3039 = vsub.s32 %v3036, %v3038
      %v3040 = vrot.slane %v3012, %v3039
      %v3041 = vcombine.low %v3019, %v3026
      %v3042 = vcombine.low %v3033, %v3040
      %v3044 = vunpack.c.l.s4 1966171168
      %v3045 = vunpack.c.0.s8 %v3044
      %v3046 = vlaneseq
      %v3047 = vshrl.u32 %v3046, 7
      %v3048 = vsub.s32 %v3045, %v3047
      %v3049 = vrot.slane %v3041, %v3048
      %v3051 = vunpack.c.l.s4 1966171168
      %v3052 = vunpack.c.0.s8 %v3051
      %v3053 = vlaneseq
      %v3054 = vshrl.u32 %v3053, 7
      %v3055 = vsub.s32 %v3052, %v3054
      %v3056 = vrot.slane %v3042, %v3055
      %v3057 = vcombine.low %v3049, %v3056
      %v3058 = vcombine.low %v1986, %v1990
      %v3059 = vcombine.low %v1994, %v1998
      %v3060 = vcombine.low %v2002, %v2006
      %v3061 = vcombine.low %v2010, %v2014
      %v3063 = vunpack.c.l.s4 1966171168
      %v3064 = vunpack.c.0.s8 %v3063
      %v3065 = vlaneseq
      %v3066 = vshrl.u32 %v3065, 7
      %v3067 = vsub.s32 %v3064, %v3066
      %v3068 = vrot.slane %v3058, %v3067
      %v3070 = vunpack.c.l.s4 1966171168
      %v3071 = vunpack.c.0.s8 %v3070
      %v3072 = vlaneseq
      %v3073 = vshrl.u32 %v3072, 7
      %v3074 = vsub.s32 %v3071, %v3073
      %v3075 = vrot.slane %v3059, %v3074
      %v3077 = vunpack.c.l.s4 1966171168
      %v3078 = vunpack.c.0.s8 %v3077
      %v3079 = vlaneseq
      %v3080 = vshrl.u32 %v3079, 7
      %v3081 = vsub.s32 %v3078, %v3080
      %v3082 = vrot.slane %v3060, %v3081
      %v3084 = vunpack.c.l.s4 1966171168
      %v3085 = vunpack.c.0.s8 %v3084
      %v3086 = vlaneseq
      %v3087 = vshrl.u32 %v3086, 7
      %v3088 = vsub.s32 %v3085, %v3087
      %v3089 = vrot.slane %v3061, %v3088
      %v3090 = vcombine.low %v3068, %v3075
      %v3091 = vcombine.low %v3082, %v3089
      %v3093 = vunpack.c.l.s4 1966171168
      %v3094 = vunpack.c.0.s8 %v3093
      %v3095 = vlaneseq
      %v3096 = vshrl.u32 %v3095, 7
      %v3097 = vsub.s32 %v3094, %v3096
      %v3098 = vrot.slane %v3090, %v3097
      %v3100 = vunpack.c.l.s4 1966171168
      %v3101 = vunpack.c.0.s8 %v3100
      %v3102 = vlaneseq
      %v3103 = vshrl.u32 %v3102, 7
      %v3104 = vsub.s32 %v3101, %v3103
      %v3105 = vrot.slane %v3091, %v3104
      %v3106 = vcombine.low %v3098, %v3105
      %v3107 = vcombine.low %v2018, %v2022
      %v3108 = vcombine.low %v2026, %v2030
      %v3109 = vcombine.low %v2034, %v2038
      %v3110 = vcombine.low %v2042, %v2046
      %v3112 = vunpack.c.l.s4 1966171168
      %v3113 = vunpack.c.0.s8 %v3112
      %v3114 = vlaneseq
      %v3115 = vshrl.u32 %v3114, 7
      %v3116 = vsub.s32 %v3113, %v3115
      %v3117 = vrot.slane %v3107, %v3116
      %v3119 = vunpack.c.l.s4 1966171168
      %v3120 = vunpack.c.0.s8 %v3119
      %v3121 = vlaneseq
      %v3122 = vshrl.u32 %v3121, 7
      %v3123 = vsub.s32 %v3120, %v3122
      %v3124 = vrot.slane %v3108, %v3123
      %v3126 = vunpack.c.l.s4 1966171168
      %v3127 = vunpack.c.0.s8 %v3126
      %v3128 = vlaneseq
      %v3129 = vshrl.u32 %v3128, 7
      %v3130 = vsub.s32 %v3127, %v3129
      %v3131 = vrot.slane %v3109, %v3130
      %v3133 = vunpack.c.l.s4 1966171168
      %v3134 = vunpack.c.0.s8 %v3133
      %v3135 = vlaneseq
      %v3136 = vshrl.u32 %v3135, 7
      %v3137 = vsub.s32 %v3134, %v3136
      %v3138 = vrot.slane %v3110, %v3137
      %v3139 = vcombine.low %v3117, %v3124
      %v3140 = vcombine.low %v3131, %v3138
      %v3142 = vunpack.c.l.s4 1966171168
      %v3143 = vunpack.c.0.s8 %v3142
      %v3144 = vlaneseq
      %v3145 = vshrl.u32 %v3144, 7
      %v3146 = vsub.s32 %v3143, %v3145
      %v3147 = vrot.slane %v3139, %v3146
      %v3149 = vunpack.c.l.s4 1966171168
      %v3150 = vunpack.c.0.s8 %v3149
      %v3151 = vlaneseq
      %v3152 = vshrl.u32 %v3151, 7
      %v3153 = vsub.s32 %v3150, %v3152
      %v3154 = vrot.slane %v3140, %v3153
      %v3155 = vcombine.low %v3147, %v3154
      %v3156 = vcombine.low %v2050, %v2054
      %v3157 = vcombine.low %v2058, %v2062
      %v3158 = vcombine.low %v2066, %v2070
      %v3159 = vcombine.low %v2074, %v2078
      %v3161 = vunpack.c.l.s4 1966171168
      %v3162 = vunpack.c.0.s8 %v3161
      %v3163 = vlaneseq
      %v3164 = vshrl.u32 %v3163, 7
      %v3165 = vsub.s32 %v3162, %v3164
      %v3166 = vrot.slane %v3156, %v3165
      %v3168 = vunpack.c.l.s4 1966171168
      %v3169 = vunpack.c.0.s8 %v3168
      %v3170 = vlaneseq
      %v3171 = vshrl.u32 %v3170, 7
      %v3172 = vsub.s32 %v3169, %v3171
      %v3173 = vrot.slane %v3157, %v3172
      %v3175 = vunpack.c.l.s4 1966171168
      %v3176 = vunpack.c.0.s8 %v3175
      %v3177 = vlaneseq
      %v3178 = vshrl.u32 %v3177, 7
      %v3179 = vsub.s32 %v3176, %v3178
      %v3180 = vrot.slane %v3158, %v3179
      %v3182 = vunpack.c.l.s4 1966171168
      %v3183 = vunpack.c.0.s8 %v3182
      %v3184 = vlaneseq
      %v3185 = vshrl.u32 %v3184, 7
      %v3186 = vsub.s32 %v3183, %v3185
      %v3187 = vrot.slane %v3159, %v3186
      %v3188 = vcombine.low %v3166, %v3173
      %v3189 = vcombine.low %v3180, %v3187
      %v3191 = vunpack.c.l.s4 1966171168
      %v3192 = vunpack.c.0.s8 %v3191
      %v3193 = vlaneseq
      %v3194 = vshrl.u32 %v3193, 7
      %v3195 = vsub.s32 %v3192, %v3194
      %v3196 = vrot.slane %v3188, %v3195
      %v3198 = vunpack.c.l.s4 1966171168
      %v3199 = vunpack.c.0.s8 %v3198
      %v3200 = vlaneseq
      %v3201 = vshrl.u32 %v3200, 7
      %v3202 = vsub.s32 %v3199, %v3201
      %v3203 = vrot.slane %v3189, %v3202
      %v3204 = vcombine.low %v3196, %v3203
      %v3205 = vcombine.low %v2082, %v2086
      %v3206 = vcombine.low %v2090, %v2094
      %v3207 = vcombine.low %v2098, %v2102
      %v3208 = vcombine.low %v2106, %v2110
      %v3210 = vunpack.c.l.s4 1966171168
      %v3211 = vunpack.c.0.s8 %v3210
      %v3212 = vlaneseq
      %v3213 = vshrl.u32 %v3212, 7
      %v3214 = vsub.s32 %v3211, %v3213
      %v3215 = vrot.slane %v3205, %v3214
      %v3217 = vunpack.c.l.s4 1966171168
      %v3218 = vunpack.c.0.s8 %v3217
      %v3219 = vlaneseq
      %v3220 = vshrl.u32 %v3219, 7
      %v3221 = vsub.s32 %v3218, %v3220
      %v3222 = vrot.slane %v3206, %v3221
      %v3224 = vunpack.c.l.s4 1966171168
      %v3225 = vunpack.c.0.s8 %v3224
      %v3226 = vlaneseq
      %v3227 = vshrl.u32 %v3226, 7
      %v3228 = vsub.s32 %v3225, %v3227
      %v3229 = vrot.slane %v3207, %v3228
      %v3231 = vunpack.c.l.s4 1966171168
      %v3232 = vunpack.c.0.s8 %v3231
      %v3233 = vlaneseq
      %v3234 = vshrl.u32 %v3233, 7
      %v3235 = vsub.s32 %v3232, %v3234
      %v3236 = vrot.slane %v3208, %v3235
      %v3237 = vcombine.low %v3215, %v3222
      %v3238 = vcombine.low %v3229, %v3236
      %v3240 = vunpack.c.l.s4 1966171168
      %v3241 = vunpack.c.0.s8 %v3240
      %v3242 = vlaneseq
      %v3243 = vshrl.u32 %v3242, 7
      %v3244 = vsub.s32 %v3241, %v3243
      %v3245 = vrot.slane %v3237, %v3244
      %v3247 = vunpack.c.l.s4 1966171168
      %v3248 = vunpack.c.0.s8 %v3247
      %v3249 = vlaneseq
      %v3250 = vshrl.u32 %v3249, 7
      %v3251 = vsub.s32 %v3248, %v3250
      %v3252 = vrot.slane %v3238, %v3251
      %v3253 = vcombine.low %v3245, %v3252
      %v3254 = vcombine.low %v2114, %v2118
      %v3255 = vcombine.low %v2122, %v2126
      %v3256 = vcombine.low %v2130, %v2134
      %v3257 = vcombine.low %v2138, %v2142
      %v3259 = vunpack.c.l.s4 1966171168
      %v3260 = vunpack.c.0.s8 %v3259
      %v3261 = vlaneseq
      %v3262 = vshrl.u32 %v3261, 7
      %v3263 = vsub.s32 %v3260, %v3262
      %v3264 = vrot.slane %v3254, %v3263
      %v3266 = vunpack.c.l.s4 1966171168
      %v3267 = vunpack.c.0.s8 %v3266
      %v3268 = vlaneseq
      %v3269 = vshrl.u32 %v3268, 7
      %v3270 = vsub.s32 %v3267, %v3269
      %v3271 = vrot.slane %v3255, %v3270
      %v3273 = vunpack.c.l.s4 1966171168
      %v3274 = vunpack.c.0.s8 %v3273
      %v3275 = vlaneseq
      %v3276 = vshrl.u32 %v3275, 7
      %v3277 = vsub.s32 %v3274, %v3276
      %v3278 = vrot.slane %v3256, %v3277
      %v3280 = vunpack.c.l.s4 1966171168
      %v3281 = vunpack.c.0.s8 %v3280
      %v3282 = vlaneseq
      %v3283 = vshrl.u32 %v3282, 7
      %v3284 = vsub.s32 %v3281, %v3283
      %v3285 = vrot.slane %v3257, %v3284
      %v3286 = vcombine.low %v3264, %v3271
      %v3287 = vcombine.low %v3278, %v3285
      %v3289 = vunpack.c.l.s4 1966171168
      %v3290 = vunpack.c.0.s8 %v3289
      %v3291 = vlaneseq
      %v3292 = vshrl.u32 %v3291, 7
      %v3293 = vsub.s32 %v3290, %v3292
      %v3294 = vrot.slane %v3286, %v3293
      %v3296 = vunpack.c.l.s4 1966171168
      %v3297 = vunpack.c.0.s8 %v3296
      %v3298 = vlaneseq
      %v3299 = vshrl.u32 %v3298, 7
      %v3300 = vsub.s32 %v3297, %v3299
      %v3301 = vrot.slane %v3287, %v3300
      %v3302 = vcombine.low %v3294, %v3301
      %v3303 = vcombine.low %v2146, %v2150
      %v3304 = vcombine.low %v2154, %v2158
      %v3305 = vcombine.low %v2162, %v2166
      %v3306 = vcombine.low %v2170, %v2174
      %v3308 = vunpack.c.l.s4 1966171168
      %v3309 = vunpack.c.0.s8 %v3308
      %v3310 = vlaneseq
      %v3311 = vshrl.u32 %v3310, 7
      %v3312 = vsub.s32 %v3309, %v3311
      %v3313 = vrot.slane %v3303, %v3312
      %v3315 = vunpack.c.l.s4 1966171168
      %v3316 = vunpack.c.0.s8 %v3315
      %v3317 = vlaneseq
      %v3318 = vshrl.u32 %v3317, 7
      %v3319 = vsub.s32 %v3316, %v3318
      %v3320 = vrot.slane %v3304, %v3319
      %v3322 = vunpack.c.l.s4 1966171168
      %v3323 = vunpack.c.0.s8 %v3322
      %v3324 = vlaneseq
      %v3325 = vshrl.u32 %v3324, 7
      %v3326 = vsub.s32 %v3323, %v3325
      %v3327 = vrot.slane %v3305, %v3326
      %v3329 = vunpack.c.l.s4 1966171168
      %v3330 = vunpack.c.0.s8 %v3329
      %v3331 = vlaneseq
      %v3332 = vshrl.u32 %v3331, 7
      %v3333 = vsub.s32 %v3330, %v3332
      %v3334 = vrot.slane %v3306, %v3333
      %v3335 = vcombine.low %v3313, %v3320
      %v3336 = vcombine.low %v3327, %v3334
      %v3338 = vunpack.c.l.s4 1966171168
      %v3339 = vunpack.c.0.s8 %v3338
      %v3340 = vlaneseq
      %v3341 = vshrl.u32 %v3340, 7
      %v3342 = vsub.s32 %v3339, %v3341
      %v3343 = vrot.slane %v3335, %v3342
      %v3345 = vunpack.c.l.s4 1966171168
      %v3346 = vunpack.c.0.s8 %v3345
      %v3347 = vlaneseq
      %v3348 = vshrl.u32 %v3347, 7
      %v3349 = vsub.s32 %v3346, %v3348
      %v3350 = vrot.slane %v3336, %v3349
      %v3351 = vcombine.low %v3343, %v3350
      %v3352 = vcombine.low %v2178, %v2182
      %v3353 = vcombine.low %v2186, %v2190
      %v3354 = vcombine.low %v2194, %v2198
      %v3355 = vcombine.low %v2202, %v2206
      %v3357 = vunpack.c.l.s4 1966171168
      %v3358 = vunpack.c.0.s8 %v3357
      %v3359 = vlaneseq
      %v3360 = vshrl.u32 %v3359, 7
      %v3361 = vsub.s32 %v3358, %v3360
      %v3362 = vrot.slane %v3352, %v3361
      %v3364 = vunpack.c.l.s4 1966171168
      %v3365 = vunpack.c.0.s8 %v3364
      %v3366 = vlaneseq
      %v3367 = vshrl.u32 %v3366, 7
      %v3368 = vsub.s32 %v3365, %v3367
      %v3369 = vrot.slane %v3353, %v3368
      %v3371 = vunpack.c.l.s4 1966171168
      %v3372 = vunpack.c.0.s8 %v3371
      %v3373 = vlaneseq
      %v3374 = vshrl.u32 %v3373, 7
      %v3375 = vsub.s32 %v3372, %v3374
      %v3376 = vrot.slane %v3354, %v3375
      %v3378 = vunpack.c.l.s4 1966171168
      %v3379 = vunpack.c.0.s8 %v3378
      %v3380 = vlaneseq
      %v3381 = vshrl.u32 %v3380, 7
      %v3382 = vsub.s32 %v3379, %v3381
      %v3383 = vrot.slane %v3355, %v3382
      %v3384 = vcombine.low %v3362, %v3369
      %v3385 = vcombine.low %v3376, %v3383
      %v3387 = vunpack.c.l.s4 1966171168
      %v3388 = vunpack.c.0.s8 %v3387
      %v3389 = vlaneseq
      %v3390 = vshrl.u32 %v3389, 7
      %v3391 = vsub.s32 %v3388, %v3390
      %v3392 = vrot.slane %v3384, %v3391
      %v3394 = vunpack.c.l.s4 1966171168
      %v3395 = vunpack.c.0.s8 %v3394
      %v3396 = vlaneseq
      %v3397 = vshrl.u32 %v3396, 7
      %v3398 = vsub.s32 %v3395, %v3397
      %v3399 = vrot.slane %v3385, %v3398
      %v3400 = vcombine.low %v3392, %v3399
      %v3401 = vcombine.low %v2210, %v2214
      %v3402 = vcombine.low %v2218, %v2222
      %v3403 = vcombine.low %v2226, %v2230
      %v3404 = vcombine.low %v2234, %v2238
      %v3406 = vunpack.c.l.s4 1966171168
      %v3407 = vunpack.c.0.s8 %v3406
      %v3408 = vlaneseq
      %v3409 = vshrl.u32 %v3408, 7
      %v3410 = vsub.s32 %v3407, %v3409
      %v3411 = vrot.slane %v3401, %v3410
      %v3413 = vunpack.c.l.s4 1966171168
      %v3414 = vunpack.c.0.s8 %v3413
      %v3415 = vlaneseq
      %v3416 = vshrl.u32 %v3415, 7
      %v3417 = vsub.s32 %v3414, %v3416
      %v3418 = vrot.slane %v3402, %v3417
      %v3420 = vunpack.c.l.s4 1966171168
      %v3421 = vunpack.c.0.s8 %v3420
      %v3422 = vlaneseq
      %v3423 = vshrl.u32 %v3422, 7
      %v3424 = vsub.s32 %v3421, %v3423
      %v3425 = vrot.slane %v3403, %v3424
      %v3427 = vunpack.c.l.s4 1966171168
      %v3428 = vunpack.c.0.s8 %v3427
      %v3429 = vlaneseq
      %v3430 = vshrl.u32 %v3429, 7
      %v3431 = vsub.s32 %v3428, %v3430
      %v3432 = vrot.slane %v3404, %v3431
      %v3433 = vcombine.low %v3411, %v3418
      %v3434 = vcombine.low %v3425, %v3432
      %v3436 = vunpack.c.l.s4 1966171168
      %v3437 = vunpack.c.0.s8 %v3436
      %v3438 = vlaneseq
      %v3439 = vshrl.u32 %v3438, 7
      %v3440 = vsub.s32 %v3437, %v3439
      %v3441 = vrot.slane %v3433, %v3440
      %v3443 = vunpack.c.l.s4 1966171168
      %v3444 = vunpack.c.0.s8 %v3443
      %v3445 = vlaneseq
      %v3446 = vshrl.u32 %v3445, 7
      %v3447 = vsub.s32 %v3444, %v3446
      %v3448 = vrot.slane %v3434, %v3447
      %v3449 = vcombine.low %v3441, %v3448
      %v3450 = vcombine.low %v2242, %v2246
      %v3451 = vcombine.low %v2250, %v2254
      %v3452 = vcombine.low %v2258, %v2262
      %v3453 = vcombine.low %v2266, %v2270
      %v3455 = vunpack.c.l.s4 1966171168
      %v3456 = vunpack.c.0.s8 %v3455
      %v3457 = vlaneseq
      %v3458 = vshrl.u32 %v3457, 7
      %v3459 = vsub.s32 %v3456, %v3458
      %v3460 = vrot.slane %v3450, %v3459
      %v3462 = vunpack.c.l.s4 1966171168
      %v3463 = vunpack.c.0.s8 %v3462
      %v3464 = vlaneseq
      %v3465 = vshrl.u32 %v3464, 7
      %v3466 = vsub.s32 %v3463, %v3465
      %v3467 = vrot.slane %v3451, %v3466
      %v3469 = vunpack.c.l.s4 1966171168
      %v3470 = vunpack.c.0.s8 %v3469
      %v3471 = vlaneseq
      %v3472 = vshrl.u32 %v3471, 7
      %v3473 = vsub.s32 %v3470, %v3472
      %v3474 = vrot.slane %v3452, %v3473
      %v3476 = vunpack.c.l.s4 1966171168
      %v3477 = vunpack.c.0.s8 %v3476
      %v3478 = vlaneseq
      %v3479 = vshrl.u32 %v3478, 7
      %v3480 = vsub.s32 %v3477, %v3479
      %v3481 = vrot.slane %v3453, %v3480
      %v3482 = vcombine.low %v3460, %v3467
      %v3483 = vcombine.low %v3474, %v3481
      %v3485 = vunpack.c.l.s4 1966171168
      %v3486 = vunpack.c.0.s8 %v3485
      %v3487 = vlaneseq
      %v3488 = vshrl.u32 %v3487, 7
      %v3489 = vsub.s32 %v3486, %v3488
      %v3490 = vrot.slane %v3482, %v3489
      %v3492 = vunpack.c.l.s4 1966171168
      %v3493 = vunpack.c.0.s8 %v3492
      %v3494 = vlaneseq
      %v3495 = vshrl.u32 %v3494, 7
      %v3496 = vsub.s32 %v3493, %v3495
      %v3497 = vrot.slane %v3483, %v3496
      %v3498 = vcombine.low %v3490, %v3497
      %v3499 = vcombine.low %v2274, %v2278
      %v3500 = vcombine.low %v2282, %v2286
      %v3501 = vcombine.low %v2290, %v2294
      %v3502 = vcombine.low %v2298, %v2302
      %v3504 = vunpack.c.l.s4 1966171168
      %v3505 = vunpack.c.0.s8 %v3504
      %v3506 = vlaneseq
      %v3507 = vshrl.u32 %v3506, 7
      %v3508 = vsub.s32 %v3505, %v3507
      %v3509 = vrot.slane %v3499, %v3508
      %v3511 = vunpack.c.l.s4 1966171168
      %v3512 = vunpack.c.0.s8 %v3511
      %v3513 = vlaneseq
      %v3514 = vshrl.u32 %v3513, 7
      %v3515 = vsub.s32 %v3512, %v3514
      %v3516 = vrot.slane %v3500, %v3515
      %v3518 = vunpack.c.l.s4 1966171168
      %v3519 = vunpack.c.0.s8 %v3518
      %v3520 = vlaneseq
      %v3521 = vshrl.u32 %v3520, 7
      %v3522 = vsub.s32 %v3519, %v3521
      %v3523 = vrot.slane %v3501, %v3522
      %v3525 = vunpack.c.l.s4 1966171168
      %v3526 = vunpack.c.0.s8 %v3525
      %v3527 = vlaneseq
      %v3528 = vshrl.u32 %v3527, 7
      %v3529 = vsub.s32 %v3526, %v3528
      %v3530 = vrot.slane %v3502, %v3529
      %v3531 = vcombine.low %v3509, %v3516
      %v3532 = vcombine.low %v3523, %v3530
      %v3534 = vunpack.c.l.s4 1966171168
      %v3535 = vunpack.c.0.s8 %v3534
      %v3536 = vlaneseq
      %v3537 = vshrl.u32 %v3536, 7
      %v3538 = vsub.s32 %v3535, %v3537
      %v3539 = vrot.slane %v3531, %v3538
      %v3541 = vunpack.c.l.s4 1966171168
      %v3542 = vunpack.c.0.s8 %v3541
      %v3543 = vlaneseq
      %v3544 = vshrl.u32 %v3543, 7
      %v3545 = vsub.s32 %v3542, %v3544
      %v3546 = vrot.slane %v3532, %v3545
      %v3547 = vcombine.low %v3539, %v3546
      %v3548 = vcombine.low %v2306, %v2310
      %v3549 = vcombine.low %v2314, %v2318
      %v3550 = vcombine.low %v2322, %v2326
      %v3551 = vcombine.low %v2330, %v2334
      %v3553 = vunpack.c.l.s4 1966171168
      %v3554 = vunpack.c.0.s8 %v3553
      %v3555 = vlaneseq
      %v3556 = vshrl.u32 %v3555, 7
      %v3557 = vsub.s32 %v3554, %v3556
      %v3558 = vrot.slane %v3548, %v3557
      %v3560 = vunpack.c.l.s4 1966171168
      %v3561 = vunpack.c.0.s8 %v3560
      %v3562 = vlaneseq
      %v3563 = vshrl.u32 %v3562, 7
      %v3564 = vsub.s32 %v3561, %v3563
      %v3565 = vrot.slane %v3549, %v3564
      %v3567 = vunpack.c.l.s4 1966171168
      %v3568 = vunpack.c.0.s8 %v3567
      %v3569 = vlaneseq
      %v3570 = vshrl.u32 %v3569, 7
      %v3571 = vsub.s32 %v3568, %v3570
      %v3572 = vrot.slane %v3550, %v3571
      %v3574 = vunpack.c.l.s4 1966171168
      %v3575 = vunpack.c.0.s8 %v3574
      %v3576 = vlaneseq
      %v3577 = vshrl.u32 %v3576, 7
      %v3578 = vsub.s32 %v3575, %v3577
      %v3579 = vrot.slane %v3551, %v3578
      %v3580 = vcombine.low %v3558, %v3565
      %v3581 = vcombine.low %v3572, %v3579
      %v3583 = vunpack.c.l.s4 1966171168
      %v3584 = vunpack.c.0.s8 %v3583
      %v3585 = vlaneseq
      %v3586 = vshrl.u32 %v3585, 7
      %v3587 = vsub.s32 %v3584, %v3586
      %v3588 = vrot.slane %v3580, %v3587
      %v3590 = vunpack.c.l.s4 1966171168
      %v3591 = vunpack.c.0.s8 %v3590
      %v3592 = vlaneseq
      %v3593 = vshrl.u32 %v3592, 7
      %v3594 = vsub.s32 %v3591, %v3593
      %v3595 = vrot.slane %v3581, %v3594
      %v3596 = vcombine.low %v3588, %v3595
      %v3597 = vcombine.low %v2338, %v2342
      %v3598 = vcombine.low %v2346, %v2350
      %v3599 = vcombine.low %v2354, %v2358
      %v3600 = vcombine.low %v2362, %v2366
      %v3602 = vunpack.c.l.s4 1966171168
      %v3603 = vunpack.c.0.s8 %v3602
      %v3604 = vlaneseq
      %v3605 = vshrl.u32 %v3604, 7
      %v3606 = vsub.s32 %v3603, %v3605
      %v3607 = vrot.slane %v3597, %v3606
      %v3609 = vunpack.c.l.s4 1966171168
      %v3610 = vunpack.c.0.s8 %v3609
      %v3611 = vlaneseq
      %v3612 = vshrl.u32 %v3611, 7
      %v3613 = vsub.s32 %v3610, %v3612
      %v3614 = vrot.slane %v3598, %v3613
      %v3616 = vunpack.c.l.s4 1966171168
      %v3617 = vunpack.c.0.s8 %v3616
      %v3618 = vlaneseq
      %v3619 = vshrl.u32 %v3618, 7
      %v3620 = vsub.s32 %v3617, %v3619
      %v3621 = vrot.slane %v3599, %v3620
      %v3623 = vunpack.c.l.s4 1966171168
      %v3624 = vunpack.c.0.s8 %v3623
      %v3625 = vlaneseq
      %v3626 = vshrl.u32 %v3625, 7
      %v3627 = vsub.s32 %v3624, %v3626
      %v3628 = vrot.slane %v3600, %v3627
      %v3629 = vcombine.low %v3607, %v3614
      %v3630 = vcombine.low %v3621, %v3628
      %v3632 = vunpack.c.l.s4 1966171168
      %v3633 = vunpack.c.0.s8 %v3632
      %v3634 = vlaneseq
      %v3635 = vshrl.u32 %v3634, 7
      %v3636 = vsub.s32 %v3633, %v3635
      %v3637 = vrot.slane %v3629, %v3636
      %v3639 = vunpack.c.l.s4 1966171168
      %v3640 = vunpack.c.0.s8 %v3639
      %v3641 = vlaneseq
      %v3642 = vshrl.u32 %v3641, 7
      %v3643 = vsub.s32 %v3640, %v3642
      %v3644 = vrot.slane %v3630, %v3643
      %v3645 = vcombine.low %v3637, %v3644
      %v3646 = vcombine.low %v2370, %v2374
      %v3647 = vcombine.low %v2378, %v2382
      %v3648 = vcombine.low %v2386, %v2390
      %v3649 = vcombine.low %v2394, %v2398
      %v3651 = vunpack.c.l.s4 1966171168
      %v3652 = vunpack.c.0.s8 %v3651
      %v3653 = vlaneseq
      %v3654 = vshrl.u32 %v3653, 7
      %v3655 = vsub.s32 %v3652, %v3654
      %v3656 = vrot.slane %v3646, %v3655
      %v3658 = vunpack.c.l.s4 1966171168
      %v3659 = vunpack.c.0.s8 %v3658
      %v3660 = vlaneseq
      %v3661 = vshrl.u32 %v3660, 7
      %v3662 = vsub.s32 %v3659, %v3661
      %v3663 = vrot.slane %v3647, %v3662
      %v3665 = vunpack.c.l.s4 1966171168
      %v3666 = vunpack.c.0.s8 %v3665
      %v3667 = vlaneseq
      %v3668 = vshrl.u32 %v3667, 7
      %v3669 = vsub.s32 %v3666, %v3668
      %v3670 = vrot.slane %v3648, %v3669
      %v3672 = vunpack.c.l.s4 1966171168
      %v3673 = vunpack.c.0.s8 %v3672
      %v3674 = vlaneseq
      %v3675 = vshrl.u32 %v3674, 7
      %v3676 = vsub.s32 %v3673, %v3675
      %v3677 = vrot.slane %v3649, %v3676
      %v3678 = vcombine.low %v3656, %v3663
      %v3679 = vcombine.low %v3670, %v3677
      %v3681 = vunpack.c.l.s4 1966171168
      %v3682 = vunpack.c.0.s8 %v3681
      %v3683 = vlaneseq
      %v3684 = vshrl.u32 %v3683, 7
      %v3685 = vsub.s32 %v3682, %v3684
      %v3686 = vrot.slane %v3678, %v3685
      %v3688 = vunpack.c.l.s4 1966171168
      %v3689 = vunpack.c.0.s8 %v3688
      %v3690 = vlaneseq
      %v3691 = vshrl.u32 %v3690, 7
      %v3692 = vsub.s32 %v3689, %v3691
      %v3693 = vrot.slane %v3679, %v3692
      %v3694 = vcombine.low %v3686, %v3693
      %v3695 = vcombine.low %v2402, %v2406
      %v3696 = vcombine.low %v2410, %v2414
      %v3697 = vcombine.low %v2418, %v2422
      %v3698 = vcombine.low %v2426, %v2430
      %v3700 = vunpack.c.l.s4 1966171168
      %v3701 = vunpack.c.0.s8 %v3700
      %v3702 = vlaneseq
      %v3703 = vshrl.u32 %v3702, 7
      %v3704 = vsub.s32 %v3701, %v3703
      %v3705 = vrot.slane %v3695, %v3704
      %v3707 = vunpack.c.l.s4 1966171168
      %v3708 = vunpack.c.0.s8 %v3707
      %v3709 = vlaneseq
      %v3710 = vshrl.u32 %v3709, 7
      %v3711 = vsub.s32 %v3708, %v3710
      %v3712 = vrot.slane %v3696, %v3711
      %v3714 = vunpack.c.l.s4 1966171168
      %v3715 = vunpack.c.0.s8 %v3714
      %v3716 = vlaneseq
      %v3717 = vshrl.u32 %v3716, 7
      %v3718 = vsub.s32 %v3715, %v3717
      %v3719 = vrot.slane %v3697, %v3718
      %v3721 = vunpack.c.l.s4 1966171168
      %v3722 = vunpack.c.0.s8 %v3721
      %v3723 = vlaneseq
      %v3724 = vshrl.u32 %v3723, 7
      %v3725 = vsub.s32 %v3722, %v3724
      %v3726 = vrot.slane %v3698, %v3725
      %v3727 = vcombine.low %v3705, %v3712
      %v3728 = vcombine.low %v3719, %v3726
      %v3730 = vunpack.c.l.s4 1966171168
      %v3731 = vunpack.c.0.s8 %v3730
      %v3732 = vlaneseq
      %v3733 = vshrl.u32 %v3732, 7
      %v3734 = vsub.s32 %v3731, %v3733
      %v3735 = vrot.slane %v3727, %v3734
      %v3737 = vunpack.c.l.s4 1966171168
      %v3738 = vunpack.c.0.s8 %v3737
      %v3739 = vlaneseq
      %v3740 = vshrl.u32 %v3739, 7
      %v3741 = vsub.s32 %v3738, %v3740
      %v3742 = vrot.slane %v3728, %v3741
      %v3743 = vcombine.low %v3735, %v3742
      %v3744 = vcombine.low %v2434, %v2438
      %v3745 = vcombine.low %v2442, %v2446
      %v3746 = vcombine.low %v2450, %v2454
      %v3747 = vcombine.low %v2458, %v2462
      %v3749 = vunpack.c.l.s4 1966171168
      %v3750 = vunpack.c.0.s8 %v3749
      %v3751 = vlaneseq
      %v3752 = vshrl.u32 %v3751, 7
      %v3753 = vsub.s32 %v3750, %v3752
      %v3754 = vrot.slane %v3744, %v3753
      %v3756 = vunpack.c.l.s4 1966171168
      %v3757 = vunpack.c.0.s8 %v3756
      %v3758 = vlaneseq
      %v3759 = vshrl.u32 %v3758, 7
      %v3760 = vsub.s32 %v3757, %v3759
      %v3761 = vrot.slane %v3745, %v3760
      %v3763 = vunpack.c.l.s4 1966171168
      %v3764 = vunpack.c.0.s8 %v3763
      %v3765 = vlaneseq
      %v3766 = vshrl.u32 %v3765, 7
      %v3767 = vsub.s32 %v3764, %v3766
      %v3768 = vrot.slane %v3746, %v3767
      %v3770 = vunpack.c.l.s4 1966171168
      %v3771 = vunpack.c.0.s8 %v3770
      %v3772 = vlaneseq
      %v3773 = vshrl.u32 %v3772, 7
      %v3774 = vsub.s32 %v3771, %v3773
      %v3775 = vrot.slane %v3747, %v3774
      %v3776 = vcombine.low %v3754, %v3761
      %v3777 = vcombine.low %v3768, %v3775
      %v3779 = vunpack.c.l.s4 1966171168
      %v3780 = vunpack.c.0.s8 %v3779
      %v3781 = vlaneseq
      %v3782 = vshrl.u32 %v3781, 7
      %v3783 = vsub.s32 %v3780, %v3782
      %v3784 = vrot.slane %v3776, %v3783
      %v3786 = vunpack.c.l.s4 1966171168
      %v3787 = vunpack.c.0.s8 %v3786
      %v3788 = vlaneseq
      %v3789 = vshrl.u32 %v3788, 7
      %v3790 = vsub.s32 %v3787, %v3789
      %v3791 = vrot.slane %v3777, %v3790
      %v3792 = vcombine.low %v3784, %v3791
      %v3793 = vcombine.low %v2466, %v2470
      %v3794 = vcombine.low %v2474, %v2478
      %v3795 = vcombine.low %v2482, %v2486
      %v3796 = vcombine.low %v2490, %v2494
      %v3798 = vunpack.c.l.s4 1966171168
      %v3799 = vunpack.c.0.s8 %v3798
      %v3800 = vlaneseq
      %v3801 = vshrl.u32 %v3800, 7
      %v3802 = vsub.s32 %v3799, %v3801
      %v3803 = vrot.slane %v3793, %v3802
      %v3805 = vunpack.c.l.s4 1966171168
      %v3806 = vunpack.c.0.s8 %v3805
      %v3807 = vlaneseq
      %v3808 = vshrl.u32 %v3807, 7
      %v3809 = vsub.s32 %v3806, %v3808
      %v3810 = vrot.slane %v3794, %v3809
      %v3812 = vunpack.c.l.s4 1966171168
      %v3813 = vunpack.c.0.s8 %v3812
      %v3814 = vlaneseq
      %v3815 = vshrl.u32 %v3814, 7
      %v3816 = vsub.s32 %v3813, %v3815
      %v3817 = vrot.slane %v3795, %v3816
      %v3819 = vunpack.c.l.s4 1966171168
      %v3820 = vunpack.c.0.s8 %v3819
      %v3821 = vlaneseq
      %v3822 = vshrl.u32 %v3821, 7
      %v3823 = vsub.s32 %v3820, %v3822
      %v3824 = vrot.slane %v3796, %v3823
      %v3825 = vcombine.low %v3803, %v3810
      %v3826 = vcombine.low %v3817, %v3824
      %v3828 = vunpack.c.l.s4 1966171168
      %v3829 = vunpack.c.0.s8 %v3828
      %v3830 = vlaneseq
      %v3831 = vshrl.u32 %v3830, 7
      %v3832 = vsub.s32 %v3829, %v3831
      %v3833 = vrot.slane %v3825, %v3832
      %v3835 = vunpack.c.l.s4 1966171168
      %v3836 = vunpack.c.0.s8 %v3835
      %v3837 = vlaneseq
      %v3838 = vshrl.u32 %v3837, 7
      %v3839 = vsub.s32 %v3836, %v3838
      %v3840 = vrot.slane %v3826, %v3839
      %v3841 = vcombine.low %v3833, %v3840
      %v3842 = vcombine.low %v2498, %v2502
      %v3843 = vcombine.low %v2506, %v2510
      %v3844 = vcombine.low %v2514, %v2518
      %v3845 = vcombine.low %v2522, %v2526
      %v3847 = vunpack.c.l.s4 1966171168
      %v3848 = vunpack.c.0.s8 %v3847
      %v3849 = vlaneseq
      %v3850 = vshrl.u32 %v3849, 7
      %v3851 = vsub.s32 %v3848, %v3850
      %v3852 = vrot.slane %v3842, %v3851
      %v3854 = vunpack.c.l.s4 1966171168
      %v3855 = vunpack.c.0.s8 %v3854
      %v3856 = vlaneseq
      %v3857 = vshrl.u32 %v3856, 7
      %v3858 = vsub.s32 %v3855, %v3857
      %v3859 = vrot.slane %v3843, %v3858
      %v3861 = vunpack.c.l.s4 1966171168
      %v3862 = vunpack.c.0.s8 %v3861
      %v3863 = vlaneseq
      %v3864 = vshrl.u32 %v3863, 7
      %v3865 = vsub.s32 %v3862, %v3864
      %v3866 = vrot.slane %v3844, %v3865
      %v3868 = vunpack.c.l.s4 1966171168
      %v3869 = vunpack.c.0.s8 %v3868
      %v3870 = vlaneseq
      %v3871 = vshrl.u32 %v3870, 7
      %v3872 = vsub.s32 %v3869, %v3871
      %v3873 = vrot.slane %v3845, %v3872
      %v3874 = vcombine.low %v3852, %v3859
      %v3875 = vcombine.low %v3866, %v3873
      %v3877 = vunpack.c.l.s4 1966171168
      %v3878 = vunpack.c.0.s8 %v3877
      %v3879 = vlaneseq
      %v3880 = vshrl.u32 %v3879, 7
      %v3881 = vsub.s32 %v3878, %v3880
      %v3882 = vrot.slane %v3874, %v3881
      %v3884 = vunpack.c.l.s4 1966171168
      %v3885 = vunpack.c.0.s8 %v3884
      %v3886 = vlaneseq
      %v3887 = vshrl.u32 %v3886, 7
      %v3888 = vsub.s32 %v3885, %v3887
      %v3889 = vrot.slane %v3875, %v3888
      %v3890 = vcombine.low %v3882, %v3889
      %v3891 = vcombine.low %v2530, %v2534
      %v3892 = vcombine.low %v2538, %v2542
      %v3893 = vcombine.low %v2546, %v2550
      %v3894 = vcombine.low %v2554, %v2558
      %v3896 = vunpack.c.l.s4 1966171168
      %v3897 = vunpack.c.0.s8 %v3896
      %v3898 = vlaneseq
      %v3899 = vshrl.u32 %v3898, 7
      %v3900 = vsub.s32 %v3897, %v3899
      %v3901 = vrot.slane %v3891, %v3900
      %v3903 = vunpack.c.l.s4 1966171168
      %v3904 = vunpack.c.0.s8 %v3903
      %v3905 = vlaneseq
      %v3906 = vshrl.u32 %v3905, 7
      %v3907 = vsub.s32 %v3904, %v3906
      %v3908 = vrot.slane %v3892, %v3907
      %v3910 = vunpack.c.l.s4 1966171168
      %v3911 = vunpack.c.0.s8 %v3910
      %v3912 = vlaneseq
      %v3913 = vshrl.u32 %v3912, 7
      %v3914 = vsub.s32 %v3911, %v3913
      %v3915 = vrot.slane %v3893, %v3914
      %v3917 = vunpack.c.l.s4 1966171168
      %v3918 = vunpack.c.0.s8 %v3917
      %v3919 = vlaneseq
      %v3920 = vshrl.u32 %v3919, 7
      %v3921 = vsub.s32 %v3918, %v3920
      %v3922 = vrot.slane %v3894, %v3921
      %v3923 = vcombine.low %v3901, %v3908
      %v3924 = vcombine.low %v3915, %v3922
      %v3926 = vunpack.c.l.s4 1966171168
      %v3927 = vunpack.c.0.s8 %v3926
      %v3928 = vlaneseq
      %v3929 = vshrl.u32 %v3928, 7
      %v3930 = vsub.s32 %v3927, %v3929
      %v3931 = vrot.slane %v3923, %v3930
      %v3933 = vunpack.c.l.s4 1966171168
      %v3934 = vunpack.c.0.s8 %v3933
      %v3935 = vlaneseq
      %v3936 = vshrl.u32 %v3935, 7
      %v3937 = vsub.s32 %v3934, %v3936
      %v3938 = vrot.slane %v3924, %v3937
      %v3939 = vcombine.low %v3931, %v3938
      %v3940 = vcombine.low %v2562, %v2566
      %v3941 = vcombine.low %v2570, %v2574
      %v3942 = vcombine.low %v2578, %v2582
      %v3943 = vcombine.low %v2586, %v2590
      %v3945 = vunpack.c.l.s4 1966171168
      %v3946 = vunpack.c.0.s8 %v3945
      %v3947 = vlaneseq
      %v3948 = vshrl.u32 %v3947, 7
      %v3949 = vsub.s32 %v3946, %v3948
      %v3950 = vrot.slane %v3940, %v3949
      %v3952 = vunpack.c.l.s4 1966171168
      %v3953 = vunpack.c.0.s8 %v3952
      %v3954 = vlaneseq
      %v3955 = vshrl.u32 %v3954, 7
      %v3956 = vsub.s32 %v3953, %v3955
      %v3957 = vrot.slane %v3941, %v3956
      %v3959 = vunpack.c.l.s4 1966171168
      %v3960 = vunpack.c.0.s8 %v3959
      %v3961 = vlaneseq
      %v3962 = vshrl.u32 %v3961, 7
      %v3963 = vsub.s32 %v3960, %v3962
      %v3964 = vrot.slane %v3942, %v3963
      %v3966 = vunpack.c.l.s4 1966171168
      %v3967 = vunpack.c.0.s8 %v3966
      %v3968 = vlaneseq
      %v3969 = vshrl.u32 %v3968, 7
      %v3970 = vsub.s32 %v3967, %v3969
      %v3971 = vrot.slane %v3943, %v3970
      %v3972 = vcombine.low %v3950, %v3957
      %v3973 = vcombine.low %v3964, %v3971
      %v3975 = vunpack.c.l.s4 1966171168
      %v3976 = vunpack.c.0.s8 %v3975
      %v3977 = vlaneseq
      %v3978 = vshrl.u32 %v3977, 7
      %v3979 = vsub.s32 %v3976, %v3978
      %v3980 = vrot.slane %v3972, %v3979
      %v3982 = vunpack.c.l.s4 1966171168
      %v3983 = vunpack.c.0.s8 %v3982
      %v3984 = vlaneseq
      %v3985 = vshrl.u32 %v3984, 7
      %v3986 = vsub.s32 %v3983, %v3985
      %v3987 = vrot.slane %v3973, %v3986
      %v3988 = vcombine.low %v3980, %v3987
      %v3989 = vcombine.low %v2594, %v2598
      %v3990 = vcombine.low %v2602, %v2606
      %v3991 = vcombine.low %v2610, %v2614
      %v3992 = vcombine.low %v2618, %v2622
      %v3994 = vunpack.c.l.s4 1966171168
      %v3995 = vunpack.c.0.s8 %v3994
      %v3996 = vlaneseq
      %v3997 = vshrl.u32 %v3996, 7
      %v3998 = vsub.s32 %v3995, %v3997
      %v3999 = vrot.slane %v3989, %v3998
      %v4001 = vunpack.c.l.s4 1966171168
      %v4002 = vunpack.c.0.s8 %v4001
      %v4003 = vlaneseq
      %v4004 = vshrl.u32 %v4003, 7
      %v4005 = vsub.s32 %v4002, %v4004
      %v4006 = vrot.slane %v3990, %v4005
      %v4008 = vunpack.c.l.s4 1966171168
      %v4009 = vunpack.c.0.s8 %v4008
      %v4010 = vlaneseq
      %v4011 = vshrl.u32 %v4010, 7
      %v4012 = vsub.s32 %v4009, %v4011
      %v4013 = vrot.slane %v3991, %v4012
      %v4015 = vunpack.c.l.s4 1966171168
      %v4016 = vunpack.c.0.s8 %v4015
      %v4017 = vlaneseq
      %v4018 = vshrl.u32 %v4017, 7
      %v4019 = vsub.s32 %v4016, %v4018
      %v4020 = vrot.slane %v3992, %v4019
      %v4021 = vcombine.low %v3999, %v4006
      %v4022 = vcombine.low %v4013, %v4020
      %v4024 = vunpack.c.l.s4 1966171168
      %v4025 = vunpack.c.0.s8 %v4024
      %v4026 = vlaneseq
      %v4027 = vshrl.u32 %v4026, 7
      %v4028 = vsub.s32 %v4025, %v4027
      %v4029 = vrot.slane %v4021, %v4028
      %v4031 = vunpack.c.l.s4 1966171168
      %v4032 = vunpack.c.0.s8 %v4031
      %v4033 = vlaneseq
      %v4034 = vshrl.u32 %v4033, 7
      %v4035 = vsub.s32 %v4032, %v4034
      %v4036 = vrot.slane %v4022, %v4035
      %v4037 = vcombine.low %v4029, %v4036
      %v4038 = vcombine.low %v2626, %v2630
      %v4039 = vcombine.low %v2634, %v2638
      %v4040 = vcombine.low %v2642, %v2646
      %v4041 = vcombine.low %v2650, %v2654
      %v4043 = vunpack.c.l.s4 1966171168
      %v4044 = vunpack.c.0.s8 %v4043
      %v4045 = vlaneseq
      %v4046 = vshrl.u32 %v4045, 7
      %v4047 = vsub.s32 %v4044, %v4046
      %v4048 = vrot.slane %v4038, %v4047
      %v4050 = vunpack.c.l.s4 1966171168
      %v4051 = vunpack.c.0.s8 %v4050
      %v4052 = vlaneseq
      %v4053 = vshrl.u32 %v4052, 7
      %v4054 = vsub.s32 %v4051, %v4053
      %v4055 = vrot.slane %v4039, %v4054
      %v4057 = vunpack.c.l.s4 1966171168
      %v4058 = vunpack.c.0.s8 %v4057
      %v4059 = vlaneseq
      %v4060 = vshrl.u32 %v4059, 7
      %v4061 = vsub.s32 %v4058, %v4060
      %v4062 = vrot.slane %v4040, %v4061
      %v4064 = vunpack.c.l.s4 1966171168
      %v4065 = vunpack.c.0.s8 %v4064
      %v4066 = vlaneseq
      %v4067 = vshrl.u32 %v4066, 7
      %v4068 = vsub.s32 %v4065, %v4067
      %v4069 = vrot.slane %v4041, %v4068
      %v4070 = vcombine.low %v4048, %v4055
      %v4071 = vcombine.low %v4062, %v4069
      %v4073 = vunpack.c.l.s4 1966171168
      %v4074 = vunpack.c.0.s8 %v4073
      %v4075 = vlaneseq
      %v4076 = vshrl.u32 %v4075, 7
      %v4077 = vsub.s32 %v4074, %v4076
      %v4078 = vrot.slane %v4070, %v4077
      %v4080 = vunpack.c.l.s4 1966171168
      %v4081 = vunpack.c.0.s8 %v4080
      %v4082 = vlaneseq
      %v4083 = vshrl.u32 %v4082, 7
      %v4084 = vsub.s32 %v4081, %v4083
      %v4085 = vrot.slane %v4071, %v4084
      %v4086 = vcombine.low %v4078, %v4085
      %v4087 = vcombine.low %v2658, %v2662
      %v4088 = vcombine.low %v2666, %v2670
      %v4089 = vcombine.low %v2674, %v2678
      %v4090 = vcombine.low %v2682, %v2686
      %v4092 = vunpack.c.l.s4 1966171168
      %v4093 = vunpack.c.0.s8 %v4092
      %v4094 = vlaneseq
      %v4095 = vshrl.u32 %v4094, 7
      %v4096 = vsub.s32 %v4093, %v4095
      %v4097 = vrot.slane %v4087, %v4096
      %v4099 = vunpack.c.l.s4 1966171168
      %v4100 = vunpack.c.0.s8 %v4099
      %v4101 = vlaneseq
      %v4102 = vshrl.u32 %v4101, 7
      %v4103 = vsub.s32 %v4100, %v4102
      %v4104 = vrot.slane %v4088, %v4103
      %v4106 = vunpack.c.l.s4 1966171168
      %v4107 = vunpack.c.0.s8 %v4106
      %v4108 = vlaneseq
      %v4109 = vshrl.u32 %v4108, 7
      %v4110 = vsub.s32 %v4107, %v4109
      %v4111 = vrot.slane %v4089, %v4110
      %v4113 = vunpack.c.l.s4 1966171168
      %v4114 = vunpack.c.0.s8 %v4113
      %v4115 = vlaneseq
      %v4116 = vshrl.u32 %v4115, 7
      %v4117 = vsub.s32 %v4114, %v4116
      %v4118 = vrot.slane %v4090, %v4117
      %v4119 = vcombine.low %v4097, %v4104
      %v4120 = vcombine.low %v4111, %v4118
      %v4122 = vunpack.c.l.s4 1966171168
      %v4123 = vunpack.c.0.s8 %v4122
      %v4124 = vlaneseq
      %v4125 = vshrl.u32 %v4124, 7
      %v4126 = vsub.s32 %v4123, %v4125
      %v4127 = vrot.slane %v4119, %v4126
      %v4129 = vunpack.c.l.s4 1966171168
      %v4130 = vunpack.c.0.s8 %v4129
      %v4131 = vlaneseq
      %v4132 = vshrl.u32 %v4131, 7
      %v4133 = vsub.s32 %v4130, %v4132
      %v4134 = vrot.slane %v4120, %v4133
      %v4135 = vcombine.low %v4127, %v4134
      %v4136 = vcombine.low %v2690, %v2694
      %v4137 = vcombine.low %v2698, %v2702
      %v4138 = vcombine.low %v2706, %v2710
      %v4139 = vcombine.low %v2714, %v2718
      %v4141 = vunpack.c.l.s4 1966171168
      %v4142 = vunpack.c.0.s8 %v4141
      %v4143 = vlaneseq
      %v4144 = vshrl.u32 %v4143, 7
      %v4145 = vsub.s32 %v4142, %v4144
      %v4146 = vrot.slane %v4136, %v4145
      %v4148 = vunpack.c.l.s4 1966171168
      %v4149 = vunpack.c.0.s8 %v4148
      %v4150 = vlaneseq
      %v4151 = vshrl.u32 %v4150, 7
      %v4152 = vsub.s32 %v4149, %v4151
      %v4153 = vrot.slane %v4137, %v4152
      %v4155 = vunpack.c.l.s4 1966171168
      %v4156 = vunpack.c.0.s8 %v4155
      %v4157 = vlaneseq
      %v4158 = vshrl.u32 %v4157, 7
      %v4159 = vsub.s32 %v4156, %v4158
      %v4160 = vrot.slane %v4138, %v4159
      %v4162 = vunpack.c.l.s4 1966171168
      %v4163 = vunpack.c.0.s8 %v4162
      %v4164 = vlaneseq
      %v4165 = vshrl.u32 %v4164, 7
      %v4166 = vsub.s32 %v4163, %v4165
      %v4167 = vrot.slane %v4139, %v4166
      %v4168 = vcombine.low %v4146, %v4153
      %v4169 = vcombine.low %v4160, %v4167
      %v4171 = vunpack.c.l.s4 1966171168
      %v4172 = vunpack.c.0.s8 %v4171
      %v4173 = vlaneseq
      %v4174 = vshrl.u32 %v4173, 7
      %v4175 = vsub.s32 %v4172, %v4174
      %v4176 = vrot.slane %v4168, %v4175
      %v4178 = vunpack.c.l.s4 1966171168
      %v4179 = vunpack.c.0.s8 %v4178
      %v4180 = vlaneseq
      %v4181 = vshrl.u32 %v4180, 7
      %v4182 = vsub.s32 %v4179, %v4181
      %v4183 = vrot.slane %v4169, %v4182
      %v4184 = vcombine.low %v4176, %v4183
      %v4185 = vcombine.low %v2722, %v2726
      %v4186 = vcombine.low %v2730, %v2734
      %v4187 = vcombine.low %v2738, %v2742
      %v4188 = vcombine.low %v2746, %v2750
      %v4190 = vunpack.c.l.s4 1966171168
      %v4191 = vunpack.c.0.s8 %v4190
      %v4192 = vlaneseq
      %v4193 = vshrl.u32 %v4192, 7
      %v4194 = vsub.s32 %v4191, %v4193
      %v4195 = vrot.slane %v4185, %v4194
      %v4197 = vunpack.c.l.s4 1966171168
      %v4198 = vunpack.c.0.s8 %v4197
      %v4199 = vlaneseq
      %v4200 = vshrl.u32 %v4199, 7
      %v4201 = vsub.s32 %v4198, %v4200
      %v4202 = vrot.slane %v4186, %v4201
      %v4204 = vunpack.c.l.s4 1966171168
      %v4205 = vunpack.c.0.s8 %v4204
      %v4206 = vlaneseq
      %v4207 = vshrl.u32 %v4206, 7
      %v4208 = vsub.s32 %v4205, %v4207
      %v4209 = vrot.slane %v4187, %v4208
      %v4211 = vunpack.c.l.s4 1966171168
      %v4212 = vunpack.c.0.s8 %v4211
      %v4213 = vlaneseq
      %v4214 = vshrl.u32 %v4213, 7
      %v4215 = vsub.s32 %v4212, %v4214
      %v4216 = vrot.slane %v4188, %v4215
      %v4217 = vcombine.low %v4195, %v4202
      %v4218 = vcombine.low %v4209, %v4216
      %v4220 = vunpack.c.l.s4 1966171168
      %v4221 = vunpack.c.0.s8 %v4220
      %v4222 = vlaneseq
      %v4223 = vshrl.u32 %v4222, 7
      %v4224 = vsub.s32 %v4221, %v4223
      %v4225 = vrot.slane %v4217, %v4224
      %v4227 = vunpack.c.l.s4 1966171168
      %v4228 = vunpack.c.0.s8 %v4227
      %v4229 = vlaneseq
      %v4230 = vshrl.u32 %v4229, 7
      %v4231 = vsub.s32 %v4228, %v4230
      %v4232 = vrot.slane %v4218, %v4231
      %v4233 = vcombine.low %v4225, %v4232
      %v4234 = vcombine.low %v2754, %v2758
      %v4235 = vcombine.low %v2762, %v2766
      %v4236 = vcombine.low %v2770, %v2774
      %v4237 = vcombine.low %v2778, %v2782
      %v4239 = vunpack.c.l.s4 1966171168
      %v4240 = vunpack.c.0.s8 %v4239
      %v4241 = vlaneseq
      %v4242 = vshrl.u32 %v4241, 7
      %v4243 = vsub.s32 %v4240, %v4242
      %v4244 = vrot.slane %v4234, %v4243
      %v4246 = vunpack.c.l.s4 1966171168
      %v4247 = vunpack.c.0.s8 %v4246
      %v4248 = vlaneseq
      %v4249 = vshrl.u32 %v4248, 7
      %v4250 = vsub.s32 %v4247, %v4249
      %v4251 = vrot.slane %v4235, %v4250
      %v4253 = vunpack.c.l.s4 1966171168
      %v4254 = vunpack.c.0.s8 %v4253
      %v4255 = vlaneseq
      %v4256 = vshrl.u32 %v4255, 7
      %v4257 = vsub.s32 %v4254, %v4256
      %v4258 = vrot.slane %v4236, %v4257
      %v4260 = vunpack.c.l.s4 1966171168
      %v4261 = vunpack.c.0.s8 %v4260
      %v4262 = vlaneseq
      %v4263 = vshrl.u32 %v4262, 7
      %v4264 = vsub.s32 %v4261, %v4263
      %v4265 = vrot.slane %v4237, %v4264
      %v4266 = vcombine.low %v4244, %v4251
      %v4267 = vcombine.low %v4258, %v4265
      %v4269 = vunpack.c.l.s4 1966171168
      %v4270 = vunpack.c.0.s8 %v4269
      %v4271 = vlaneseq
      %v4272 = vshrl.u32 %v4271, 7
      %v4273 = vsub.s32 %v4270, %v4272
      %v4274 = vrot.slane %v4266, %v4273
      %v4276 = vunpack.c.l.s4 1966171168
      %v4277 = vunpack.c.0.s8 %v4276
      %v4278 = vlaneseq
      %v4279 = vshrl.u32 %v4278, 7
      %v4280 = vsub.s32 %v4277, %v4279
      %v4281 = vrot.slane %v4267, %v4280
      %v4282 = vcombine.low %v4274, %v4281
      %v4283 = vcombine.low %v2786, %v2790
      %v4284 = vcombine.low %v2794, %v2798
      %v4285 = vcombine.low %v2802, %v2806
      %v4286 = vcombine.low %v2810, %v2814
      %v4288 = vunpack.c.l.s4 1966171168
      %v4289 = vunpack.c.0.s8 %v4288
      %v4290 = vlaneseq
      %v4291 = vshrl.u32 %v4290, 7
      %v4292 = vsub.s32 %v4289, %v4291
      %v4293 = vrot.slane %v4283, %v4292
      %v4295 = vunpack.c.l.s4 1966171168
      %v4296 = vunpack.c.0.s8 %v4295
      %v4297 = vlaneseq
      %v4298 = vshrl.u32 %v4297, 7
      %v4299 = vsub.s32 %v4296, %v4298
      %v4300 = vrot.slane %v4284, %v4299
      %v4302 = vunpack.c.l.s4 1966171168
      %v4303 = vunpack.c.0.s8 %v4302
      %v4304 = vlaneseq
      %v4305 = vshrl.u32 %v4304, 7
      %v4306 = vsub.s32 %v4303, %v4305
      %v4307 = vrot.slane %v4285, %v4306
      %v4309 = vunpack.c.l.s4 1966171168
      %v4310 = vunpack.c.0.s8 %v4309
      %v4311 = vlaneseq
      %v4312 = vshrl.u32 %v4311, 7
      %v4313 = vsub.s32 %v4310, %v4312
      %v4314 = vrot.slane %v4286, %v4313
      %v4315 = vcombine.low %v4293, %v4300
      %v4316 = vcombine.low %v4307, %v4314
      %v4318 = vunpack.c.l.s4 1966171168
      %v4319 = vunpack.c.0.s8 %v4318
      %v4320 = vlaneseq
      %v4321 = vshrl.u32 %v4320, 7
      %v4322 = vsub.s32 %v4319, %v4321
      %v4323 = vrot.slane %v4315, %v4322
      %v4325 = vunpack.c.l.s4 1966171168
      %v4326 = vunpack.c.0.s8 %v4325
      %v4327 = vlaneseq
      %v4328 = vshrl.u32 %v4327, 7
      %v4329 = vsub.s32 %v4326, %v4328
      %v4330 = vrot.slane %v4316, %v4329
      %v4331 = vcombine.low %v4323, %v4330
      %v4332 = vcombine.low %v2818, %v2822
      %v4333 = vcombine.low %v2826, %v2830
      %v4334 = vcombine.low %v2834, %v2838
      %v4335 = vcombine.low %v2842, %v2846
      %v4337 = vunpack.c.l.s4 1966171168
      %v4338 = vunpack.c.0.s8 %v4337
      %v4339 = vlaneseq
      %v4340 = vshrl.u32 %v4339, 7
      %v4341 = vsub.s32 %v4338, %v4340
      %v4342 = vrot.slane %v4332, %v4341
      %v4344 = vunpack.c.l.s4 1966171168
      %v4345 = vunpack.c.0.s8 %v4344
      %v4346 = vlaneseq
      %v4347 = vshrl.u32 %v4346, 7
      %v4348 = vsub.s32 %v4345, %v4347
      %v4349 = vrot.slane %v4333, %v4348
      %v4351 = vunpack.c.l.s4 1966171168
      %v4352 = vunpack.c.0.s8 %v4351
      %v4353 = vlaneseq
      %v4354 = vshrl.u32 %v4353, 7
      %v4355 = vsub.s32 %v4352, %v4354
      %v4356 = vrot.slane %v4334, %v4355
      %v4358 = vunpack.c.l.s4 1966171168
      %v4359 = vunpack.c.0.s8 %v4358
      %v4360 = vlaneseq
      %v4361 = vshrl.u32 %v4360, 7
      %v4362 = vsub.s32 %v4359, %v4361
      %v4363 = vrot.slane %v4335, %v4362
      %v4364 = vcombine.low %v4342, %v4349
      %v4365 = vcombine.low %v4356, %v4363
      %v4367 = vunpack.c.l.s4 1966171168
      %v4368 = vunpack.c.0.s8 %v4367
      %v4369 = vlaneseq
      %v4370 = vshrl.u32 %v4369, 7
      %v4371 = vsub.s32 %v4368, %v4370
      %v4372 = vrot.slane %v4364, %v4371
      %v4374 = vunpack.c.l.s4 1966171168
      %v4375 = vunpack.c.0.s8 %v4374
      %v4376 = vlaneseq
      %v4377 = vshrl.u32 %v4376, 7
      %v4378 = vsub.s32 %v4375, %v4377
      %v4379 = vrot.slane %v4365, %v4378
      %v4380 = vcombine.low %v4372, %v4379
      %v4381 = vcombine.low %v2850, %v2854
      %v4382 = vcombine.low %v2858, %v2862
      %v4383 = vcombine.low %v2866, %v2870
      %v4384 = vcombine.low %v2874, %v2878
      %v4386 = vunpack.c.l.s4 1966171168
      %v4387 = vunpack.c.0.s8 %v4386
      %v4388 = vlaneseq
      %v4389 = vshrl.u32 %v4388, 7
      %v4390 = vsub.s32 %v4387, %v4389
      %v4391 = vrot.slane %v4381, %v4390
      %v4393 = vunpack.c.l.s4 1966171168
      %v4394 = vunpack.c.0.s8 %v4393
      %v4395 = vlaneseq
      %v4396 = vshrl.u32 %v4395, 7
      %v4397 = vsub.s32 %v4394, %v4396
      %v4398 = vrot.slane %v4382, %v4397
      %v4400 = vunpack.c.l.s4 1966171168
      %v4401 = vunpack.c.0.s8 %v4400
      %v4402 = vlaneseq
      %v4403 = vshrl.u32 %v4402, 7
      %v4404 = vsub.s32 %v4401, %v4403
      %v4405 = vrot.slane %v4383, %v4404
      %v4407 = vunpack.c.l.s4 1966171168
      %v4408 = vunpack.c.0.s8 %v4407
      %v4409 = vlaneseq
      %v4410 = vshrl.u32 %v4409, 7
      %v4411 = vsub.s32 %v4408, %v4410
      %v4412 = vrot.slane %v4384, %v4411
      %v4413 = vcombine.low %v4391, %v4398
      %v4414 = vcombine.low %v4405, %v4412
      %v4416 = vunpack.c.l.s4 1966171168
      %v4417 = vunpack.c.0.s8 %v4416
      %v4418 = vlaneseq
      %v4419 = vshrl.u32 %v4418, 7
      %v4420 = vsub.s32 %v4417, %v4419
      %v4421 = vrot.slane %v4413, %v4420
      %v4423 = vunpack.c.l.s4 1966171168
      %v4424 = vunpack.c.0.s8 %v4423
      %v4425 = vlaneseq
      %v4426 = vshrl.u32 %v4425, 7
      %v4427 = vsub.s32 %v4424, %v4426
      %v4428 = vrot.slane %v4414, %v4427
      %v4429 = vcombine.low %v4421, %v4428
      %v4430 = vcombine.low %v2882, %v2886
      %v4431 = vcombine.low %v2890, %v2894
      %v4432 = vcombine.low %v2898, %v2902
      %v4433 = vcombine.low %v2906, %v2910
      %v4435 = vunpack.c.l.s4 1966171168
      %v4436 = vunpack.c.0.s8 %v4435
      %v4437 = vlaneseq
      %v4438 = vshrl.u32 %v4437, 7
      %v4439 = vsub.s32 %v4436, %v4438
      %v4440 = vrot.slane %v4430, %v4439
      %v4442 = vunpack.c.l.s4 1966171168
      %v4443 = vunpack.c.0.s8 %v4442
      %v4444 = vlaneseq
      %v4445 = vshrl.u32 %v4444, 7
      %v4446 = vsub.s32 %v4443, %v4445
      %v4447 = vrot.slane %v4431, %v4446
      %v4449 = vunpack.c.l.s4 1966171168
      %v4450 = vunpack.c.0.s8 %v4449
      %v4451 = vlaneseq
      %v4452 = vshrl.u32 %v4451, 7
      %v4453 = vsub.s32 %v4450, %v4452
      %v4454 = vrot.slane %v4432, %v4453
      %v4456 = vunpack.c.l.s4 1966171168
      %v4457 = vunpack.c.0.s8 %v4456
      %v4458 = vlaneseq
      %v4459 = vshrl.u32 %v4458, 7
      %v4460 = vsub.s32 %v4457, %v4459
      %v4461 = vrot.slane %v4433, %v4460
      %v4462 = vcombine.low %v4440, %v4447
      %v4463 = vcombine.low %v4454, %v4461
      %v4465 = vunpack.c.l.s4 1966171168
      %v4466 = vunpack.c.0.s8 %v4465
      %v4467 = vlaneseq
      %v4468 = vshrl.u32 %v4467, 7
      %v4469 = vsub.s32 %v4466, %v4468
      %v4470 = vrot.slane %v4462, %v4469
      %v4472 = vunpack.c.l.s4 1966171168
      %v4473 = vunpack.c.0.s8 %v4472
      %v4474 = vlaneseq
      %v4475 = vshrl.u32 %v4474, 7
      %v4476 = vsub.s32 %v4473, %v4475
      %v4477 = vrot.slane %v4463, %v4476
      %v4478 = vcombine.low %v4470, %v4477
      %4479 = vset.pattern.permute.xlu0 0
      %4480 = vperm.xlu0 %4479, %v2959
      %v4481 = vpop.permute.xlu0 %4480
      %4482 = vset.pattern.permute.xlu0 0
      %4483 = vperm.xlu0 %4482, %v3008
      %v4484 = vpop.permute.xlu0 %4483
      %4485 = vset.pattern.permute.xlu0 0
      %4486 = vperm.xlu0 %4485, %v3057
      %v4487 = vpop.permute.xlu0 %4486
      %4488 = vset.pattern.permute.xlu0 0
      %4489 = vperm.xlu0 %4488, %v3106
      %v4490 = vpop.permute.xlu0 %4489
      %4491 = vset.pattern.permute.xlu0 0
      %4492 = vperm.xlu0 %4491, %v3155
      %v4493 = vpop.permute.xlu0 %4492
      %4494 = vset.pattern.permute.xlu0 0
      %4495 = vperm.xlu0 %4494, %v3204
      %v4496 = vpop.permute.xlu0 %4495
      %4497 = vset.pattern.permute.xlu0 0
      %4498 = vperm.xlu0 %4497, %v3253
      %v4499 = vpop.permute.xlu0 %4498
      %4500 = vset.pattern.permute.xlu0 0
      %4501 = vperm.xlu0 %4500, %v3302
      %v4502 = vpop.permute.xlu0 %4501
      %4503 = vset.pattern.permute.xlu0 0
      %4504 = vperm.xlu0 %4503, %v3351
      %v4505 = vpop.permute.xlu0 %4504
      %4506 = vset.pattern.permute.xlu0 0
      %4507 = vperm.xlu0 %4506, %v3400
      %v4508 = vpop.permute.xlu0 %4507
      %4509 = vset.pattern.permute.xlu0 0
      %4510 = vperm.xlu0 %4509, %v3449
      %v4511 = vpop.permute.xlu0 %4510
      %4512 = vset.pattern.permute.xlu0 0
      %4513 = vperm.xlu0 %4512, %v3498
      %v4514 = vpop.permute.xlu0 %4513
      %4515 = vset.pattern.permute.xlu0 0
      %4516 = vperm.xlu0 %4515, %v3547
      %v4517 = vpop.permute.xlu0 %4516
      %4518 = vset.pattern.permute.xlu0 0
      %4519 = vperm.xlu0 %4518, %v3596
      %v4520 = vpop.permute.xlu0 %4519
      %4521 = vset.pattern.permute.xlu0 0
      %4522 = vperm.xlu0 %4521, %v3645
      %v4523 = vpop.permute.xlu0 %4522
      %4524 = vset.pattern.permute.xlu0 0
      %4525 = vperm.xlu0 %4524, %v3694
      %v4526 = vpop.permute.xlu0 %4525
      %4527 = vset.pattern.permute.xlu0 0
      %4528 = vperm.xlu0 %4527, %v3743
      %v4529 = vpop.permute.xlu0 %4528
      %4530 = vset.pattern.permute.xlu0 0
      %4531 = vperm.xlu0 %4530, %v3792
      %v4532 = vpop.permute.xlu0 %4531
      %4533 = vset.pattern.permute.xlu0 0
      %4534 = vperm.xlu0 %4533, %v3841
      %v4535 = vpop.permute.xlu0 %4534
      %4536 = vset.pattern.permute.xlu0 0
      %4537 = vperm.xlu0 %4536, %v3890
      %v4538 = vpop.permute.xlu0 %4537
      %4539 = vset.pattern.permute.xlu0 0
      %4540 = vperm.xlu0 %4539, %v3939
      %v4541 = vpop.permute.xlu0 %4540
      %4542 = vset.pattern.permute.xlu0 0
      %4543 = vperm.xlu0 %4542, %v3988
      %v4544 = vpop.permute.xlu0 %4543
      %4545 = vset.pattern.permute.xlu0 0
      %4546 = vperm.xlu0 %4545, %v4037
      %v4547 = vpop.permute.xlu0 %4546
      %4548 = vset.pattern.permute.xlu0 0
      %4549 = vperm.xlu0 %4548, %v4086
      %v4550 = vpop.permute.xlu0 %4549
      %4551 = vset.pattern.permute.xlu0 0
      %4552 = vperm.xlu0 %4551, %v4135
      %v4553 = vpop.permute.xlu0 %4552
      %4554 = vset.pattern.permute.xlu0 0
      %4555 = vperm.xlu0 %4554, %v4184
      %v4556 = vpop.permute.xlu0 %4555
      %4557 = vset.pattern.permute.xlu0 0
      %4558 = vperm.xlu0 %4557, %v4233
      %v4559 = vpop.permute.xlu0 %4558
      %4560 = vset.pattern.permute.xlu0 0
      %4561 = vperm.xlu0 %4560, %v4282
      %v4562 = vpop.permute.xlu0 %4561
      %4563 = vset.pattern.permute.xlu0 0
      %4564 = vperm.xlu0 %4563, %v4331
      %v4565 = vpop.permute.xlu0 %4564
      %4566 = vset.pattern.permute.xlu0 0
      %4567 = vperm.xlu0 %4566, %v4380
      %v4568 = vpop.permute.xlu0 %4567
      %4569 = vset.pattern.permute.xlu0 0
      %4570 = vperm.xlu0 %4569, %v4429
      %v4571 = vpop.permute.xlu0 %4570
      %4572 = vset.pattern.permute.xlu0 0
      %4573 = vperm.xlu0 %4572, %v4478
      %v4574 = vpop.permute.xlu0 %4573
      %v4575 = vlaneseq
      %v4576 = vand.u32 %v4575, 127
      %v4577 = vlaneseq
      %v4578 = vshrl.u32 %v4577, 7
      %v4579 = vsub.s32 %v4576, %v4578
      %v4580 = vrot.slane %v4481, %v4579
      %v4581 = vadd.s32 %v4576, 4294967288
      %v4582 = vlaneseq
      %v4583 = vshrl.u32 %v4582, 7
      %v4584 = vsub.s32 %v4581, %v4583
      %v4585 = vrot.slane %v4484, %v4584
      %vm4586 = vcmask 130112
      %v4587 = vsel %vm4586, %v4585, %v4580
      %v4588 = vadd.s32 %v4576, 4294967280
      %v4589 = vlaneseq
      %v4590 = vshrl.u32 %v4589, 7
      %v4591 = vsub.s32 %v4588, %v4590
      %v4592 = vrot.slane %v4487, %v4591
      %vm4593 = vcmask 195712
      %v4594 = vsel %vm4593, %v4592, %v4587
      %v4595 = vadd.s32 %v4576, 4294967272
      %v4596 = vlaneseq
      %v4597 = vshrl.u32 %v4596, 7
      %v4598 = vsub.s32 %v4595, %v4597
      %v4599 = vrot.slane %v4490, %v4598
      %vm4600 = vcmask 261312
      %v4601 = vsel %vm4600, %v4599, %v4594
      %v4602 = vadd.s32 %v4576, 4294967264
      %v4603 = vlaneseq
      %v4604 = vshrl.u32 %v4603, 7
      %v4605 = vsub.s32 %v4602, %v4604
      %v4606 = vrot.slane %v4493, %v4605
      %vm4607 = vcmask 326912
      %v4608 = vsel %vm4607, %v4606, %v4601
      %v4609 = vadd.s32 %v4576, 4294967256
      %v4610 = vlaneseq
      %v4611 = vshrl.u32 %v4610, 7
      %v4612 = vsub.s32 %v4609, %v4611
      %v4613 = vrot.slane %v4496, %v4612
      %vm4614 = vcmask 392512
      %v4615 = vsel %vm4614, %v4613, %v4608
      %v4616 = vadd.s32 %v4576, 4294967248
      %v4617 = vlaneseq
      %v4618 = vshrl.u32 %v4617, 7
      %v4619 = vsub.s32 %v4616, %v4618
      %v4620 = vrot.slane %v4499, %v4619
      %vm4621 = vcmask 458112
      %v4622 = vsel %vm4621, %v4620, %v4615
      %v4623 = vadd.s32 %v4576, 4294967240
      %v4624 = vlaneseq
      %v4625 = vshrl.u32 %v4624, 7
      %v4626 = vsub.s32 %v4623, %v4625
      %v4627 = vrot.slane %v4502, %v4626
      %vm4628 = vcmask 523712
      %v4629 = vsel %vm4628, %v4627, %v4622
      %v4630 = vadd.s32 %v4576, 4294967232
      %v4631 = vlaneseq
      %v4632 = vshrl.u32 %v4631, 7
      %v4633 = vsub.s32 %v4630, %v4632
      %v4634 = vrot.slane %v4505, %v4633
      %vm4635 = vcmask 589312
      %v4636 = vsel %vm4635, %v4634, %v4629
      %v4637 = vadd.s32 %v4576, 4294967224
      %v4638 = vlaneseq
      %v4639 = vshrl.u32 %v4638, 7
      %v4640 = vsub.s32 %v4637, %v4639
      %v4641 = vrot.slane %v4508, %v4640
      %vm4642 = vcmask 654912
      %v4643 = vsel %vm4642, %v4641, %v4636
      %v4644 = vadd.s32 %v4576, 4294967216
      %v4645 = vlaneseq
      %v4646 = vshrl.u32 %v4645, 7
      %v4647 = vsub.s32 %v4644, %v4646
      %v4648 = vrot.slane %v4511, %v4647
      %vm4649 = vcmask 720512
      %v4650 = vsel %vm4649, %v4648, %v4643
      %v4651 = vadd.s32 %v4576, 4294967208
      %v4652 = vlaneseq
      %v4653 = vshrl.u32 %v4652, 7
      %v4654 = vsub.s32 %v4651, %v4653
      %v4655 = vrot.slane %v4514, %v4654
      %vm4656 = vcmask 786112
      %v4657 = vsel %vm4656, %v4655, %v4650
      %v4658 = vadd.s32 %v4576, 4294967200
      %v4659 = vlaneseq
      %v4660 = vshrl.u32 %v4659, 7
      %v4661 = vsub.s32 %v4658, %v4660
      %v4662 = vrot.slane %v4517, %v4661
      %vm4663 = vcmask 851712
      %v4664 = vsel %vm4663, %v4662, %v4657
      %v4665 = vadd.s32 %v4576, 4294967192
      %v4666 = vlaneseq
      %v4667 = vshrl.u32 %v4666, 7
      %v4668 = vsub.s32 %v4665, %v4667
      %v4669 = vrot.slane %v4520, %v4668
      %vm4670 = vcmask 917312
      %v4671 = vsel %vm4670, %v4669, %v4664
      %v4672 = vadd.s32 %v4576, 4294967184
      %v4673 = vlaneseq
      %v4674 = vshrl.u32 %v4673, 7
      %v4675 = vsub.s32 %v4672, %v4674
      %v4676 = vrot.slane %v4523, %v4675
      %vm4677 = vcmask 982912
      %v4678 = vsel %vm4677, %v4676, %v4671
      %v4679 = vadd.s32 %v4576, 4294967176
      %v4680 = vlaneseq
      %v4681 = vshrl.u32 %v4680, 7
      %v4682 = vsub.s32 %v4679, %v4681
      %v4683 = vrot.slane %v4526, %v4682
      %vm4684 = vcmask 1048512
      %v4685 = vsel %vm4684, %v4683, %v4678
      %v4686 = vlaneseq
      %v4687 = vshrl.u32 %v4686, 7
      %v4688 = vsub.s32 %v4576, %v4687
      %v4689 = vrot.slane %v4529, %v4688
      %v4690 = vlaneseq
      %v4691 = vshrl.u32 %v4690, 7
      %v4692 = vsub.s32 %v4581, %v4691
      %v4693 = vrot.slane %v4532, %v4692
      %v4694 = vsel %vm4586, %v4693, %v4689
      %v4695 = vlaneseq
      %v4696 = vshrl.u32 %v4695, 7
      %v4697 = vsub.s32 %v4588, %v4696
      %v4698 = vrot.slane %v4535, %v4697
      %v4699 = vsel %vm4593, %v4698, %v4694
      %v4700 = vlaneseq
      %v4701 = vshrl.u32 %v4700, 7
      %v4702 = vsub.s32 %v4595, %v4701
      %v4703 = vrot.slane %v4538, %v4702
      %v4704 = vsel %vm4600, %v4703, %v4699
      %v4705 = vlaneseq
      %v4706 = vshrl.u32 %v4705, 7
      %v4707 = vsub.s32 %v4602, %v4706
      %v4708 = vrot.slane %v4541, %v4707
      %v4709 = vsel %vm4607, %v4708, %v4704
      %v4710 = vlaneseq
      %v4711 = vshrl.u32 %v4710, 7
      %v4712 = vsub.s32 %v4609, %v4711
      %v4713 = vrot.slane %v4544, %v4712
      %v4714 = vsel %vm4614, %v4713, %v4709
      %v4715 = vlaneseq
      %v4716 = vshrl.u32 %v4715, 7
      %v4717 = vsub.s32 %v4616, %v4716
      %v4718 = vrot.slane %v4547, %v4717
      %v4719 = vsel %vm4621, %v4718, %v4714
      %v4720 = vlaneseq
      %v4721 = vshrl.u32 %v4720, 7
      %v4722 = vsub.s32 %v4623, %v4721
      %v4723 = vrot.slane %v4550, %v4722
      %v4724 = vsel %vm4628, %v4723, %v4719
      %v4725 = vlaneseq
      %v4726 = vshrl.u32 %v4725, 7
      %v4727 = vsub.s32 %v4630, %v4726
      %v4728 = vrot.slane %v4553, %v4727
      %v4729 = vsel %vm4635, %v4728, %v4724
      %v4730 = vlaneseq
      %v4731 = vshrl.u32 %v4730, 7
      %v4732 = vsub.s32 %v4637, %v4731
      %v4733 = vrot.slane %v4556, %v4732
      %v4734 = vsel %vm4642, %v4733, %v4729
      %v4735 = vlaneseq
      %v4736 = vshrl.u32 %v4735, 7
      %v4737 = vsub.s32 %v4644, %v4736
      %v4738 = vrot.slane %v4559, %v4737
      %v4739 = vsel %vm4649, %v4738, %v4734
      %v4740 = vlaneseq
      %v4741 = vshrl.u32 %v4740, 7
      %v4742 = vsub.s32 %v4651, %v4741
      %v4743 = vrot.slane %v4562, %v4742
      %v4744 = vsel %vm4656, %v4743, %v4739
      %v4745 = vlaneseq
      %v4746 = vshrl.u32 %v4745, 7
      %v4747 = vsub.s32 %v4658, %v4746
      %v4748 = vrot.slane %v4565, %v4747
      %v4749 = vsel %vm4663, %v4748, %v4744
      %v4750 = vlaneseq
      %v4751 = vshrl.u32 %v4750, 7
      %v4752 = vsub.s32 %v4665, %v4751
      %v4753 = vrot.slane %v4568, %v4752
      %v4754 = vsel %vm4670, %v4753, %v4749
      %v4755 = vlaneseq
      %v4756 = vshrl.u32 %v4755, 7
      %v4757 = vsub.s32 %v4672, %v4756
      %v4758 = vrot.slane %v4571, %v4757
      %v4759 = vsel %vm4677, %v4758, %v4754
      %v4760 = vlaneseq
      %v4761 = vshrl.u32 %v4760, 7
      %v4762 = vsub.s32 %v4679, %v4761
      %v4763 = vrot.slane %v4574, %v4762
      %v4764 = vsel %vm4684, %v4763, %v4759
      %v4765 = vcombine.low %v4685, %v4764
      %v4767 = vunpack.c.l.s4 1966171168
      %v4768 = vunpack.c.0.s8 %v4767
      %v4769 = vlaneseq
      %v4770 = vshrl.u32 %v4769, 7
      %v4771 = vsub.s32 %v4768, %v4770
      %v4772 = vrot.slane %v4765, %v4771
      %v4774 = vunpack.c.l.s4 1966171168
      %v4775 = vunpack.c.0.s8 %v4774
      %v4776 = vlaneseq
      %v4777 = vshrl.u32 %v4776, 7
      %v4778 = vsub.s32 %v4775, %v4777
      %v4779 = vrot.slane %v4772, %v4778
      %v4781 = vlaneseq
      %vm4782 = vcmp.ge.s32.totalorder %v4781, 0
      %vm4783 = vcmp.lt.s32.totalorder %v4781, 256
      %vm4784 = vmand %vm4782, %vm4783
      %4785 = vst.msk [vmem:[%s396] sm:$0x3] %vm4784, %v4779
      %p4786 = scmp.lt.s32.totalorder %s22, 1
      %s4787 = scalar_select %p4786, %s22, 1
      %s4788 = smul.addr %s4787, 2
      %s4789 = scalar_lea.vmem %s9, %s4788
      // Predicated region
      $region57: #{qnetwork_forward.1} parent=55 // pred_check
        %p4790 = pneg %p239
      $region58: #{qnetwork_forward.1} parent=55 // pred_check_branch
        %4792 = sbr.rel (%p4790) target = $region60
      $region59: #{qnetwork_forward.1} parent=55 // pred_region
        _
      $region60: #{qnetwork_forward.1} parent=55 // pred_fallthru
        _
    $region56: #{qnetwork_forward.1} parent=5 // pred_fallthru
      _
    %p4793 = scmp.le.s32.totalorder 2, %s17
    // Predicated region
    $region61: #{qnetwork_forward.1} parent=5 // pred_check
      %p4794 = pneg %p4793
    $region62: #{qnetwork_forward.1} parent=5 // pred_check_branch
      %4796 = sbr.rel (%p4794) target = $region64
    $region63: #{qnetwork_forward.1} parent=5 // pred_region
      %s4797 = ssub.s32 %s17, 2
      // Predicated region
      $region65: #{qnetwork_forward.1} parent=63 // pred_check
        %p4798 = pneg %p245
      $region66: #{qnetwork_forward.1} parent=63 // pred_check_branch
        %4800 = sbr.rel (%p4798) target = $region68
      $region67: #{qnetwork_forward.1} parent=63 // pred_region
        %p4801 = scmp.lt.s32.totalorder %s23, 1
        %s4802 = scalar_select %p4801, %s23, 1
        %s4803 = smul.addr %s4802, 2
        %s4804 = scalar_lea.vmem %s9, %s4803
      $region68: #{qnetwork_forward.1} parent=63 // pred_fallthru
        _
    $region64: #{qnetwork_forward.1} parent=5 // pred_fallthru
      _
  $region6: #{qnetwork_forward.1} parent=0 // loop_footer
    %s21 = sadd.s32 1, %s17
  $region7: #{qnetwork_forward.1} parent=0 // loop_footer_branch
    %16 = sbr.rel target = $region3
  $region8: #{qnetwork_forward.1} parent=0 // loop_exit
    _

</llo_original>
